<compile_context>
chip_gen: v7x
topology: tpu7x:2x2x1
jax: 0.10.0
libtpu: 0.0.40
codegen_flags: <defaults>
</compile_context>

<pallas_src>
import functools

import jax
import jax.numpy as jnp
from jax.experimental import pallas as pl
from jax.experimental.pallas import tpu as pltpu

ZP_DIM = 3
ZS_DIM = 5
HID = 512
OUT = 784            # 28 * 28
OUT_PAD = 896        # 7 * 128 -> lane-dense output width


def _swish(x):
    # x * sigmoid(x), evaluated in f32 (EUP handles the sigmoid)
    return x * jax.nn.sigmoid(x)


def decoder_a_kernel(zp_ref, zs_ref,
                     w1p_ref, w1s_ref, b1_ref,
                     w2_ref, b2_ref,
                     w3_ref, b3_ref,
                     w4_ref, b4_ref,
                     out_ref):
    """One batch tile of the full MLP; weights are VMEM-resident across tiles."""
    # Layer 1: split-K matmul replaces torch.cat((zPrivate, zShared), 1).
    zp = zp_ref[...].astype(jnp.bfloat16)                      # (TM, 3)
    zs = zs_ref[...].astype(jnp.bfloat16)                      # (TM, 5)
    h = (jnp.dot(zp, w1p_ref[...], preferred_element_type=jnp.float32)
         + jnp.dot(zs, w1s_ref[...], preferred_element_type=jnp.float32)
         + b1_ref[...])                                        # (TM, 512) f32
    h = _swish(h)

    h = _swish(jnp.dot(h.astype(jnp.bfloat16), w2_ref[...],
                       preferred_element_type=jnp.float32) + b2_ref[...])
    h = _swish(jnp.dot(h.astype(jnp.bfloat16), w3_ref[...],
                       preferred_element_type=jnp.float32) + b3_ref[...])
    x = jnp.dot(h.astype(jnp.bfloat16), w4_ref[...],
                preferred_element_type=jnp.float32) + b4_ref[...]   # (TM, 896)
    out_ref[...] = x.astype(out_ref.dtype)


def _round_up(x, m):
    return (x + m - 1) // m * m


@functools.partial(jax.jit, static_argnames=("block_m",))
def decoder_a_forward(zPrivate, zShared, params, block_m=256):
    """Pallas forward pass. `params` must come from prepare_params()."""
    w1p, w1s, b1, w2, b2, w3, b3, w4, b4 = params
    B = zPrivate.shape[0]

    # TM=256 keeps the 256-wide MXU full on v6e/v7x; use block_m=128 on v5e.
    tm = min(block_m, _round_up(B, 8))
    grid = (pl.cdiv(B, tm),)

    def weight_spec(shape):
        # Full-shape block, same index every grid step -> stays VMEM-resident.
        return pl.BlockSpec(shape, lambda i: (0, 0))

    weight_bytes = sum(int(a.size) * a.dtype.itemsize
                       for a in (w1p, w1s, b1, w2, b2, w3, b3, w4, b4))
    cost = pl.CostEstimate(
        flops=2 * B * (ZP_DIM * HID + ZS_DIM * HID + 2 * HID * HID + HID * OUT),
        transcendentals=3 * B * HID,
        bytes_accessed=weight_bytes + B * (ZP_DIM + ZS_DIM) * 4 + B * OUT_PAD * 4,
    )

    out = pl.pallas_call(
        decoder_a_kernel,
        out_shape=jax.ShapeDtypeStruct((B, OUT_PAD), jnp.float32),
        grid=grid,
        in_specs=[
            pl.BlockSpec((tm, ZP_DIM), lambda i: (i, 0)),
            pl.BlockSpec((tm, ZS_DIM), lambda i: (i, 0)),
            weight_spec(w1p.shape), weight_spec(w1s.shape), weight_spec(b1.shape),
            weight_spec(w2.shape), weight_spec(b2.shape),
            weight_spec(w3.shape), weight_spec(b3.shape),
            weight_spec(w4.shape), weight_spec(b4.shape),
        ],
        out_specs=pl.BlockSpec((tm, OUT_PAD), lambda i: (i, 0)),
        compiler_params=pltpu.CompilerParams(
            dimension_semantics=("parallel",),
            vmem_limit_bytes=64 * 1024 * 1024,
        ),
        cost_estimate=cost,
    )(zPrivate, zShared, w1p, w1s, b1, w2, b2, w3, b3, w4, b4)

    # match torch: x.view(-1, 1, 28, 28); drop the 896 -> 784 lane padding.
    return out[:, :OUT].reshape(-1, 1, 28, 28)


def init_params(key, zPrivate_dim=ZP_DIM, zShared_dim=ZS_DIM):
    """Deterministic f32 params, torch.nn.Linear-like init; W stored (in, out)."""
    dims = [(zPrivate_dim + zShared_dim, HID), (HID, HID), (HID, HID), (HID, OUT)]
    params = []
    for i, (fan_in, fan_out) in enumerate(dims):
        kw, kb = jax.random.split(jax.random.fold_in(key, i))
        bound = 1.0 / (fan_in ** 0.5)
        w = jax.random.uniform(kw, (fan_in, fan_out), jnp.float32, -bound, bound)
        b = jax.random.uniform(kb, (1, fan_out), jnp.float32, -bound, bound)
        params += [w, b]
    return tuple(params)


def prepare_params(params, zPrivate_dim=ZP_DIM):
    """f32 (in,out) params -> kernel layout: bf16 weights, W1 split, W4/b4 lane-padded."""
    w1, b1, w2, b2, w3, b3, w4, b4 = params
    w1p = w1[:zPrivate_dim].astype(jnp.bfloat16)
    w1s = w1[zPrivate_dim:].astype(jnp.bfloat16)
    w4p = jnp.zeros((HID, OUT_PAD), jnp.bfloat16).at[:, :OUT].set(
        w4.astype(jnp.bfloat16))
    b4p = jnp.zeros((1, OUT_PAD), jnp.float32).at[:, :OUT].set(b4)
    return (w1p, w1s, b1.astype(jnp.float32),
            w2.astype(jnp.bfloat16), b2.astype(jnp.float32),
            w3.astype(jnp.bfloat16), b3.astype(jnp.float32),
            w4p, b4p)


def reference_forward(zPrivate, zShared, kernel_params):
    """Pure-JAX reference (same bf16 weights, f32 activations) for correctness."""
    w1p, w1s, b1, w2, b2, w3, b3, w4, b4 = kernel_params
    f32 = lambda a: a.astype(jnp.float32)
    z = jnp.concatenate([zPrivate, zShared], axis=1)
    w1 = jnp.concatenate([f32(w1p), f32(w1s)], axis=0)
    h = _swish(z @ w1 + b1)
    h = _swish(h @ f32(w2) + b2)
    h = _swish(h @ f32(w3) + b3)
    x = h @ f32(w4) + b4
    return x[:, :OUT].reshape(-1, 1, 28, 28)


if __name__ == "__main__":
    key = jax.random.PRNGKey(0)
    k_params, k_priv, k_shared = jax.random.split(key, 3)

    B = 8
    zPrivate = jax.random.normal(k_priv, (B, ZP_DIM), jnp.float32)
    zShared = jax.random.normal(k_shared, (B, ZS_DIM), jnp.float32)

    params = prepare_params(init_params(k_params))

    out = decoder_a_forward(zPrivate, zShared, params)
    out = jax.block_until_ready(out)

    ref = reference_forward(zPrivate, zShared, params)
    assert out.shape == (B, 1, 28, 28), out.shape
    # bf16 activations/weights in-kernel vs f32-activation reference:
    # expected quantization-level mismatch only.
    err = float(jnp.max(jnp.abs(out - ref)))
    assert jnp.allclose(out, ref, atol=3e-2, rtol=3e-2), f"max abs err {err}"

    print("KERNEL_OK")
</pallas_src>

<mosaic_0001>
module attributes {stable_mosaic.version = 11 : i64} {
  func.func @decoder_a_kernel(%arg0: i32, %arg1: memref<8x3xf32, #tpu.memory_space<vmem>>, %arg2: memref<8x5xf32, #tpu.memory_space<vmem>>, %arg3: memref<3x512xbf16, #tpu.memory_space<vmem>>, %arg4: memref<5x512xbf16, #tpu.memory_space<vmem>>, %arg5: memref<1x512xf32, #tpu.memory_space<vmem>>, %arg6: memref<512x512xbf16, #tpu.memory_space<vmem>>, %arg7: memref<1x512xf32, #tpu.memory_space<vmem>>, %arg8: memref<512x512xbf16, #tpu.memory_space<vmem>>, %arg9: memref<1x512xf32, #tpu.memory_space<vmem>>, %arg10: memref<512x896xbf16, #tpu.memory_space<vmem>>, %arg11: memref<1x896xf32, #tpu.memory_space<vmem>>, %arg12: memref<8x896xf32, #tpu.memory_space<vmem>>) attributes {dimension_semantics = [#tpu.dimension_semantics<parallel>], iteration_bounds = array<i64: 1>, scalar_prefetch = 0 : i64, scratch_operands = 0 : i64, tpu.core_type = #tpu.core_type<tc>, window_params = [{transform_indices = @transform_0, window_bounds = array<i64: 8, 3>}, {transform_indices = @transform_1, window_bounds = array<i64: 8, 5>}, {pipeline_mode = #tpu.pipeline_mode<synchronous>, transform_indices = @transform_2, window_bounds = array<i64: 3, 512>}, {pipeline_mode = #tpu.pipeline_mode<synchronous>, transform_indices = @transform_3, window_bounds = array<i64: 5, 512>}, {pipeline_mode = #tpu.pipeline_mode<synchronous>, transform_indices = @transform_4, window_bounds = array<i64: 1, 512>}, {pipeline_mode = #tpu.pipeline_mode<synchronous>, transform_indices = @transform_5, window_bounds = array<i64: 512, 512>}, {pipeline_mode = #tpu.pipeline_mode<synchronous>, transform_indices = @transform_6, window_bounds = array<i64: 1, 512>}, {pipeline_mode = #tpu.pipeline_mode<synchronous>, transform_indices = @transform_7, window_bounds = array<i64: 512, 512>}, {pipeline_mode = #tpu.pipeline_mode<synchronous>, transform_indices = @transform_8, window_bounds = array<i64: 1, 512>}, {pipeline_mode = #tpu.pipeline_mode<synchronous>, transform_indices = @transform_9, window_bounds = array<i64: 512, 896>}, {pipeline_mode = #tpu.pipeline_mode<synchronous>, transform_indices = @transform_10, window_bounds = array<i64: 1, 896>}, {transform_indices = @transform_11, window_bounds = array<i64: 8, 896>}]} {
    %c0 = arith.constant 0 : index
    %c0_0 = arith.constant 0 : index
    %0 = vector.load %arg1[%c0, %c0_0] : memref<8x3xf32, #tpu.memory_space<vmem>>, vector<8x3xf32>
    %1 = arith.truncf %0 : vector<8x3xf32> to vector<8x3xbf16>
    %c0_1 = arith.constant 0 : index
    %c0_2 = arith.constant 0 : index
    %2 = vector.load %arg2[%c0_1, %c0_2] : memref<8x5xf32, #tpu.memory_space<vmem>>, vector<8x5xf32>
    %3 = arith.truncf %2 : vector<8x5xf32> to vector<8x5xbf16>
    %c0_3 = arith.constant 0 : index
    %c0_4 = arith.constant 0 : index
    %4 = vector.load %arg3[%c0_3, %c0_4] : memref<3x512xbf16, #tpu.memory_space<vmem>>, vector<3x512xbf16>
    %cst = arith.constant dense<0.000000e+00> : vector<8x512xf32>
    %5 = tpu.matmul %1, %4, %cst {dimension_numbers = #tpu.dot_dimension_numbers<[1], [0], [0], [1], [0, 0, 1, 1], [], []>} : vector<8x3xbf16>, vector<3x512xbf16>, vector<8x512xf32> -> vector<8x512xf32>
    %c0_5 = arith.constant 0 : index
    %c0_6 = arith.constant 0 : index
    %6 = vector.load %arg4[%c0_5, %c0_6] : memref<5x512xbf16, #tpu.memory_space<vmem>>, vector<5x512xbf16>
    %cst_7 = arith.constant dense<0.000000e+00> : vector<8x512xf32>
    %7 = tpu.matmul %3, %6, %cst_7 {dimension_numbers = #tpu.dot_dimension_numbers<[1], [0], [0], [1], [0, 0, 1, 1], [], []>} : vector<8x5xbf16>, vector<5x512xbf16>, vector<8x512xf32> -> vector<8x512xf32>
    %8 = arith.addf %5, %7 : vector<8x512xf32>
    %c0_8 = arith.constant 0 : index
    %c0_9 = arith.constant 0 : index
    %9 = vector.load %arg5[%c0_8, %c0_9] : memref<1x512xf32, #tpu.memory_space<vmem>>, vector<1x512xf32>
    %10 = vector.broadcast %9 : vector<1x512xf32> to vector<8x512xf32>
    %11 = arith.addf %8, %10 : vector<8x512xf32>
    %12 = arith.negf %11 : vector<8x512xf32>
    %13 = math.exp %12 : vector<8x512xf32>
    %cst_10 = arith.constant 1.000000e+00 : f32
    %14 = vector.broadcast %cst_10 : f32 to vector<8x512xf32>
    %15 = arith.addf %14, %13 : vector<8x512xf32>
    %16 = arith.divf %14, %15 : vector<8x512xf32>
    %17 = arith.mulf %11, %16 : vector<8x512xf32>
    %18 = arith.truncf %17 : vector<8x512xf32> to vector<8x512xbf16>
    %c0_11 = arith.constant 0 : index
    %c0_12 = arith.constant 0 : index
    %19 = vector.load %arg6[%c0_11, %c0_12] : memref<512x512xbf16, #tpu.memory_space<vmem>>, vector<512x512xbf16>
    %cst_13 = arith.constant dense<0.000000e+00> : vector<8x512xf32>
    %20 = tpu.matmul %18, %19, %cst_13 {dimension_numbers = #tpu.dot_dimension_numbers<[1], [0], [0], [1], [0, 0, 1, 1], [], []>} : vector<8x512xbf16>, vector<512x512xbf16>, vector<8x512xf32> -> vector<8x512xf32>
    %c0_14 = arith.constant 0 : index
    %c0_15 = arith.constant 0 : index
    %21 = vector.load %arg7[%c0_14, %c0_15] : memref<1x512xf32, #tpu.memory_space<vmem>>, vector<1x512xf32>
    %22 = vector.broadcast %21 : vector<1x512xf32> to vector<8x512xf32>
    %23 = arith.addf %20, %22 : vector<8x512xf32>
    %24 = arith.negf %23 : vector<8x512xf32>
    %25 = math.exp %24 : vector<8x512xf32>
    %cst_16 = arith.constant 1.000000e+00 : f32
    %26 = vector.broadcast %cst_16 : f32 to vector<8x512xf32>
    %27 = arith.addf %26, %25 : vector<8x512xf32>
    %28 = arith.divf %26, %27 : vector<8x512xf32>
    %29 = arith.mulf %23, %28 : vector<8x512xf32>
    %30 = arith.truncf %29 : vector<8x512xf32> to vector<8x512xbf16>
    %c0_17 = arith.constant 0 : index
    %c0_18 = arith.constant 0 : index
    %31 = vector.load %arg8[%c0_17, %c0_18] : memref<512x512xbf16, #tpu.memory_space<vmem>>, vector<512x512xbf16>
    %cst_19 = arith.constant dense<0.000000e+00> : vector<8x512xf32>
    %32 = tpu.matmul %30, %31, %cst_19 {dimension_numbers = #tpu.dot_dimension_numbers<[1], [0], [0], [1], [0, 0, 1, 1], [], []>} : vector<8x512xbf16>, vector<512x512xbf16>, vector<8x512xf32> -> vector<8x512xf32>
    %c0_20 = arith.constant 0 : index
    %c0_21 = arith.constant 0 : index
    %33 = vector.load %arg9[%c0_20, %c0_21] : memref<1x512xf32, #tpu.memory_space<vmem>>, vector<1x512xf32>
    %34 = vector.broadcast %33 : vector<1x512xf32> to vector<8x512xf32>
    %35 = arith.addf %32, %34 : vector<8x512xf32>
    %36 = arith.negf %35 : vector<8x512xf32>
    %37 = math.exp %36 : vector<8x512xf32>
    %cst_22 = arith.constant 1.000000e+00 : f32
    %38 = vector.broadcast %cst_22 : f32 to vector<8x512xf32>
    %39 = arith.addf %38, %37 : vector<8x512xf32>
    %40 = arith.divf %38, %39 : vector<8x512xf32>
    %41 = arith.mulf %35, %40 : vector<8x512xf32>
    %42 = arith.truncf %41 : vector<8x512xf32> to vector<8x512xbf16>
    %c0_23 = arith.constant 0 : index
    %c0_24 = arith.constant 0 : index
    %43 = vector.load %arg10[%c0_23, %c0_24] : memref<512x896xbf16, #tpu.memory_space<vmem>>, vector<512x896xbf16>
    %cst_25 = arith.constant dense<0.000000e+00> : vector<8x896xf32>
    %44 = tpu.matmul %42, %43, %cst_25 {dimension_numbers = #tpu.dot_dimension_numbers<[1], [0], [0], [1], [0, 0, 1, 1], [], []>} : vector<8x512xbf16>, vector<512x896xbf16>, vector<8x896xf32> -> vector<8x896xf32>
    %c0_26 = arith.constant 0 : index
    %c0_27 = arith.constant 0 : index
    %45 = vector.load %arg11[%c0_26, %c0_27] : memref<1x896xf32, #tpu.memory_space<vmem>>, vector<1x896xf32>
    %46 = vector.broadcast %45 : vector<1x896xf32> to vector<8x896xf32>
    %47 = arith.addf %44, %46 : vector<8x896xf32>
    %c0_28 = arith.constant 0 : index
    %c0_29 = arith.constant 0 : index
    %48 = vector.load %arg12[%c0_28, %c0_29] : memref<8x896xf32, #tpu.memory_space<vmem>>, vector<8x896xf32>
    tpu.vector_store %arg12[%c0_28, %c0_29], %47 {strides = array<i32>} : memref<8x896xf32, #tpu.memory_space<vmem>>, vector<8x896xf32>,
    return
  }
  func.func @transform_0(%arg0: i32) -> (i32, i32) {
    %c0_i32 = arith.constant 0 : i32
    %c0_i32_0 = arith.constant 0 : i32
    return %arg0, %c0_i32 : i32, i32
  }
  func.func @transform_1(%arg0: i32) -> (i32, i32) {
    %c0_i32 = arith.constant 0 : i32
    %c0_i32_0 = arith.constant 0 : i32
    return %arg0, %c0_i32 : i32, i32
  }
  func.func @transform_2(%arg0: i32) -> (i32, i32) {
    %c0_i32 = arith.constant 0 : i32
    %c0_i32_0 = arith.constant 0 : i32
    %c0_i32_1 = arith.constant 0 : i32
    return %c0_i32, %c0_i32_0 : i32, i32
  }
  func.func @transform_3(%arg0: i32) -> (i32, i32) {
    %c0_i32 = arith.constant 0 : i32
    %c0_i32_0 = arith.constant 0 : i32
    %c0_i32_1 = arith.constant 0 : i32
    return %c0_i32, %c0_i32_0 : i32, i32
  }
  func.func @transform_4(%arg0: i32) -> (i32, i32) {
    %c0_i32 = arith.constant 0 : i32
    %c0_i32_0 = arith.constant 0 : i32
    %c0_i32_1 = arith.constant 0 : i32
    return %c0_i32, %c0_i32_0 : i32, i32
  }
  func.func @transform_5(%arg0: i32) -> (i32, i32) {
    %c0_i32 = arith.constant 0 : i32
    %c0_i32_0 = arith.constant 0 : i32
    %c0_i32_1 = arith.constant 0 : i32
    return %c0_i32, %c0_i32_0 : i32, i32
  }
  func.func @transform_6(%arg0: i32) -> (i32, i32) {
    %c0_i32 = arith.constant 0 : i32
    %c0_i32_0 = arith.constant 0 : i32
    %c0_i32_1 = arith.constant 0 : i32
    return %c0_i32, %c0_i32_0 : i32, i32
  }
  func.func @transform_7(%arg0: i32) -> (i32, i32) {
    %c0_i32 = arith.constant 0 : i32
    %c0_i32_0 = arith.constant 0 : i32
    %c0_i32_1 = arith.constant 0 : i32
    return %c0_i32, %c0_i32_0 : i32, i32
  }
  func.func @transform_8(%arg0: i32) -> (i32, i32) {
    %c0_i32 = arith.constant 0 : i32
    %c0_i32_0 = arith.constant 0 : i32
    %c0_i32_1 = arith.constant 0 : i32
    return %c0_i32, %c0_i32_0 : i32, i32
  }
  func.func @transform_9(%arg0: i32) -> (i32, i32) {
    %c0_i32 = arith.constant 0 : i32
    %c0_i32_0 = arith.constant 0 : i32
    %c0_i32_1 = arith.constant 0 : i32
    return %c0_i32, %c0_i32_0 : i32, i32
  }
  func.func @transform_10(%arg0: i32) -> (i32, i32) {
    %c0_i32 = arith.constant 0 : i32
    %c0_i32_0 = arith.constant 0 : i32
    %c0_i32_1 = arith.constant 0 : i32
    return %c0_i32, %c0_i32_0 : i32, i32
  }
  func.func @transform_11(%arg0: i32) -> (i32, i32) {
    %c0_i32 = arith.constant 0 : i32
    %c0_i32_0 = arith.constant 0 : i32
    return %arg0, %c0_i32 : i32, i32
  }
}

</mosaic_0001>

<llo_original>
// kernel: decoder_a_forward.1
$region0: #{decoder_a_forward.1}
  #allocation0 [shape = 'u32[]', space=smem, size = 0x4, offset = 0x4, fixed_abs, tag = 'smem constant byte address 0x4 - core index']
  #allocation1 [shape = 'u32[144,128]{1,0:T(1,128)}', space=vmem, size = 0x12000, scoped, tag = 'internal scratch']
  %s0 = inlined_call_operand.hbm [shape: f32[8,3], index: 0, kind: input, shape index: {}]
  %s1 = inlined_call_operand.hbm [shape: f32[8,5], index: 1, kind: input, shape index: {}]
  %s2 = inlined_call_operand.hbm [shape: bf16[3,512], index: 2, kind: input, shape index: {}]
  %s3 = inlined_call_operand.hbm [shape: bf16[5,512], index: 3, kind: input, shape index: {}]
  %s4 = inlined_call_operand.hbm [shape: f32[1,512], index: 4, kind: input, shape index: {}]
  %s5 = inlined_call_operand.hbm [shape: bf16[512,512], index: 5, kind: input, shape index: {}]
  %s6 = inlined_call_operand.hbm [shape: f32[1,512], index: 6, kind: input, shape index: {}]
  %s7 = inlined_call_operand.hbm [shape: bf16[512,512], index: 7, kind: input, shape index: {}]
  %s8 = inlined_call_operand.hbm [shape: f32[1,512], index: 8, kind: input, shape index: {}]
  %s9 = inlined_call_operand.hbm [shape: bf16[512,896], index: 9, kind: input, shape index: {}]
  %s10 = inlined_call_operand.hbm [shape: f32[1,896], index: 10, kind: input, shape index: {}]
  %s11 = inlined_call_operand.hbm [shape: f32[8,896], index: 11, kind: output, shape index: {}]
  %s12 = sld [smem:[#allocation0]]
  $region98: #{decoder_a_forward.1} parent=0
    _
  %s14 = ssub.s32 1, %s12
  %s15 = scalar_select 0, %s14, %s12
  $region1: #{decoder_a_forward.1} parent=0
    #allocation2 [shape = 'u8[4096]{0}', space=vmem, size = 0x1000, scoped, tag = 'input window, operand 0, single buffered']
    #allocation3 [shape = 's32[1]{0}', space=sflag, size = 0x4, scoped, tag = 'scoped memory for decoder_a_forward.1']
    #allocation4 [shape = 's32[1]{0}', space=sflag, size = 0x4, scoped, tag = 'scoped memory for decoder_a_forward.1']
    #allocation5 [shape = 'u8[4096]{0}', space=vmem, size = 0x1000, scoped, tag = 'input window, operand 1, single buffered']
    #allocation6 [shape = 's32[1]{0}', space=sflag, size = 0x4, scoped, tag = 'scoped memory for decoder_a_forward.1']
    #allocation7 [shape = 'u8[4096]{0}', space=vmem, size = 0x1000, scoped, tag = 'input window, operand 2, single buffered']
    #allocation8 [shape = 'u8[8192]{0}', space=vmem, size = 0x2000, scoped, tag = 'input window, operand 3, single buffered']
    #allocation9 [shape = 's32[1]{0}', space=sflag, size = 0x4, scoped, tag = 'scoped memory for decoder_a_forward.1']
    #allocation10 [shape = 'u8[2048]{0}', space=vmem, size = 0x800, scoped, tag = 'input window, operand 4, single buffered']
    #allocation11 [shape = 'u8[524288]{0}', space=vmem, size = 0x80000, scoped, tag = 'input window, operand 5, single buffered']
    #allocation12 [shape = 's32[1]{0}', space=sflag, size = 0x4, scoped, tag = 'scoped memory for decoder_a_forward.1']
    #allocation13 [shape = 'u8[2048]{0}', space=vmem, size = 0x800, scoped, tag = 'input window, operand 6, single buffered']
    #allocation14 [shape = 'u8[524288]{0}', space=vmem, size = 0x80000, scoped, tag = 'input window, operand 7, single buffered']
    #allocation15 [shape = 's32[1]{0}', space=sflag, size = 0x4, scoped, tag = 'scoped memory for decoder_a_forward.1']
    #allocation16 [shape = 'u8[2048]{0}', space=vmem, size = 0x800, scoped, tag = 'input window, operand 8, single buffered']
    #allocation17 [shape = 'u8[917504]{0}', space=vmem, size = 0xe0000, scoped, tag = 'input window, operand 9, single buffered']
    #allocation18 [shape = 's32[1]{0}', space=sflag, size = 0x4, scoped, tag = 'scoped memory for decoder_a_forward.1']
    #allocation19 [shape = 'u8[3584]{0}', space=vmem, size = 0x1000, scoped, tag = 'input window, operand 10, single buffered']
    #allocation20 [shape = 'u8[28672]{0}', space=vmem, size = 0x7000, scoped, tag = 'output window, operand 0, single buffered']
    %16 = vsyncpa [#allocation3], 0
    %17 = vsyncpa [#allocation6], 0
    %18 = vsyncpa [#allocation9], 0
    %19 = vsyncpa [#allocation12], 0
    %20 = vsyncpa [#allocation15], 0
    %21 = vsyncpa [#allocation18], 0
    %22 = vsyncpa [#allocation4], 0
    // Predicated region
    $region2: #{decoder_a_forward.1} parent=1 // pred_check
      _
    $region3: #{decoder_a_forward.1} parent=1 // pred_check_branch
      %24 = sbr.rel (0) target = $region5
    $region4: #{decoder_a_forward.1} parent=1 // pred_region
      %s26 = ssub.s32 128, 128
      %27 = vsyncadd [#allocation3], %s26
      %s29 = sshll.u32 [#allocation2], 4
      %s30 = int_to_ptr.vmem [resolvable:$true] %s29
      %32 = dma.hbm_to_vmem [thread:$0]  %s0, 128, %s30, [#allocation3]
    $region5: #{decoder_a_forward.1} parent=1 // pred_fallthru
      _
    // Predicated region
    $region6: #{decoder_a_forward.1} parent=1 // pred_check
      _
    $region7: #{decoder_a_forward.1} parent=1 // pred_check_branch
      %34 = sbr.rel (0) target = $region9
    $region8: #{decoder_a_forward.1} parent=1 // pred_region
      %s36 = ssub.s32 128, 128
      %37 = vsyncadd [#allocation6], %s36
      %s39 = sshll.u32 [#allocation5], 4
      %s40 = int_to_ptr.vmem [resolvable:$true] %s39
      %42 = dma.hbm_to_vmem [thread:$0]  %s1, 128, %s40, [#allocation6]
    $region9: #{decoder_a_forward.1} parent=1 // pred_fallthru
      _
    // Predicated region
    $region10: #{decoder_a_forward.1} parent=1 // pred_check
      _
    $region11: #{decoder_a_forward.1} parent=1 // pred_check_branch
      %44 = sbr.rel (0) target = $region13
    $region12: #{decoder_a_forward.1} parent=1 // pred_region
      %s46 = ssub.s32 128, 128
      %47 = vsyncadd [#allocation6], %s46
      %s49 = sshll.u32 [#allocation7], 4
      %s50 = int_to_ptr.vmem [resolvable:$true] %s49
      %52 = dma.hbm_to_vmem [thread:$0]  %s2, 128, %s50, [#allocation6]
    $region13: #{decoder_a_forward.1} parent=1 // pred_fallthru
      _
    // Predicated region
    $region14: #{decoder_a_forward.1} parent=1 // pred_check
      _
    $region15: #{decoder_a_forward.1} parent=1 // pred_check_branch
      %54 = sbr.rel (0) target = $region17
    $region16: #{decoder_a_forward.1} parent=1 // pred_region
      %s56 = ssub.s32 256, 256
      %57 = vsyncadd [#allocation9], %s56
      %s59 = sshll.u32 [#allocation8], 4
      %s60 = int_to_ptr.vmem [resolvable:$true] %s59
      %62 = dma.hbm_to_vmem [thread:$0]  %s3, 256, %s60, [#allocation9]
    $region17: #{decoder_a_forward.1} parent=1 // pred_fallthru
      _
    // Predicated region
    $region18: #{decoder_a_forward.1} parent=1 // pred_check
      _
    $region19: #{decoder_a_forward.1} parent=1 // pred_check_branch
      %64 = sbr.rel (0) target = $region21
    $region20: #{decoder_a_forward.1} parent=1 // pred_region
      %s66 = ssub.s32 64, 64
      %67 = vsyncadd [#allocation9], %s66
      %s69 = sshll.u32 [#allocation10], 4
      %s70 = int_to_ptr.vmem [resolvable:$true] %s69
      %72 = dma.hbm_to_vmem [thread:$0]  %s4, 64, %s70, [#allocation9]
    $region21: #{decoder_a_forward.1} parent=1 // pred_fallthru
      _
    // Predicated region
    $region22: #{decoder_a_forward.1} parent=1 // pred_check
      _
    $region23: #{decoder_a_forward.1} parent=1 // pred_check_branch
      %74 = sbr.rel (0) target = $region25
    $region24: #{decoder_a_forward.1} parent=1 // pred_region
      %s76 = ssub.s32 16384, 16384
      %77 = vsyncadd [#allocation12], %s76
      %s78 = sshll.u32 [#allocation11], 4
      %s79 = int_to_ptr.vmem [resolvable:$true] %s78
      %84 = dma.hbm_to_vmem [thread:$0]  %s5, 16384, %s79, [#allocation12], 256, 256, 16
    $region25: #{decoder_a_forward.1} parent=1 // pred_fallthru
      _
    // Predicated region
    $region26: #{decoder_a_forward.1} parent=1 // pred_check
      _
    $region27: #{decoder_a_forward.1} parent=1 // pred_check_branch
      %86 = sbr.rel (0) target = $region29
    $region28: #{decoder_a_forward.1} parent=1 // pred_region
      %s88 = ssub.s32 64, 64
      %89 = vsyncadd [#allocation12], %s88
      %s91 = sshll.u32 [#allocation13], 4
      %s92 = int_to_ptr.vmem [resolvable:$true] %s91
      %94 = dma.hbm_to_vmem [thread:$0]  %s6, 64, %s92, [#allocation12]
    $region29: #{decoder_a_forward.1} parent=1 // pred_fallthru
      _
    // Predicated region
    $region30: #{decoder_a_forward.1} parent=1 // pred_check
      _
    $region31: #{decoder_a_forward.1} parent=1 // pred_check_branch
      %96 = sbr.rel (0) target = $region33
    $region32: #{decoder_a_forward.1} parent=1 // pred_region
      %s98 = ssub.s32 16384, 16384
      %99 = vsyncadd [#allocation15], %s98
      %s100 = sshll.u32 [#allocation14], 4
      %s101 = int_to_ptr.vmem [resolvable:$true] %s100
      %106 = dma.hbm_to_vmem [thread:$0]  %s7, 16384, %s101, [#allocation15], 256, 256, 16
    $region33: #{decoder_a_forward.1} parent=1 // pred_fallthru
      _
    // Predicated region
    $region34: #{decoder_a_forward.1} parent=1 // pred_check
      _
    $region35: #{decoder_a_forward.1} parent=1 // pred_check_branch
      %108 = sbr.rel (0) target = $region37
    $region36: #{decoder_a_forward.1} parent=1 // pred_region
      %s110 = ssub.s32 64, 64
      %111 = vsyncadd [#allocation15], %s110
      %s113 = sshll.u32 [#allocation16], 4
      %s114 = int_to_ptr.vmem [resolvable:$true] %s113
      %116 = dma.hbm_to_vmem [thread:$0]  %s8, 64, %s114, [#allocation15]
    $region37: #{decoder_a_forward.1} parent=1 // pred_fallthru
      _
    // Predicated region
    $region38: #{decoder_a_forward.1} parent=1 // pred_check
      _
    $region39: #{decoder_a_forward.1} parent=1 // pred_check_branch
      %118 = sbr.rel (0) target = $region41
    $region40: #{decoder_a_forward.1} parent=1 // pred_region
      %s120 = ssub.s32 28672, 28672
      %121 = vsyncadd [#allocation18], %s120
      %s122 = sshll.u32 [#allocation17], 4
      %s123 = int_to_ptr.vmem [resolvable:$true] %s122
      %128 = dma.hbm_to_vmem [thread:$0]  %s9, 28672, %s123, [#allocation18], 448, 448, 28
    $region41: #{decoder_a_forward.1} parent=1 // pred_fallthru
      _
    // Predicated region
    $region42: #{decoder_a_forward.1} parent=1 // pred_check
      _
    $region43: #{decoder_a_forward.1} parent=1 // pred_check_branch
      %130 = sbr.rel (0) target = $region45
    $region44: #{decoder_a_forward.1} parent=1 // pred_region
      %s132 = ssub.s32 112, 112
      %133 = vsyncadd [#allocation18], %s132
      %s135 = sshll.u32 [#allocation19], 4
      %s136 = int_to_ptr.vmem [resolvable:$true] %s135
      %138 = dma.hbm_to_vmem [thread:$0]  %s10, 112, %s136, [#allocation18]
    $region45: #{decoder_a_forward.1} parent=1 // pred_fallthru
      _
    // Predicated region
    $region46: #{decoder_a_forward.1} parent=1 // pred_check
      _
    $region47: #{decoder_a_forward.1} parent=1 // pred_check_branch
      %140 = sbr.rel (0) target = $region49
    $region48: #{decoder_a_forward.1} parent=1 // pred_region
      %141 = dma.done [#allocation3], 128
    $region49: #{decoder_a_forward.1} parent=1 // pred_fallthru
      _
    // Predicated region
    $region50: #{decoder_a_forward.1} parent=1 // pred_check
      _
    $region51: #{decoder_a_forward.1} parent=1 // pred_check_branch
      %143 = sbr.rel (0) target = $region53
    $region52: #{decoder_a_forward.1} parent=1 // pred_region
      %144 = dma.done [#allocation6], 128
    $region53: #{decoder_a_forward.1} parent=1 // pred_fallthru
      _
    // Predicated region
    $region54: #{decoder_a_forward.1} parent=1 // pred_check
      _
    $region55: #{decoder_a_forward.1} parent=1 // pred_check_branch
      %146 = sbr.rel (0) target = $region57
    $region56: #{decoder_a_forward.1} parent=1 // pred_region
      %147 = dma.done [#allocation6], 128
    $region57: #{decoder_a_forward.1} parent=1 // pred_fallthru
      _
    // Predicated region
    $region58: #{decoder_a_forward.1} parent=1 // pred_check
      _
    $region59: #{decoder_a_forward.1} parent=1 // pred_check_branch
      %149 = sbr.rel (0) target = $region61
    $region60: #{decoder_a_forward.1} parent=1 // pred_region
      %150 = dma.done [#allocation9], 256
    $region61: #{decoder_a_forward.1} parent=1 // pred_fallthru
      _
    // Predicated region
    $region62: #{decoder_a_forward.1} parent=1 // pred_check
      _
    $region63: #{decoder_a_forward.1} parent=1 // pred_check_branch
      %152 = sbr.rel (0) target = $region65
    $region64: #{decoder_a_forward.1} parent=1 // pred_region
      %153 = dma.done [#allocation9], 64
    $region65: #{decoder_a_forward.1} parent=1 // pred_fallthru
      _
    // Predicated region
    $region66: #{decoder_a_forward.1} parent=1 // pred_check
      _
    $region67: #{decoder_a_forward.1} parent=1 // pred_check_branch
      %155 = sbr.rel (0) target = $region69
    $region68: #{decoder_a_forward.1} parent=1 // pred_region
      %156 = dma.done [#allocation12], 16384
    $region69: #{decoder_a_forward.1} parent=1 // pred_fallthru
      _
    // Predicated region
    $region70: #{decoder_a_forward.1} parent=1 // pred_check
      _
    $region71: #{decoder_a_forward.1} parent=1 // pred_check_branch
      %158 = sbr.rel (0) target = $region73
    $region72: #{decoder_a_forward.1} parent=1 // pred_region
      %159 = dma.done [#allocation12], 64
    $region73: #{decoder_a_forward.1} parent=1 // pred_fallthru
      _
    // Predicated region
    $region74: #{decoder_a_forward.1} parent=1 // pred_check
      _
    $region75: #{decoder_a_forward.1} parent=1 // pred_check_branch
      %161 = sbr.rel (0) target = $region77
    $region76: #{decoder_a_forward.1} parent=1 // pred_region
      %162 = dma.done [#allocation15], 16384
    $region77: #{decoder_a_forward.1} parent=1 // pred_fallthru
      _
    // Predicated region
    $region78: #{decoder_a_forward.1} parent=1 // pred_check
      _
    $region79: #{decoder_a_forward.1} parent=1 // pred_check_branch
      %164 = sbr.rel (0) target = $region81
    $region80: #{decoder_a_forward.1} parent=1 // pred_region
      %165 = dma.done [#allocation15], 64
    $region81: #{decoder_a_forward.1} parent=1 // pred_fallthru
      _
    // Predicated region
    $region82: #{decoder_a_forward.1} parent=1 // pred_check
      _
    $region83: #{decoder_a_forward.1} parent=1 // pred_check_branch
      %167 = sbr.rel (0) target = $region85
    $region84: #{decoder_a_forward.1} parent=1 // pred_region
      %168 = dma.done [#allocation18], 28672
    $region85: #{decoder_a_forward.1} parent=1 // pred_fallthru
      _
    // Predicated region
    $region86: #{decoder_a_forward.1} parent=1 // pred_check
      _
    $region87: #{decoder_a_forward.1} parent=1 // pred_check_branch
      %170 = sbr.rel (0) target = $region89
    $region88: #{decoder_a_forward.1} parent=1 // pred_region
      %171 = dma.done [#allocation18], 112
    $region89: #{decoder_a_forward.1} parent=1 // pred_fallthru
      _
    %v173 = vld [vmem:[#allocation2] sm:$0xff]
    %v174 = vpack.c.bf16 %v173, %v173
    %v175 = vld [vmem:[#allocation5] sm:$0xff]
    %v176 = vpack.c.bf16 %v175, %v175
    %v177 = vld [vmem:[#allocation7] sm:$0xff]
    %v178 = vld [vmem:[#allocation8] sm:$0x77]
    %v179 = vld [vmem:[#allocation8 + $0x8] sm:$0x77]
    %v182 = vunpack.c.l.b16 %v178
    %v183 = vunpack.c.h.b16 %v178
    %v184 = vunpack.c.l.b16 %v179
    %v185 = vunpack.c.h.b16 %v179
    %v186 = vpack.c.b16 %v182, %v182
    %v187 = vpack.c.b16 %v183, %v183
    %v188 = vpack.c.b16 %v184, %v184
    %v189 = vpack.c.b16 %v185, %v185
    %vm190 = vcmask 39936
    %v192 = vsel %vm190, %v176, 0
    %vm194 = vcmask 1041408
    %vm195 = vcmask 1042432
    %v196 = vsel %vm194, 4294967295, 65535
    %v197 = vsel %vm195, %v196, 0
    %v199 = vand.u32 %v186, %v197
    %v202 = vand.u32 %v187, %v197
    %v205 = vand.u32 %v188, %v197
    %v208 = vand.u32 %v189, %v197
    %210 = vmatprep.subr.bf16.mxu0 %v202
    %211 = vmatpush1.bf16.msra.mxu0 %v199
    %212 = vmatprep.subr.bf16.mxu0 0
    %213 = vmatpush1.bf16.msra.mxu0 0
    %214 = vmatprep.subr.bf16.mxu0 0
    %215 = vmatpush1.bf16.msra.mxu0 0
    %216 = vmatprep.subr.bf16.mxu0 0
    %217 = vmatpush1.bf16.msra.mxu0 0
    %218 = vmatprep.subr.bf16.mxu0 0
    %219 = vmatpush1.bf16.msra.mxu0 0
    %220 = vmatprep.subr.bf16.mxu0 0
    %221 = vmatpush1.bf16.msra.mxu0 0
    %222 = vmatprep.subr.bf16.mxu0 0
    %223 = vmatpush1.bf16.msra.mxu0 0
    %224 = vmatprep.subr.bf16.mxu0 0
    %225 = vmatpush1.bf16.msra.mxu0 0
    %226 = vmatprep.subr.bf16.mxu0 0
    %227 = vmatpush1.bf16.msra.mxu0 0
    %228 = vmatprep.subr.bf16.mxu0 0
    %229 = vmatpush1.bf16.msra.mxu0 0
    %230 = vmatprep.subr.bf16.mxu0 0
    %231 = vmatpush1.bf16.msra.mxu0 0
    %232 = vmatprep.subr.bf16.mxu0 0
    %233 = vmatpush1.bf16.msra.mxu0 0
    %234 = vmatprep.subr.bf16.mxu0 0
    %235 = vmatpush1.bf16.msra.mxu0 0
    %236 = vmatprep.subr.bf16.mxu0 0
    %237 = vmatpush1.bf16.msra.mxu0 0
    %238 = vmatprep.subr.bf16.mxu0 0
    %239 = vmatpush1.bf16.msra.mxu0 0
    %240 = vmatprep.subr.bf16.mxu0 0
    %241 = vmatpush1.bf16.msra.mxu0 0
    %242 = vmatprep.mubr.bf16.mxu0 0
    %243 = vmatmul.mubr.bf16.gmra.mrb[0].mxu0 %v192
    %v244 = vpop.f32.mrb[0].mxu0
    %v245 = vadd.f32 0.0, %v244
    %v246 = vpop.f32.mrb[0].mxu0
    %v247 = vadd.f32 0.0, %v246
    %v248 = vpop.f32.mrb[0].mxu0
    %v249 = vpop.f32.mrb[0].mxu0
    %250 = vdwg.mxu0
    %251 = vmatprep.subr.bf16.mxu0 %v208
    %252 = vmatpush1.bf16.msra.mxu0 %v205
    %253 = vmatprep.subr.bf16.mxu0 0
    %254 = vmatpush1.bf16.msra.mxu0 0
    %255 = vmatprep.subr.bf16.mxu0 0
    %256 = vmatpush1.bf16.msra.mxu0 0
    %257 = vmatprep.subr.bf16.mxu0 0
    %258 = vmatpush1.bf16.msra.mxu0 0
    %259 = vmatprep.subr.bf16.mxu0 0
    %260 = vmatpush1.bf16.msra.mxu0 0
    %261 = vmatprep.subr.bf16.mxu0 0
    %262 = vmatpush1.bf16.msra.mxu0 0
    %263 = vmatprep.subr.bf16.mxu0 0
    %264 = vmatpush1.bf16.msra.mxu0 0
    %265 = vmatprep.subr.bf16.mxu0 0
    %266 = vmatpush1.bf16.msra.mxu0 0
    %267 = vmatprep.subr.bf16.mxu0 0
    %268 = vmatpush1.bf16.msra.mxu0 0
    %269 = vmatprep.subr.bf16.mxu0 0
    %270 = vmatpush1.bf16.msra.mxu0 0
    %271 = vmatprep.subr.bf16.mxu0 0
    %272 = vmatpush1.bf16.msra.mxu0 0
    %273 = vmatprep.subr.bf16.mxu0 0
    %274 = vmatpush1.bf16.msra.mxu0 0
    %275 = vmatprep.subr.bf16.mxu0 0
    %276 = vmatpush1.bf16.msra.mxu0 0
    %277 = vmatprep.subr.bf16.mxu0 0
    %278 = vmatpush1.bf16.msra.mxu0 0
    %279 = vmatprep.subr.bf16.mxu0 0
    %280 = vmatpush1.bf16.msra.mxu0 0
    %281 = vmatprep.subr.bf16.mxu0 0
    %282 = vmatpush1.bf16.msra.mxu0 0
    %283 = vmatprep.mubr.bf16.mxu0 0
    %284 = vmatmul.mubr.bf16.gmra.mrb[0].mxu0 %v192
    %v285 = vpop.f32.mrb[0].mxu0
    %v286 = vadd.f32 0.0, %v285
    %v287 = vpop.f32.mrb[0].mxu0
    %v288 = vadd.f32 0.0, %v287
    %v289 = vpop.f32.mrb[0].mxu0
    %v290 = vpop.f32.mrb[0].mxu0
    %291 = vdwg.mxu0
    %v293 = vcombine.high %v177, %v177
    %v295 = vunpack.c.l.s4 1983009808
    %v296 = vunpack.c.0.s8 %v295
    %v297 = vlaneseq
    %v298 = vshrl.u32 %v297, 7
    %v299 = vsub.s32 %v296, %v298
    %v300 = vrot.slane %v177, %v299
    %v302 = vunpack.c.l.s4 1983009808
    %v303 = vunpack.c.0.s8 %v302
    %v304 = vlaneseq
    %v305 = vshrl.u32 %v304, 7
    %v306 = vsub.s32 %v303, %v305
    %v307 = vrot.slane %v293, %v306
    %v308 = vcombine.high %v300, %v300
    %v309 = vcombine.high %v307, %v307
    %vm310 = vcmask 23552
    %v312 = vsel %vm310, %v174, 0
    %vm314 = vcmask 1040384
    %v315 = vsel %vm314, 4294967295, 65535
    %v316 = vsel %vm194, %v315, 0
    %v318 = vand.u32 %v300, %v316
    %v321 = vand.u32 %v308, %v316
    %v324 = vand.u32 %v307, %v316
    %v327 = vand.u32 %v309, %v316
    %329 = vmatprep.subr.bf16.mxu0 %v321
    %330 = vmatpush1.bf16.msra.mxu0 %v318
    %331 = vmatprep.subr.bf16.mxu0 0
    %332 = vmatpush1.bf16.msra.mxu0 0
    %333 = vmatprep.subr.bf16.mxu0 0
    %334 = vmatpush1.bf16.msra.mxu0 0
    %335 = vmatprep.subr.bf16.mxu0 0
    %336 = vmatpush1.bf16.msra.mxu0 0
    %337 = vmatprep.subr.bf16.mxu0 0
    %338 = vmatpush1.bf16.msra.mxu0 0
    %339 = vmatprep.subr.bf16.mxu0 0
    %340 = vmatpush1.bf16.msra.mxu0 0
    %341 = vmatprep.subr.bf16.mxu0 0
    %342 = vmatpush1.bf16.msra.mxu0 0
    %343 = vmatprep.subr.bf16.mxu0 0
    %344 = vmatpush1.bf16.msra.mxu0 0
    %345 = vmatprep.subr.bf16.mxu0 0
    %346 = vmatpush1.bf16.msra.mxu0 0
    %347 = vmatprep.subr.bf16.mxu0 0
    %348 = vmatpush1.bf16.msra.mxu0 0
    %349 = vmatprep.subr.bf16.mxu0 0
    %350 = vmatpush1.bf16.msra.mxu0 0
    %351 = vmatprep.subr.bf16.mxu0 0
    %352 = vmatpush1.bf16.msra.mxu0 0
    %353 = vmatprep.subr.bf16.mxu0 0
    %354 = vmatpush1.bf16.msra.mxu0 0
    %355 = vmatprep.subr.bf16.mxu0 0
    %356 = vmatpush1.bf16.msra.mxu0 0
    %357 = vmatprep.subr.bf16.mxu0 0
    %358 = vmatpush1.bf16.msra.mxu0 0
    %359 = vmatprep.subr.bf16.mxu0 0
    %360 = vmatpush1.bf16.msra.mxu0 0
    %361 = vmatprep.mubr.bf16.mxu0 0
    %362 = vmatmul.mubr.bf16.gmra.mrb[0].mxu0 %v312
    %v363 = vpop.f32.mrb[0].mxu0
    %v364 = vadd.f32 %v245, %v363
    %v365 = vpop.f32.mrb[0].mxu0
    %v366 = vadd.f32 %v247, %v365
    %v367 = vpop.f32.mrb[0].mxu0
    %v368 = vpop.f32.mrb[0].mxu0
    %369 = vdwg.mxu0
    %370 = vmatprep.subr.bf16.mxu0 %v327
    %371 = vmatpush1.bf16.msra.mxu0 %v324
    %372 = vmatprep.subr.bf16.mxu0 0
    %373 = vmatpush1.bf16.msra.mxu0 0
    %374 = vmatprep.subr.bf16.mxu0 0
    %375 = vmatpush1.bf16.msra.mxu0 0
    %376 = vmatprep.subr.bf16.mxu0 0
    %377 = vmatpush1.bf16.msra.mxu0 0
    %378 = vmatprep.subr.bf16.mxu0 0
    %379 = vmatpush1.bf16.msra.mxu0 0
    %380 = vmatprep.subr.bf16.mxu0 0
    %381 = vmatpush1.bf16.msra.mxu0 0
    %382 = vmatprep.subr.bf16.mxu0 0
    %383 = vmatpush1.bf16.msra.mxu0 0
    %384 = vmatprep.subr.bf16.mxu0 0
    %385 = vmatpush1.bf16.msra.mxu0 0
    %386 = vmatprep.subr.bf16.mxu0 0
    %387 = vmatpush1.bf16.msra.mxu0 0
    %388 = vmatprep.subr.bf16.mxu0 0
    %389 = vmatpush1.bf16.msra.mxu0 0
    %390 = vmatprep.subr.bf16.mxu0 0
    %391 = vmatpush1.bf16.msra.mxu0 0
    %392 = vmatprep.subr.bf16.mxu0 0
    %393 = vmatpush1.bf16.msra.mxu0 0
    %394 = vmatprep.subr.bf16.mxu0 0
    %395 = vmatpush1.bf16.msra.mxu0 0
    %396 = vmatprep.subr.bf16.mxu0 0
    %397 = vmatpush1.bf16.msra.mxu0 0
    %398 = vmatprep.subr.bf16.mxu0 0
    %399 = vmatpush1.bf16.msra.mxu0 0
    %400 = vmatprep.subr.bf16.mxu0 0
    %401 = vmatpush1.bf16.msra.mxu0 0
    %402 = vmatprep.mubr.bf16.mxu0 0
    %403 = vmatmul.mubr.bf16.gmra.mrb[0].mxu0 %v312
    %v404 = vpop.f32.mrb[0].mxu0
    %v405 = vadd.f32 %v286, %v404
    %v406 = vpop.f32.mrb[0].mxu0
    %v407 = vadd.f32 %v288, %v406
    %v408 = vpop.f32.mrb[0].mxu0
    %v409 = vpop.f32.mrb[0].mxu0
    %410 = vdwg.mxu0
    %v411 = vld [vmem:[#allocation10] sm:$0xf]
    %v413 = vlaneseq
    %v414 = vshrl.u32 %v413, 7
    %v415 = vsub.s32 0, %v414
    %v416 = vrot.slane %v411, %v415
    %v417 = vlaneseq
    %v418 = vshrl.u32 %v417, 7
    %v419 = vsub.s32 1, %v418
    %v420 = vrot.slane %v411, %v419
    %v421 = vlaneseq
    %v422 = vshrl.u32 %v421, 7
    %v423 = vsub.s32 2, %v422
    %v424 = vrot.slane %v411, %v423
    %v425 = vlaneseq
    %v426 = vshrl.u32 %v425, 7
    %v427 = vsub.s32 3, %v426
    %v428 = vrot.slane %v411, %v427
    %v433 = vadd.f32 %v364, %v416
    %v434 = vadd.f32 %v366, %v420
    %v435 = vadd.f32 %v405, %v424
    %v436 = vadd.f32 %v407, %v428
    %v437 = vxor.u32 %v433, 2147483648
    %v438 = vxor.u32 %v434, 2147483648
    %v439 = vxor.u32 %v435, 2147483648
    %v440 = vxor.u32 %v436, 2147483648
    %v441 = vmul.f32 %v437, 1.442695
    %v442 = vpow.pop %v441
    %v443 = vmul.f32 %v438, 1.442695
    %v444 = vpow.pop %v443
    %v445 = vmul.f32 %v439, 1.442695
    %v446 = vpow.pop %v445
    %v447 = vmul.f32 %v440, 1.442695
    %v448 = vpow.pop %v447
    %v449 = vadd.f32 %v442, 1.0
    %v450 = vadd.f32 %v444, 1.0
    %v451 = vadd.f32 %v446, 1.0
    %v452 = vadd.f32 %v448, 1.0
    %v453 = vrcp.pop %v449
    %v454 = vmul.f32 1.0, %v453
    %v455 = vrcp.pop %v450
    %v456 = vmul.f32 1.0, %v455
    %v457 = vrcp.pop %v451
    %v458 = vmul.f32 1.0, %v457
    %v459 = vrcp.pop %v452
    %v460 = vmul.f32 1.0, %v459
    %v461 = vmul.f32 %v433, %v454
    %v462 = vmul.f32 %v434, %v456
    %v463 = vmul.f32 %v435, %v458
    %v464 = vmul.f32 %v436, %v460
    %v465 = vpack.c.bf16 %v461, %v461
    %v466 = vpack.c.bf16 %v462, %v462
    %v467 = vpack.c.bf16 %v463, %v463
    %v468 = vpack.c.bf16 %v464, %v464
    %v469 = vld [vmem:[#allocation11] sm:$0xff]
    %v470 = vld [vmem:[#allocation11 + $0x8] sm:$0xff]
    %v471 = vld [vmem:[#allocation11 + $0x10] sm:$0xff]
    %v472 = vld [vmem:[#allocation11 + $0x18] sm:$0xff]
    %v473 = vld [vmem:[#allocation11 + $0x20] sm:$0xff]
    %v474 = vld [vmem:[#allocation11 + $0x28] sm:$0xff]
    %v475 = vld [vmem:[#allocation11 + $0x30] sm:$0xff]
    %v476 = vld [vmem:[#allocation11 + $0x38] sm:$0xff]
    %v477 = vld [vmem:[#allocation11 + $0x40] sm:$0xff]
    %v478 = vld [vmem:[#allocation11 + $0x48] sm:$0xff]
    %v479 = vld [vmem:[#allocation11 + $0x50] sm:$0xff]
    %v480 = vld [vmem:[#allocation11 + $0x58] sm:$0xff]
    %v481 = vld [vmem:[#allocation11 + $0x60] sm:$0xff]
    %v482 = vld [vmem:[#allocation11 + $0x68] sm:$0xff]
    %v483 = vld [vmem:[#allocation11 + $0x70] sm:$0xff]
    %v484 = vld [vmem:[#allocation11 + $0x78] sm:$0xff]
    %v485 = vld [vmem:[#allocation11 + $0x80] sm:$0xff]
    %v486 = vld [vmem:[#allocation11 + $0x88] sm:$0xff]
    %v487 = vld [vmem:[#allocation11 + $0x90] sm:$0xff]
    %v488 = vld [vmem:[#allocation11 + $0x98] sm:$0xff]
    %v489 = vld [vmem:[#allocation11 + $0xa0] sm:$0xff]
    %v490 = vld [vmem:[#allocation11 + $0xa8] sm:$0xff]
    %v491 = vld [vmem:[#allocation11 + $0xb0] sm:$0xff]
    %v492 = vld [vmem:[#allocation11 + $0xb8] sm:$0xff]
    %v493 = vld [vmem:[#allocation11 + $0xc0] sm:$0xff]
    %v494 = vld [vmem:[#allocation11 + $0xc8] sm:$0xff]
    %v495 = vld [vmem:[#allocation11 + $0xd0] sm:$0xff]
    %v496 = vld [vmem:[#allocation11 + $0xd8] sm:$0xff]
    %v497 = vld [vmem:[#allocation11 + $0xe0] sm:$0xff]
    %v498 = vld [vmem:[#allocation11 + $0xe8] sm:$0xff]
    %v499 = vld [vmem:[#allocation11 + $0xf0] sm:$0xff]
    %v500 = vld [vmem:[#allocation11 + $0xf8] sm:$0xff]
    %v501 = vld [vmem:[#allocation11 + $0x100] sm:$0xff]
    %v502 = vld [vmem:[#allocation11 + $0x108] sm:$0xff]
    %v503 = vld [vmem:[#allocation11 + $0x110] sm:$0xff]
    %v504 = vld [vmem:[#allocation11 + $0x118] sm:$0xff]
    %v505 = vld [vmem:[#allocation11 + $0x120] sm:$0xff]
    %v506 = vld [vmem:[#allocation11 + $0x128] sm:$0xff]
    %v507 = vld [vmem:[#allocation11 + $0x130] sm:$0xff]
    %v508 = vld [vmem:[#allocation11 + $0x138] sm:$0xff]
    %v509 = vld [vmem:[#allocation11 + $0x140] sm:$0xff]
    %v510 = vld [vmem:[#allocation11 + $0x148] sm:$0xff]
    %v511 = vld [vmem:[#allocation11 + $0x150] sm:$0xff]
    %v512 = vld [vmem:[#allocation11 + $0x158] sm:$0xff]
    %v513 = vld [vmem:[#allocation11 + $0x160] sm:$0xff]
    %v514 = vld [vmem:[#allocation11 + $0x168] sm:$0xff]
    %v515 = vld [vmem:[#allocation11 + $0x170] sm:$0xff]
    %v516 = vld [vmem:[#allocation11 + $0x178] sm:$0xff]
    %v517 = vld [vmem:[#allocation11 + $0x180] sm:$0xff]
    %v518 = vld [vmem:[#allocation11 + $0x188] sm:$0xff]
    %v519 = vld [vmem:[#allocation11 + $0x190] sm:$0xff]
    %v520 = vld [vmem:[#allocation11 + $0x198] sm:$0xff]
    %v521 = vld [vmem:[#allocation11 + $0x1a0] sm:$0xff]
    %v522 = vld [vmem:[#allocation11 + $0x1a8] sm:$0xff]
    %v523 = vld [vmem:[#allocation11 + $0x1b0] sm:$0xff]
    %v524 = vld [vmem:[#allocation11 + $0x1b8] sm:$0xff]
    %v525 = vld [vmem:[#allocation11 + $0x1c0] sm:$0xff]
    %v526 = vld [vmem:[#allocation11 + $0x1c8] sm:$0xff]
    %v527 = vld [vmem:[#allocation11 + $0x1d0] sm:$0xff]
    %v528 = vld [vmem:[#allocation11 + $0x1d8] sm:$0xff]
    %v529 = vld [vmem:[#allocation11 + $0x1e0] sm:$0xff]
    %v530 = vld [vmem:[#allocation11 + $0x1e8] sm:$0xff]
    %v531 = vld [vmem:[#allocation11 + $0x1f0] sm:$0xff]
    %v532 = vld [vmem:[#allocation11 + $0x1f8] sm:$0xff]
    %v533 = vld [vmem:[#allocation11 + $0x200] sm:$0xff]
    %v534 = vld [vmem:[#allocation11 + $0x208] sm:$0xff]
    %v535 = vld [vmem:[#allocation11 + $0x210] sm:$0xff]
    %v536 = vld [vmem:[#allocation11 + $0x218] sm:$0xff]
    %v537 = vld [vmem:[#allocation11 + $0x220] sm:$0xff]
    %v538 = vld [vmem:[#allocation11 + $0x228] sm:$0xff]
    %v539 = vld [vmem:[#allocation11 + $0x230] sm:$0xff]
    %v540 = vld [vmem:[#allocation11 + $0x238] sm:$0xff]
    %v541 = vld [vmem:[#allocation11 + $0x240] sm:$0xff]
    %v542 = vld [vmem:[#allocation11 + $0x248] sm:$0xff]
    %v543 = vld [vmem:[#allocation11 + $0x250] sm:$0xff]
    %v544 = vld [vmem:[#allocation11 + $0x258] sm:$0xff]
    %v545 = vld [vmem:[#allocation11 + $0x260] sm:$0xff]
    %v546 = vld [vmem:[#allocation11 + $0x268] sm:$0xff]
    %v547 = vld [vmem:[#allocation11 + $0x270] sm:$0xff]
    %v548 = vld [vmem:[#allocation11 + $0x278] sm:$0xff]
    %v549 = vld [vmem:[#allocation11 + $0x280] sm:$0xff]
    %v550 = vld [vmem:[#allocation11 + $0x288] sm:$0xff]
    %v551 = vld [vmem:[#allocation11 + $0x290] sm:$0xff]
    %v552 = vld [vmem:[#allocation11 + $0x298] sm:$0xff]
    %v553 = vld [vmem:[#allocation11 + $0x2a0] sm:$0xff]
    %v554 = vld [vmem:[#allocation11 + $0x2a8] sm:$0xff]
    %v555 = vld [vmem:[#allocation11 + $0x2b0] sm:$0xff]
    %v556 = vld [vmem:[#allocation11 + $0x2b8] sm:$0xff]
    %v557 = vld [vmem:[#allocation11 + $0x2c0] sm:$0xff]
    %v558 = vld [vmem:[#allocation11 + $0x2c8] sm:$0xff]
    %v559 = vld [vmem:[#allocation11 + $0x2d0] sm:$0xff]
    %v560 = vld [vmem:[#allocation11 + $0x2d8] sm:$0xff]
    %v561 = vld [vmem:[#allocation11 + $0x2e0] sm:$0xff]
    %v562 = vld [vmem:[#allocation11 + $0x2e8] sm:$0xff]
    %v563 = vld [vmem:[#allocation11 + $0x2f0] sm:$0xff]
    %v564 = vld [vmem:[#allocation11 + $0x2f8] sm:$0xff]
    %v565 = vld [vmem:[#allocation11 + $0x300] sm:$0xff]
    %v566 = vld [vmem:[#allocation11 + $0x308] sm:$0xff]
    %v567 = vld [vmem:[#allocation11 + $0x310] sm:$0xff]
    %v568 = vld [vmem:[#allocation11 + $0x318] sm:$0xff]
    %v569 = vld [vmem:[#allocation11 + $0x320] sm:$0xff]
    %v570 = vld [vmem:[#allocation11 + $0x328] sm:$0xff]
    %v571 = vld [vmem:[#allocation11 + $0x330] sm:$0xff]
    %v572 = vld [vmem:[#allocation11 + $0x338] sm:$0xff]
    %v573 = vld [vmem:[#allocation11 + $0x340] sm:$0xff]
    %v574 = vld [vmem:[#allocation11 + $0x348] sm:$0xff]
    %v575 = vld [vmem:[#allocation11 + $0x350] sm:$0xff]
    %v576 = vld [vmem:[#allocation11 + $0x358] sm:$0xff]
    %v577 = vld [vmem:[#allocation11 + $0x360] sm:$0xff]
    %v578 = vld [vmem:[#allocation11 + $0x368] sm:$0xff]
    %v579 = vld [vmem:[#allocation11 + $0x370] sm:$0xff]
    %v580 = vld [vmem:[#allocation11 + $0x378] sm:$0xff]
    %v581 = vld [vmem:[#allocation11 + $0x380] sm:$0xff]
    %v582 = vld [vmem:[#allocation11 + $0x388] sm:$0xff]
    %v583 = vld [vmem:[#allocation11 + $0x390] sm:$0xff]
    %v584 = vld [vmem:[#allocation11 + $0x398] sm:$0xff]
    %v585 = vld [vmem:[#allocation11 + $0x3a0] sm:$0xff]
    %v586 = vld [vmem:[#allocation11 + $0x3a8] sm:$0xff]
    %v587 = vld [vmem:[#allocation11 + $0x3b0] sm:$0xff]
    %v588 = vld [vmem:[#allocation11 + $0x3b8] sm:$0xff]
    %v589 = vld [vmem:[#allocation11 + $0x3c0] sm:$0xff]
    %v590 = vld [vmem:[#allocation11 + $0x3c8] sm:$0xff]
    %v591 = vld [vmem:[#allocation11 + $0x3d0] sm:$0xff]
    %v592 = vld [vmem:[#allocation11 + $0x3d8] sm:$0xff]
    %v593 = vld [vmem:[#allocation11 + $0x3e0] sm:$0xff]
    %v594 = vld [vmem:[#allocation11 + $0x3e8] sm:$0xff]
    %v595 = vld [vmem:[#allocation11 + $0x3f0] sm:$0xff]
    %v596 = vld [vmem:[#allocation11 + $0x3f8] sm:$0xff]
    %v597 = vld [vmem:[#allocation13] sm:$0xf]
    %v599 = vlaneseq
    %v600 = vshrl.u32 %v599, 7
    %v601 = vsub.s32 0, %v600
    %v602 = vrot.slane %v597, %v601
    %v603 = vlaneseq
    %v604 = vshrl.u32 %v603, 7
    %v605 = vsub.s32 1, %v604
    %v606 = vrot.slane %v597, %v605
    %v607 = vlaneseq
    %v608 = vshrl.u32 %v607, 7
    %v609 = vsub.s32 2, %v608
    %v610 = vrot.slane %v597, %v609
    %v611 = vlaneseq
    %v612 = vshrl.u32 %v611, 7
    %v613 = vsub.s32 3, %v612
    %v614 = vrot.slane %v597, %v613
    %v747 = vunpack.c.l.b16 %v469
    %v748 = vunpack.c.h.b16 %v469
    %v749 = vunpack.c.l.b16 %v470
    %v750 = vunpack.c.h.b16 %v470
    %v751 = vunpack.c.l.b16 %v471
    %v752 = vunpack.c.h.b16 %v471
    %v753 = vunpack.c.l.b16 %v472
    %v754 = vunpack.c.h.b16 %v472
    %v755 = vunpack.c.l.b16 %v473
    %v756 = vunpack.c.h.b16 %v473
    %v757 = vunpack.c.l.b16 %v474
    %v758 = vunpack.c.h.b16 %v474
    %v759 = vunpack.c.l.b16 %v475
    %v760 = vunpack.c.h.b16 %v475
    %v761 = vunpack.c.l.b16 %v476
    %v762 = vunpack.c.h.b16 %v476
    %v763 = vunpack.c.l.b16 %v477
    %v764 = vunpack.c.h.b16 %v477
    %v765 = vunpack.c.l.b16 %v478
    %v766 = vunpack.c.h.b16 %v478
    %v767 = vunpack.c.l.b16 %v479
    %v768 = vunpack.c.h.b16 %v479
    %v769 = vunpack.c.l.b16 %v480
    %v770 = vunpack.c.h.b16 %v480
    %v771 = vunpack.c.l.b16 %v481
    %v772 = vunpack.c.h.b16 %v481
    %v773 = vunpack.c.l.b16 %v482
    %v774 = vunpack.c.h.b16 %v482
    %v775 = vunpack.c.l.b16 %v483
    %v776 = vunpack.c.h.b16 %v483
    %v777 = vunpack.c.l.b16 %v484
    %v778 = vunpack.c.h.b16 %v484
    %v779 = vunpack.c.l.b16 %v485
    %v780 = vunpack.c.h.b16 %v485
    %v781 = vunpack.c.l.b16 %v486
    %v782 = vunpack.c.h.b16 %v486
    %v783 = vunpack.c.l.b16 %v487
    %v784 = vunpack.c.h.b16 %v487
    %v785 = vunpack.c.l.b16 %v488
    %v786 = vunpack.c.h.b16 %v488
    %v787 = vunpack.c.l.b16 %v489
    %v788 = vunpack.c.h.b16 %v489
    %v789 = vunpack.c.l.b16 %v490
    %v790 = vunpack.c.h.b16 %v490
    %v791 = vunpack.c.l.b16 %v491
    %v792 = vunpack.c.h.b16 %v491
    %v793 = vunpack.c.l.b16 %v492
    %v794 = vunpack.c.h.b16 %v492
    %v795 = vunpack.c.l.b16 %v493
    %v796 = vunpack.c.h.b16 %v493
    %v797 = vunpack.c.l.b16 %v494
    %v798 = vunpack.c.h.b16 %v494
    %v799 = vunpack.c.l.b16 %v495
    %v800 = vunpack.c.h.b16 %v495
    %v801 = vunpack.c.l.b16 %v496
    %v802 = vunpack.c.h.b16 %v496
    %v803 = vunpack.c.l.b16 %v497
    %v804 = vunpack.c.h.b16 %v497
    %v805 = vunpack.c.l.b16 %v498
    %v806 = vunpack.c.h.b16 %v498
    %v807 = vunpack.c.l.b16 %v499
    %v808 = vunpack.c.h.b16 %v499
    %v809 = vunpack.c.l.b16 %v500
    %v810 = vunpack.c.h.b16 %v500
    %v811 = vunpack.c.l.b16 %v501
    %v812 = vunpack.c.h.b16 %v501
    %v813 = vunpack.c.l.b16 %v502
    %v814 = vunpack.c.h.b16 %v502
    %v815 = vunpack.c.l.b16 %v503
    %v816 = vunpack.c.h.b16 %v503
    %v817 = vunpack.c.l.b16 %v504
    %v818 = vunpack.c.h.b16 %v504
    %v819 = vunpack.c.l.b16 %v505
    %v820 = vunpack.c.h.b16 %v505
    %v821 = vunpack.c.l.b16 %v506
    %v822 = vunpack.c.h.b16 %v506
    %v823 = vunpack.c.l.b16 %v507
    %v824 = vunpack.c.h.b16 %v507
    %v825 = vunpack.c.l.b16 %v508
    %v826 = vunpack.c.h.b16 %v508
    %v827 = vunpack.c.l.b16 %v509
    %v828 = vunpack.c.h.b16 %v509
    %v829 = vunpack.c.l.b16 %v510
    %v830 = vunpack.c.h.b16 %v510
    %v831 = vunpack.c.l.b16 %v511
    %v832 = vunpack.c.h.b16 %v511
    %v833 = vunpack.c.l.b16 %v512
    %v834 = vunpack.c.h.b16 %v512
    %v835 = vunpack.c.l.b16 %v513
    %v836 = vunpack.c.h.b16 %v513
    %v837 = vunpack.c.l.b16 %v514
    %v838 = vunpack.c.h.b16 %v514
    %v839 = vunpack.c.l.b16 %v515
    %v840 = vunpack.c.h.b16 %v515
    %v841 = vunpack.c.l.b16 %v516
    %v842 = vunpack.c.h.b16 %v516
    %v843 = vunpack.c.l.b16 %v517
    %v844 = vunpack.c.h.b16 %v517
    %v845 = vunpack.c.l.b16 %v518
    %v846 = vunpack.c.h.b16 %v518
    %v847 = vunpack.c.l.b16 %v519
    %v848 = vunpack.c.h.b16 %v519
    %v849 = vunpack.c.l.b16 %v520
    %v850 = vunpack.c.h.b16 %v520
    %v851 = vunpack.c.l.b16 %v521
    %v852 = vunpack.c.h.b16 %v521
    %v853 = vunpack.c.l.b16 %v522
    %v854 = vunpack.c.h.b16 %v522
    %v855 = vunpack.c.l.b16 %v523
    %v856 = vunpack.c.h.b16 %v523
    %v857 = vunpack.c.l.b16 %v524
    %v858 = vunpack.c.h.b16 %v524
    %v859 = vunpack.c.l.b16 %v525
    %v860 = vunpack.c.h.b16 %v525
    %v861 = vunpack.c.l.b16 %v526
    %v862 = vunpack.c.h.b16 %v526
    %v863 = vunpack.c.l.b16 %v527
    %v864 = vunpack.c.h.b16 %v527
    %v865 = vunpack.c.l.b16 %v528
    %v866 = vunpack.c.h.b16 %v528
    %v867 = vunpack.c.l.b16 %v529
    %v868 = vunpack.c.h.b16 %v529
    %v869 = vunpack.c.l.b16 %v530
    %v870 = vunpack.c.h.b16 %v530
    %v871 = vunpack.c.l.b16 %v531
    %v872 = vunpack.c.h.b16 %v531
    %v873 = vunpack.c.l.b16 %v532
    %v874 = vunpack.c.h.b16 %v532
    %v875 = vunpack.c.l.b16 %v533
    %v876 = vunpack.c.h.b16 %v533
    %v877 = vunpack.c.l.b16 %v534
    %v878 = vunpack.c.h.b16 %v534
    %v879 = vunpack.c.l.b16 %v535
    %v880 = vunpack.c.h.b16 %v535
    %v881 = vunpack.c.l.b16 %v536
    %v882 = vunpack.c.h.b16 %v536
    %v883 = vunpack.c.l.b16 %v537
    %v884 = vunpack.c.h.b16 %v537
    %v885 = vunpack.c.l.b16 %v538
    %v886 = vunpack.c.h.b16 %v538
    %v887 = vunpack.c.l.b16 %v539
    %v888 = vunpack.c.h.b16 %v539
    %v889 = vunpack.c.l.b16 %v540
    %v890 = vunpack.c.h.b16 %v540
    %v891 = vunpack.c.l.b16 %v541
    %v892 = vunpack.c.h.b16 %v541
    %v893 = vunpack.c.l.b16 %v542
    %v894 = vunpack.c.h.b16 %v542
    %v895 = vunpack.c.l.b16 %v543
    %v896 = vunpack.c.h.b16 %v543
    %v897 = vunpack.c.l.b16 %v544
    %v898 = vunpack.c.h.b16 %v544
    %v899 = vunpack.c.l.b16 %v545
    %v900 = vunpack.c.h.b16 %v545
    %v901 = vunpack.c.l.b16 %v546
    %v902 = vunpack.c.h.b16 %v546
    %v903 = vunpack.c.l.b16 %v547
    %v904 = vunpack.c.h.b16 %v547
    %v905 = vunpack.c.l.b16 %v548
    %v906 = vunpack.c.h.b16 %v548
    %v907 = vunpack.c.l.b16 %v549
    %v908 = vunpack.c.h.b16 %v549
    %v909 = vunpack.c.l.b16 %v550
    %v910 = vunpack.c.h.b16 %v550
    %v911 = vunpack.c.l.b16 %v551
    %v912 = vunpack.c.h.b16 %v551
    %v913 = vunpack.c.l.b16 %v552
    %v914 = vunpack.c.h.b16 %v552
    %v915 = vunpack.c.l.b16 %v553
    %v916 = vunpack.c.h.b16 %v553
    %v917 = vunpack.c.l.b16 %v554
    %v918 = vunpack.c.h.b16 %v554
    %v919 = vunpack.c.l.b16 %v555
    %v920 = vunpack.c.h.b16 %v555
    %v921 = vunpack.c.l.b16 %v556
    %v922 = vunpack.c.h.b16 %v556
    %v923 = vunpack.c.l.b16 %v557
    %v924 = vunpack.c.h.b16 %v557
    %v925 = vunpack.c.l.b16 %v558
    %v926 = vunpack.c.h.b16 %v558
    %v927 = vunpack.c.l.b16 %v559
    %v928 = vunpack.c.h.b16 %v559
    %v929 = vunpack.c.l.b16 %v560
    %v930 = vunpack.c.h.b16 %v560
    %v931 = vunpack.c.l.b16 %v561
    %v932 = vunpack.c.h.b16 %v561
    %v933 = vunpack.c.l.b16 %v562
    %v934 = vunpack.c.h.b16 %v562
    %v935 = vunpack.c.l.b16 %v563
    %v936 = vunpack.c.h.b16 %v563
    %v937 = vunpack.c.l.b16 %v564
    %v938 = vunpack.c.h.b16 %v564
    %v939 = vunpack.c.l.b16 %v565
    %v940 = vunpack.c.h.b16 %v565
    %v941 = vunpack.c.l.b16 %v566
    %v942 = vunpack.c.h.b16 %v566
    %v943 = vunpack.c.l.b16 %v567
    %v944 = vunpack.c.h.b16 %v567
    %v945 = vunpack.c.l.b16 %v568
    %v946 = vunpack.c.h.b16 %v568
    %v947 = vunpack.c.l.b16 %v569
    %v948 = vunpack.c.h.b16 %v569
    %v949 = vunpack.c.l.b16 %v570
    %v950 = vunpack.c.h.b16 %v570
    %v951 = vunpack.c.l.b16 %v571
    %v952 = vunpack.c.h.b16 %v571
    %v953 = vunpack.c.l.b16 %v572
    %v954 = vunpack.c.h.b16 %v572
    %v955 = vunpack.c.l.b16 %v573
    %v956 = vunpack.c.h.b16 %v573
    %v957 = vunpack.c.l.b16 %v574
    %v958 = vunpack.c.h.b16 %v574
    %v959 = vunpack.c.l.b16 %v575
    %v960 = vunpack.c.h.b16 %v575
    %v961 = vunpack.c.l.b16 %v576
    %v962 = vunpack.c.h.b16 %v576
    %v963 = vunpack.c.l.b16 %v577
    %v964 = vunpack.c.h.b16 %v577
    %v965 = vunpack.c.l.b16 %v578
    %v966 = vunpack.c.h.b16 %v578
    %v967 = vunpack.c.l.b16 %v579
    %v968 = vunpack.c.h.b16 %v579
    %v969 = vunpack.c.l.b16 %v580
    %v970 = vunpack.c.h.b16 %v580
    %v971 = vunpack.c.l.b16 %v581
    %v972 = vunpack.c.h.b16 %v581
    %v973 = vunpack.c.l.b16 %v582
    %v974 = vunpack.c.h.b16 %v582
    %v975 = vunpack.c.l.b16 %v583
    %v976 = vunpack.c.h.b16 %v583
    %v977 = vunpack.c.l.b16 %v584
    %v978 = vunpack.c.h.b16 %v584
    %v979 = vunpack.c.l.b16 %v585
    %v980 = vunpack.c.h.b16 %v585
    %v981 = vunpack.c.l.b16 %v586
    %v982 = vunpack.c.h.b16 %v586
    %v983 = vunpack.c.l.b16 %v587
    %v984 = vunpack.c.h.b16 %v587
    %v985 = vunpack.c.l.b16 %v588
    %v986 = vunpack.c.h.b16 %v588
    %v987 = vunpack.c.l.b16 %v589
    %v988 = vunpack.c.h.b16 %v589
    %v989 = vunpack.c.l.b16 %v590
    %v990 = vunpack.c.h.b16 %v590
    %v991 = vunpack.c.l.b16 %v591
    %v992 = vunpack.c.h.b16 %v591
    %v993 = vunpack.c.l.b16 %v592
    %v994 = vunpack.c.h.b16 %v592
    %v995 = vunpack.c.l.b16 %v593
    %v996 = vunpack.c.h.b16 %v593
    %v997 = vunpack.c.l.b16 %v594
    %v998 = vunpack.c.h.b16 %v594
    %v999 = vunpack.c.l.b16 %v595
    %v1000 = vunpack.c.h.b16 %v595
    %v1001 = vunpack.c.l.b16 %v596
    %v1002 = vunpack.c.h.b16 %v596
    %v1003 = vpack.c.b16 %v751, %v747
    %v1004 = vpack.c.b16 %v752, %v748
    %v1005 = vpack.c.b16 %v753, %v749
    %v1006 = vpack.c.b16 %v754, %v750
    %v1007 = vpack.c.b16 %v759, %v755
    %v1008 = vpack.c.b16 %v760, %v756
    %v1009 = vpack.c.b16 %v761, %v757
    %v1010 = vpack.c.b16 %v762, %v758
    %v1011 = vpack.c.b16 %v767, %v763
    %v1012 = vpack.c.b16 %v768, %v764
    %v1013 = vpack.c.b16 %v769, %v765
    %v1014 = vpack.c.b16 %v770, %v766
    %v1015 = vpack.c.b16 %v775, %v771
    %v1016 = vpack.c.b16 %v776, %v772
    %v1017 = vpack.c.b16 %v777, %v773
    %v1018 = vpack.c.b16 %v778, %v774
    %v1019 = vpack.c.b16 %v783, %v779
    %v1020 = vpack.c.b16 %v784, %v780
    %v1021 = vpack.c.b16 %v785, %v781
    %v1022 = vpack.c.b16 %v786, %v782
    %v1023 = vpack.c.b16 %v791, %v787
    %v1024 = vpack.c.b16 %v792, %v788
    %v1025 = vpack.c.b16 %v793, %v789
    %v1026 = vpack.c.b16 %v794, %v790
    %v1027 = vpack.c.b16 %v799, %v795
    %v1028 = vpack.c.b16 %v800, %v796
    %v1029 = vpack.c.b16 %v801, %v797
    %v1030 = vpack.c.b16 %v802, %v798
    %v1031 = vpack.c.b16 %v807, %v803
    %v1032 = vpack.c.b16 %v808, %v804
    %v1033 = vpack.c.b16 %v809, %v805
    %v1034 = vpack.c.b16 %v810, %v806
    %v1035 = vpack.c.b16 %v815, %v811
    %v1036 = vpack.c.b16 %v816, %v812
    %v1037 = vpack.c.b16 %v817, %v813
    %v1038 = vpack.c.b16 %v818, %v814
    %v1039 = vpack.c.b16 %v823, %v819
    %v1040 = vpack.c.b16 %v824, %v820
    %v1041 = vpack.c.b16 %v825, %v821
    %v1042 = vpack.c.b16 %v826, %v822
    %v1043 = vpack.c.b16 %v831, %v827
    %v1044 = vpack.c.b16 %v832, %v828
    %v1045 = vpack.c.b16 %v833, %v829
    %v1046 = vpack.c.b16 %v834, %v830
    %v1047 = vpack.c.b16 %v839, %v835
    %v1048 = vpack.c.b16 %v840, %v836
    %v1049 = vpack.c.b16 %v841, %v837
    %v1050 = vpack.c.b16 %v842, %v838
    %v1051 = vpack.c.b16 %v847, %v843
    %v1052 = vpack.c.b16 %v848, %v844
    %v1053 = vpack.c.b16 %v849, %v845
    %v1054 = vpack.c.b16 %v850, %v846
    %v1055 = vpack.c.b16 %v855, %v851
    %v1056 = vpack.c.b16 %v856, %v852
    %v1057 = vpack.c.b16 %v857, %v853
    %v1058 = vpack.c.b16 %v858, %v854
    %v1059 = vpack.c.b16 %v863, %v859
    %v1060 = vpack.c.b16 %v864, %v860
    %v1061 = vpack.c.b16 %v865, %v861
    %v1062 = vpack.c.b16 %v866, %v862
    %v1063 = vpack.c.b16 %v871, %v867
    %v1064 = vpack.c.b16 %v872, %v868
    %v1065 = vpack.c.b16 %v873, %v869
    %v1066 = vpack.c.b16 %v874, %v870
    %v1067 = vpack.c.b16 %v879, %v875
    %v1068 = vpack.c.b16 %v880, %v876
    %v1069 = vpack.c.b16 %v881, %v877
    %v1070 = vpack.c.b16 %v882, %v878
    %v1071 = vpack.c.b16 %v887, %v883
    %v1072 = vpack.c.b16 %v888, %v884
    %v1073 = vpack.c.b16 %v889, %v885
    %v1074 = vpack.c.b16 %v890, %v886
    %v1075 = vpack.c.b16 %v895, %v891
    %v1076 = vpack.c.b16 %v896, %v892
    %v1077 = vpack.c.b16 %v897, %v893
    %v1078 = vpack.c.b16 %v898, %v894
    %v1079 = vpack.c.b16 %v903, %v899
    %v1080 = vpack.c.b16 %v904, %v900
    %v1081 = vpack.c.b16 %v905, %v901
    %v1082 = vpack.c.b16 %v906, %v902
    %v1083 = vpack.c.b16 %v911, %v907
    %v1084 = vpack.c.b16 %v912, %v908
    %v1085 = vpack.c.b16 %v913, %v909
    %v1086 = vpack.c.b16 %v914, %v910
    %v1087 = vpack.c.b16 %v919, %v915
    %v1088 = vpack.c.b16 %v920, %v916
    %v1089 = vpack.c.b16 %v921, %v917
    %v1090 = vpack.c.b16 %v922, %v918
    %v1091 = vpack.c.b16 %v927, %v923
    %v1092 = vpack.c.b16 %v928, %v924
    %v1093 = vpack.c.b16 %v929, %v925
    %v1094 = vpack.c.b16 %v930, %v926
    %v1095 = vpack.c.b16 %v935, %v931
    %v1096 = vpack.c.b16 %v936, %v932
    %v1097 = vpack.c.b16 %v937, %v933
    %v1098 = vpack.c.b16 %v938, %v934
    %v1099 = vpack.c.b16 %v943, %v939
    %v1100 = vpack.c.b16 %v944, %v940
    %v1101 = vpack.c.b16 %v945, %v941
    %v1102 = vpack.c.b16 %v946, %v942
    %v1103 = vpack.c.b16 %v951, %v947
    %v1104 = vpack.c.b16 %v952, %v948
    %v1105 = vpack.c.b16 %v953, %v949
    %v1106 = vpack.c.b16 %v954, %v950
    %v1107 = vpack.c.b16 %v959, %v955
    %v1108 = vpack.c.b16 %v960, %v956
    %v1109 = vpack.c.b16 %v961, %v957
    %v1110 = vpack.c.b16 %v962, %v958
    %v1111 = vpack.c.b16 %v967, %v963
    %v1112 = vpack.c.b16 %v968, %v964
    %v1113 = vpack.c.b16 %v969, %v965
    %v1114 = vpack.c.b16 %v970, %v966
    %v1115 = vpack.c.b16 %v975, %v971
    %v1116 = vpack.c.b16 %v976, %v972
    %v1117 = vpack.c.b16 %v977, %v973
    %v1118 = vpack.c.b16 %v978, %v974
    %v1119 = vpack.c.b16 %v983, %v979
    %v1120 = vpack.c.b16 %v984, %v980
    %v1121 = vpack.c.b16 %v985, %v981
    %v1122 = vpack.c.b16 %v986, %v982
    %v1123 = vpack.c.b16 %v991, %v987
    %v1124 = vpack.c.b16 %v992, %v988
    %v1125 = vpack.c.b16 %v993, %v989
    %v1126 = vpack.c.b16 %v994, %v990
    %v1127 = vpack.c.b16 %v999, %v995
    %v1128 = vpack.c.b16 %v1000, %v996
    %v1129 = vpack.c.b16 %v1001, %v997
    %v1130 = vpack.c.b16 %v1002, %v998
    %1259 = vmatprep.subr.bf16.mxu0 %v1004
    %1260 = vmatpush1.bf16.msra.mxu0 %v1003
    %1261 = vmatprep.subr.bf16.mxu0 %v1008
    %1262 = vmatpush1.bf16.msra.mxu0 %v1007
    %1263 = vmatprep.subr.bf16.mxu0 %v1012
    %1264 = vmatpush1.bf16.msra.mxu0 %v1011
    %1265 = vmatprep.subr.bf16.mxu0 %v1016
    %1266 = vmatpush1.bf16.msra.mxu0 %v1015
    %1267 = vmatprep.subr.bf16.mxu0 %v1020
    %1268 = vmatpush1.bf16.msra.mxu0 %v1019
    %1269 = vmatprep.subr.bf16.mxu0 %v1024
    %1270 = vmatpush1.bf16.msra.mxu0 %v1023
    %1271 = vmatprep.subr.bf16.mxu0 %v1028
    %1272 = vmatpush1.bf16.msra.mxu0 %v1027
    %1273 = vmatprep.subr.bf16.mxu0 %v1032
    %1274 = vmatpush1.bf16.msra.mxu0 %v1031
    %1275 = vmatprep.subr.bf16.mxu0 %v1036
    %1276 = vmatpush1.bf16.msra.mxu0 %v1035
    %1277 = vmatprep.subr.bf16.mxu0 %v1040
    %1278 = vmatpush1.bf16.msra.mxu0 %v1039
    %1279 = vmatprep.subr.bf16.mxu0 %v1044
    %1280 = vmatpush1.bf16.msra.mxu0 %v1043
    %1281 = vmatprep.subr.bf16.mxu0 %v1048
    %1282 = vmatpush1.bf16.msra.mxu0 %v1047
    %1283 = vmatprep.subr.bf16.mxu0 %v1052
    %1284 = vmatpush1.bf16.msra.mxu0 %v1051
    %1285 = vmatprep.subr.bf16.mxu0 %v1056
    %1286 = vmatpush1.bf16.msra.mxu0 %v1055
    %1287 = vmatprep.subr.bf16.mxu0 %v1060
    %1288 = vmatpush1.bf16.msra.mxu0 %v1059
    %1289 = vmatprep.subr.bf16.mxu0 %v1064
    %1290 = vmatpush1.bf16.msra.mxu0 %v1063
    %1291 = vmatprep.mubr.bf16.mxu0 %v466
    %1292 = vmatmul.mubr.bf16.gmra.mrb[0].mxu0 %v465
    %v1293 = vpop.f32.mrb[0].mxu0
    %v1294 = vadd.f32 %v602, %v1293
    %v1295 = vpop.f32.mrb[0].mxu0
    %v1296 = vadd.f32 %v606, %v1295
    %v1297 = vpop.f32.mrb[0].mxu0
    %v1298 = vpop.f32.mrb[0].mxu0
    %1299 = vdwg.mxu0
    %1300 = vmatprep.subr.bf16.mxu0 %v1068
    %1301 = vmatpush1.bf16.msra.mxu0 %v1067
    %1302 = vmatprep.subr.bf16.mxu0 %v1072
    %1303 = vmatpush1.bf16.msra.mxu0 %v1071
    %1304 = vmatprep.subr.bf16.mxu0 %v1076
    %1305 = vmatpush1.bf16.msra.mxu0 %v1075
    %1306 = vmatprep.subr.bf16.mxu0 %v1080
    %1307 = vmatpush1.bf16.msra.mxu0 %v1079
    %1308 = vmatprep.subr.bf16.mxu0 %v1084
    %1309 = vmatpush1.bf16.msra.mxu0 %v1083
    %1310 = vmatprep.subr.bf16.mxu0 %v1088
    %1311 = vmatpush1.bf16.msra.mxu0 %v1087
    %1312 = vmatprep.subr.bf16.mxu0 %v1092
    %1313 = vmatpush1.bf16.msra.mxu0 %v1091
    %1314 = vmatprep.subr.bf16.mxu0 %v1096
    %1315 = vmatpush1.bf16.msra.mxu0 %v1095
    %1316 = vmatprep.subr.bf16.mxu0 %v1100
    %1317 = vmatpush1.bf16.msra.mxu0 %v1099
    %1318 = vmatprep.subr.bf16.mxu0 %v1104
    %1319 = vmatpush1.bf16.msra.mxu0 %v1103
    %1320 = vmatprep.subr.bf16.mxu0 %v1108
    %1321 = vmatpush1.bf16.msra.mxu0 %v1107
    %1322 = vmatprep.subr.bf16.mxu0 %v1112
    %1323 = vmatpush1.bf16.msra.mxu0 %v1111
    %1324 = vmatprep.subr.bf16.mxu0 %v1116
    %1325 = vmatpush1.bf16.msra.mxu0 %v1115
    %1326 = vmatprep.subr.bf16.mxu0 %v1120
    %1327 = vmatpush1.bf16.msra.mxu0 %v1119
    %1328 = vmatprep.subr.bf16.mxu0 %v1124
    %1329 = vmatpush1.bf16.msra.mxu0 %v1123
    %1330 = vmatprep.subr.bf16.mxu0 %v1128
    %1331 = vmatpush1.bf16.msra.mxu0 %v1127
    %1332 = vmatprep.mubr.bf16.mxu0 %v468
    %1333 = vmatmul.mubr.bf16.gmra.mrb[0].mxu0 %v467
    %v1334 = vpop.f32.mrb[0].mxu0
    %v1335 = vadd.f32 %v1294, %v1334
    %v1336 = vpop.f32.mrb[0].mxu0
    %v1337 = vadd.f32 %v1296, %v1336
    %v1338 = vpop.f32.mrb[0].mxu0
    %v1339 = vpop.f32.mrb[0].mxu0
    %1340 = vdwg.mxu0
    %1341 = vmatprep.subr.bf16.mxu0 %v1006
    %1342 = vmatpush1.bf16.msra.mxu0 %v1005
    %1343 = vmatprep.subr.bf16.mxu0 %v1010
    %1344 = vmatpush1.bf16.msra.mxu0 %v1009
    %1345 = vmatprep.subr.bf16.mxu0 %v1014
    %1346 = vmatpush1.bf16.msra.mxu0 %v1013
    %1347 = vmatprep.subr.bf16.mxu0 %v1018
    %1348 = vmatpush1.bf16.msra.mxu0 %v1017
    %1349 = vmatprep.subr.bf16.mxu0 %v1022
    %1350 = vmatpush1.bf16.msra.mxu0 %v1021
    %1351 = vmatprep.subr.bf16.mxu0 %v1026
    %1352 = vmatpush1.bf16.msra.mxu0 %v1025
    %1353 = vmatprep.subr.bf16.mxu0 %v1030
    %1354 = vmatpush1.bf16.msra.mxu0 %v1029
    %1355 = vmatprep.subr.bf16.mxu0 %v1034
    %1356 = vmatpush1.bf16.msra.mxu0 %v1033
    %1357 = vmatprep.subr.bf16.mxu0 %v1038
    %1358 = vmatpush1.bf16.msra.mxu0 %v1037
    %1359 = vmatprep.subr.bf16.mxu0 %v1042
    %1360 = vmatpush1.bf16.msra.mxu0 %v1041
    %1361 = vmatprep.subr.bf16.mxu0 %v1046
    %1362 = vmatpush1.bf16.msra.mxu0 %v1045
    %1363 = vmatprep.subr.bf16.mxu0 %v1050
    %1364 = vmatpush1.bf16.msra.mxu0 %v1049
    %1365 = vmatprep.subr.bf16.mxu0 %v1054
    %1366 = vmatpush1.bf16.msra.mxu0 %v1053
    %1367 = vmatprep.subr.bf16.mxu0 %v1058
    %1368 = vmatpush1.bf16.msra.mxu0 %v1057
    %1369 = vmatprep.subr.bf16.mxu0 %v1062
    %1370 = vmatpush1.bf16.msra.mxu0 %v1061
    %1371 = vmatprep.subr.bf16.mxu0 %v1066
    %1372 = vmatpush1.bf16.msra.mxu0 %v1065
    %1373 = vmatprep.mubr.bf16.mxu0 %v466
    %1374 = vmatmul.mubr.bf16.gmra.mrb[0].mxu0 %v465
    %v1375 = vpop.f32.mrb[0].mxu0
    %v1376 = vadd.f32 %v610, %v1375
    %v1377 = vpop.f32.mrb[0].mxu0
    %v1378 = vadd.f32 %v614, %v1377
    %v1379 = vpop.f32.mrb[0].mxu0
    %v1380 = vpop.f32.mrb[0].mxu0
    %1381 = vdwg.mxu0
    %1382 = vmatprep.subr.bf16.mxu0 %v1070
    %1383 = vmatpush1.bf16.msra.mxu0 %v1069
    %1384 = vmatprep.subr.bf16.mxu0 %v1074
    %1385 = vmatpush1.bf16.msra.mxu0 %v1073
    %1386 = vmatprep.subr.bf16.mxu0 %v1078
    %1387 = vmatpush1.bf16.msra.mxu0 %v1077
    %1388 = vmatprep.subr.bf16.mxu0 %v1082
    %1389 = vmatpush1.bf16.msra.mxu0 %v1081
    %1390 = vmatprep.subr.bf16.mxu0 %v1086
    %1391 = vmatpush1.bf16.msra.mxu0 %v1085
    %1392 = vmatprep.subr.bf16.mxu0 %v1090
    %1393 = vmatpush1.bf16.msra.mxu0 %v1089
    %1394 = vmatprep.subr.bf16.mxu0 %v1094
    %1395 = vmatpush1.bf16.msra.mxu0 %v1093
    %1396 = vmatprep.subr.bf16.mxu0 %v1098
    %1397 = vmatpush1.bf16.msra.mxu0 %v1097
    %1398 = vmatprep.subr.bf16.mxu0 %v1102
    %1399 = vmatpush1.bf16.msra.mxu0 %v1101
    %1400 = vmatprep.subr.bf16.mxu0 %v1106
    %1401 = vmatpush1.bf16.msra.mxu0 %v1105
    %1402 = vmatprep.subr.bf16.mxu0 %v1110
    %1403 = vmatpush1.bf16.msra.mxu0 %v1109
    %1404 = vmatprep.subr.bf16.mxu0 %v1114
    %1405 = vmatpush1.bf16.msra.mxu0 %v1113
    %1406 = vmatprep.subr.bf16.mxu0 %v1118
    %1407 = vmatpush1.bf16.msra.mxu0 %v1117
    %1408 = vmatprep.subr.bf16.mxu0 %v1122
    %1409 = vmatpush1.bf16.msra.mxu0 %v1121
    %1410 = vmatprep.subr.bf16.mxu0 %v1126
    %1411 = vmatpush1.bf16.msra.mxu0 %v1125
    %1412 = vmatprep.subr.bf16.mxu0 %v1130
    %1413 = vmatpush1.bf16.msra.mxu0 %v1129
    %1414 = vmatprep.mubr.bf16.mxu0 %v468
    %1415 = vmatmul.mubr.bf16.gmra.mrb[0].mxu0 %v467
    %v1416 = vpop.f32.mrb[0].mxu0
    %v1417 = vadd.f32 %v1376, %v1416
    %v1418 = vpop.f32.mrb[0].mxu0
    %v1419 = vadd.f32 %v1378, %v1418
    %v1420 = vpop.f32.mrb[0].mxu0
    %v1421 = vpop.f32.mrb[0].mxu0
    %1422 = vdwg.mxu0
    %v1423 = vxor.u32 %v1335, 2147483648
    %v1424 = vxor.u32 %v1337, 2147483648
    %v1425 = vxor.u32 %v1417, 2147483648
    %v1426 = vxor.u32 %v1419, 2147483648
    %v1427 = vmul.f32 %v1423, 1.442695
    %v1428 = vpow.pop %v1427
    %v1429 = vmul.f32 %v1424, 1.442695
    %v1430 = vpow.pop %v1429
    %v1431 = vmul.f32 %v1425, 1.442695
    %v1432 = vpow.pop %v1431
    %v1433 = vmul.f32 %v1426, 1.442695
    %v1434 = vpow.pop %v1433
    %v1435 = vadd.f32 %v1428, 1.0
    %v1436 = vadd.f32 %v1430, 1.0
    %v1437 = vadd.f32 %v1432, 1.0
    %v1438 = vadd.f32 %v1434, 1.0
    %v1439 = vrcp.pop %v1435
    %v1440 = vmul.f32 1.0, %v1439
    %v1441 = vrcp.pop %v1436
    %v1442 = vmul.f32 1.0, %v1441
    %v1443 = vrcp.pop %v1437
    %v1444 = vmul.f32 1.0, %v1443
    %v1445 = vrcp.pop %v1438
    %v1446 = vmul.f32 1.0, %v1445
    %v1447 = vmul.f32 %v1335, %v1440
    %v1448 = vmul.f32 %v1337, %v1442
    %v1449 = vmul.f32 %v1417, %v1444
    %v1450 = vmul.f32 %v1419, %v1446
    %v1451 = vpack.c.bf16 %v1447, %v1447
    %v1452 = vpack.c.bf16 %v1448, %v1448
    %v1453 = vpack.c.bf16 %v1449, %v1449
    %v1454 = vpack.c.bf16 %v1450, %v1450
    %v1455 = vld [vmem:[#allocation14] sm:$0xff]
    %v1456 = vld [vmem:[#allocation14 + $0x8] sm:$0xff]
    %v1457 = vld [vmem:[#allocation14 + $0x10] sm:$0xff]
    %v1458 = vld [vmem:[#allocation14 + $0x18] sm:$0xff]
    %v1459 = vld [vmem:[#allocation14 + $0x20] sm:$0xff]
    %v1460 = vld [vmem:[#allocation14 + $0x28] sm:$0xff]
    %v1461 = vld [vmem:[#allocation14 + $0x30] sm:$0xff]
    %v1462 = vld [vmem:[#allocation14 + $0x38] sm:$0xff]
    %v1463 = vld [vmem:[#allocation14 + $0x40] sm:$0xff]
    %v1464 = vld [vmem:[#allocation14 + $0x48] sm:$0xff]
    %v1465 = vld [vmem:[#allocation14 + $0x50] sm:$0xff]
    %v1466 = vld [vmem:[#allocation14 + $0x58] sm:$0xff]
    %v1467 = vld [vmem:[#allocation14 + $0x60] sm:$0xff]
    %v1468 = vld [vmem:[#allocation14 + $0x68] sm:$0xff]
    %v1469 = vld [vmem:[#allocation14 + $0x70] sm:$0xff]
    %v1470 = vld [vmem:[#allocation14 + $0x78] sm:$0xff]
    %v1471 = vld [vmem:[#allocation14 + $0x80] sm:$0xff]
    %v1472 = vld [vmem:[#allocation14 + $0x88] sm:$0xff]
    %v1473 = vld [vmem:[#allocation14 + $0x90] sm:$0xff]
    %v1474 = vld [vmem:[#allocation14 + $0x98] sm:$0xff]
    %v1475 = vld [vmem:[#allocation14 + $0xa0] sm:$0xff]
    %v1476 = vld [vmem:[#allocation14 + $0xa8] sm:$0xff]
    %v1477 = vld [vmem:[#allocation14 + $0xb0] sm:$0xff]
    %v1478 = vld [vmem:[#allocation14 + $0xb8] sm:$0xff]
    %v1479 = vld [vmem:[#allocation14 + $0xc0] sm:$0xff]
    %v1480 = vld [vmem:[#allocation14 + $0xc8] sm:$0xff]
    %v1481 = vld [vmem:[#allocation14 + $0xd0] sm:$0xff]
    %v1482 = vld [vmem:[#allocation14 + $0xd8] sm:$0xff]
    %v1483 = vld [vmem:[#allocation14 + $0xe0] sm:$0xff]
    %v1484 = vld [vmem:[#allocation14 + $0xe8] sm:$0xff]
    %v1485 = vld [vmem:[#allocation14 + $0xf0] sm:$0xff]
    %v1486 = vld [vmem:[#allocation14 + $0xf8] sm:$0xff]
    %v1487 = vld [vmem:[#allocation14 + $0x100] sm:$0xff]
    %v1488 = vld [vmem:[#allocation14 + $0x108] sm:$0xff]
    %v1489 = vld [vmem:[#allocation14 + $0x110] sm:$0xff]
    %v1490 = vld [vmem:[#allocation14 + $0x118] sm:$0xff]
    %v1491 = vld [vmem:[#allocation14 + $0x120] sm:$0xff]
    %v1492 = vld [vmem:[#allocation14 + $0x128] sm:$0xff]
    %v1493 = vld [vmem:[#allocation14 + $0x130] sm:$0xff]
    %v1494 = vld [vmem:[#allocation14 + $0x138] sm:$0xff]
    %v1495 = vld [vmem:[#allocation14 + $0x140] sm:$0xff]
    %v1496 = vld [vmem:[#allocation14 + $0x148] sm:$0xff]
    %v1497 = vld [vmem:[#allocation14 + $0x150] sm:$0xff]
    %v1498 = vld [vmem:[#allocation14 + $0x158] sm:$0xff]
    %v1499 = vld [vmem:[#allocation14 + $0x160] sm:$0xff]
    %v1500 = vld [vmem:[#allocation14 + $0x168] sm:$0xff]
    %v1501 = vld [vmem:[#allocation14 + $0x170] sm:$0xff]
    %v1502 = vld [vmem:[#allocation14 + $0x178] sm:$0xff]
    %v1503 = vld [vmem:[#allocation14 + $0x180] sm:$0xff]
    %v1504 = vld [vmem:[#allocation14 + $0x188] sm:$0xff]
    %v1505 = vld [vmem:[#allocation14 + $0x190] sm:$0xff]
    %v1506 = vld [vmem:[#allocation14 + $0x198] sm:$0xff]
    %v1507 = vld [vmem:[#allocation14 + $0x1a0] sm:$0xff]
    %v1508 = vld [vmem:[#allocation14 + $0x1a8] sm:$0xff]
    %v1509 = vld [vmem:[#allocation14 + $0x1b0] sm:$0xff]
    %v1510 = vld [vmem:[#allocation14 + $0x1b8] sm:$0xff]
    %v1511 = vld [vmem:[#allocation14 + $0x1c0] sm:$0xff]
    %v1512 = vld [vmem:[#allocation14 + $0x1c8] sm:$0xff]
    %v1513 = vld [vmem:[#allocation14 + $0x1d0] sm:$0xff]
    %v1514 = vld [vmem:[#allocation14 + $0x1d8] sm:$0xff]
    %v1515 = vld [vmem:[#allocation14 + $0x1e0] sm:$0xff]
    %v1516 = vld [vmem:[#allocation14 + $0x1e8] sm:$0xff]
    %v1517 = vld [vmem:[#allocation14 + $0x1f0] sm:$0xff]
    %v1518 = vld [vmem:[#allocation14 + $0x1f8] sm:$0xff]
    %v1519 = vld [vmem:[#allocation14 + $0x200] sm:$0xff]
    %v1520 = vld [vmem:[#allocation14 + $0x208] sm:$0xff]
    %v1521 = vld [vmem:[#allocation14 + $0x210] sm:$0xff]
    %v1522 = vld [vmem:[#allocation14 + $0x218] sm:$0xff]
    %v1523 = vld [vmem:[#allocation14 + $0x220] sm:$0xff]
    %v1524 = vld [vmem:[#allocation14 + $0x228] sm:$0xff]
    %v1525 = vld [vmem:[#allocation14 + $0x230] sm:$0xff]
    %v1526 = vld [vmem:[#allocation14 + $0x238] sm:$0xff]
    %v1527 = vld [vmem:[#allocation14 + $0x240] sm:$0xff]
    %v1528 = vld [vmem:[#allocation14 + $0x248] sm:$0xff]
    %v1529 = vld [vmem:[#allocation14 + $0x250] sm:$0xff]
    %v1530 = vld [vmem:[#allocation14 + $0x258] sm:$0xff]
    %v1531 = vld [vmem:[#allocation14 + $0x260] sm:$0xff]
    %v1532 = vld [vmem:[#allocation14 + $0x268] sm:$0xff]
    %v1533 = vld [vmem:[#allocation14 + $0x270] sm:$0xff]
    %v1534 = vld [vmem:[#allocation14 + $0x278] sm:$0xff]
    %v1535 = vld [vmem:[#allocation14 + $0x280] sm:$0xff]
    %v1536 = vld [vmem:[#allocation14 + $0x288] sm:$0xff]
    %v1537 = vld [vmem:[#allocation14 + $0x290] sm:$0xff]
    %v1538 = vld [vmem:[#allocation14 + $0x298] sm:$0xff]
    %v1539 = vld [vmem:[#allocation14 + $0x2a0] sm:$0xff]
    %v1540 = vld [vmem:[#allocation14 + $0x2a8] sm:$0xff]
    %v1541 = vld [vmem:[#allocation14 + $0x2b0] sm:$0xff]
    %v1542 = vld [vmem:[#allocation14 + $0x2b8] sm:$0xff]
    %v1543 = vld [vmem:[#allocation14 + $0x2c0] sm:$0xff]
    %v1544 = vld [vmem:[#allocation14 + $0x2c8] sm:$0xff]
    %v1545 = vld [vmem:[#allocation14 + $0x2d0] sm:$0xff]
    %v1546 = vld [vmem:[#allocation14 + $0x2d8] sm:$0xff]
    %v1547 = vld [vmem:[#allocation14 + $0x2e0] sm:$0xff]
    %v1548 = vld [vmem:[#allocation14 + $0x2e8] sm:$0xff]
    %v1549 = vld [vmem:[#allocation14 + $0x2f0] sm:$0xff]
    %v1550 = vld [vmem:[#allocation14 + $0x2f8] sm:$0xff]
    %v1551 = vld [vmem:[#allocation14 + $0x300] sm:$0xff]
    %v1552 = vld [vmem:[#allocation14 + $0x308] sm:$0xff]
    %v1553 = vld [vmem:[#allocation14 + $0x310] sm:$0xff]
    %v1554 = vld [vmem:[#allocation14 + $0x318] sm:$0xff]
    %v1555 = vld [vmem:[#allocation14 + $0x320] sm:$0xff]
    %v1556 = vld [vmem:[#allocation14 + $0x328] sm:$0xff]
    %v1557 = vld [vmem:[#allocation14 + $0x330] sm:$0xff]
    %v1558 = vld [vmem:[#allocation14 + $0x338] sm:$0xff]
    %v1559 = vld [vmem:[#allocation14 + $0x340] sm:$0xff]
    %v1560 = vld [vmem:[#allocation14 + $0x348] sm:$0xff]
    %v1561 = vld [vmem:[#allocation14 + $0x350] sm:$0xff]
    %v1562 = vld [vmem:[#allocation14 + $0x358] sm:$0xff]
    %v1563 = vld [vmem:[#allocation14 + $0x360] sm:$0xff]
    %v1564 = vld [vmem:[#allocation14 + $0x368] sm:$0xff]
    %v1565 = vld [vmem:[#allocation14 + $0x370] sm:$0xff]
    %v1566 = vld [vmem:[#allocation14 + $0x378] sm:$0xff]
    %v1567 = vld [vmem:[#allocation14 + $0x380] sm:$0xff]
    %v1568 = vld [vmem:[#allocation14 + $0x388] sm:$0xff]
    %v1569 = vld [vmem:[#allocation14 + $0x390] sm:$0xff]
    %v1570 = vld [vmem:[#allocation14 + $0x398] sm:$0xff]
    %v1571 = vld [vmem:[#allocation14 + $0x3a0] sm:$0xff]
    %v1572 = vld [vmem:[#allocation14 + $0x3a8] sm:$0xff]
    %v1573 = vld [vmem:[#allocation14 + $0x3b0] sm:$0xff]
    %v1574 = vld [vmem:[#allocation14 + $0x3b8] sm:$0xff]
    %v1575 = vld [vmem:[#allocation14 + $0x3c0] sm:$0xff]
    %v1576 = vld [vmem:[#allocation14 + $0x3c8] sm:$0xff]
    %v1577 = vld [vmem:[#allocation14 + $0x3d0] sm:$0xff]
    %v1578 = vld [vmem:[#allocation14 + $0x3d8] sm:$0xff]
    %v1579 = vld [vmem:[#allocation14 + $0x3e0] sm:$0xff]
    %v1580 = vld [vmem:[#allocation14 + $0x3e8] sm:$0xff]
    %v1581 = vld [vmem:[#allocation14 + $0x3f0] sm:$0xff]
    %v1582 = vld [vmem:[#allocation14 + $0x3f8] sm:$0xff]
    %v1583 = vld [vmem:[#allocation16] sm:$0xf]
    %v1585 = vlaneseq
    %v1586 = vshrl.u32 %v1585, 7
    %v1587 = vsub.s32 0, %v1586
    %v1588 = vrot.slane %v1583, %v1587
    %v1589 = vlaneseq
    %v1590 = vshrl.u32 %v1589, 7
    %v1591 = vsub.s32 1, %v1590
    %v1592 = vrot.slane %v1583, %v1591
    %v1593 = vlaneseq
    %v1594 = vshrl.u32 %v1593, 7
    %v1595 = vsub.s32 2, %v1594
    %v1596 = vrot.slane %v1583, %v1595
    %v1597 = vlaneseq
    %v1598 = vshrl.u32 %v1597, 7
    %v1599 = vsub.s32 3, %v1598
    %v1600 = vrot.slane %v1583, %v1599
    %v1733 = vunpack.c.l.b16 %v1455
    %v1734 = vunpack.c.h.b16 %v1455
    %v1735 = vunpack.c.l.b16 %v1456
    %v1736 = vunpack.c.h.b16 %v1456
    %v1737 = vunpack.c.l.b16 %v1457
    %v1738 = vunpack.c.h.b16 %v1457
    %v1739 = vunpack.c.l.b16 %v1458
    %v1740 = vunpack.c.h.b16 %v1458
    %v1741 = vunpack.c.l.b16 %v1459
    %v1742 = vunpack.c.h.b16 %v1459
    %v1743 = vunpack.c.l.b16 %v1460
    %v1744 = vunpack.c.h.b16 %v1460
    %v1745 = vunpack.c.l.b16 %v1461
    %v1746 = vunpack.c.h.b16 %v1461
    %v1747 = vunpack.c.l.b16 %v1462
    %v1748 = vunpack.c.h.b16 %v1462
    %v1749 = vunpack.c.l.b16 %v1463
    %v1750 = vunpack.c.h.b16 %v1463
    %v1751 = vunpack.c.l.b16 %v1464
    %v1752 = vunpack.c.h.b16 %v1464
    %v1753 = vunpack.c.l.b16 %v1465
    %v1754 = vunpack.c.h.b16 %v1465
    %v1755 = vunpack.c.l.b16 %v1466
    %v1756 = vunpack.c.h.b16 %v1466
    %v1757 = vunpack.c.l.b16 %v1467
    %v1758 = vunpack.c.h.b16 %v1467
    %v1759 = vunpack.c.l.b16 %v1468
    %v1760 = vunpack.c.h.b16 %v1468
    %v1761 = vunpack.c.l.b16 %v1469
    %v1762 = vunpack.c.h.b16 %v1469
    %v1763 = vunpack.c.l.b16 %v1470
    %v1764 = vunpack.c.h.b16 %v1470
    %v1765 = vunpack.c.l.b16 %v1471
    %v1766 = vunpack.c.h.b16 %v1471
    %v1767 = vunpack.c.l.b16 %v1472
    %v1768 = vunpack.c.h.b16 %v1472
    %v1769 = vunpack.c.l.b16 %v1473
    %v1770 = vunpack.c.h.b16 %v1473
    %v1771 = vunpack.c.l.b16 %v1474
    %v1772 = vunpack.c.h.b16 %v1474
    %v1773 = vunpack.c.l.b16 %v1475
    %v1774 = vunpack.c.h.b16 %v1475
    %v1775 = vunpack.c.l.b16 %v1476
    %v1776 = vunpack.c.h.b16 %v1476
    %v1777 = vunpack.c.l.b16 %v1477
    %v1778 = vunpack.c.h.b16 %v1477
    %v1779 = vunpack.c.l.b16 %v1478
    %v1780 = vunpack.c.h.b16 %v1478
    %v1781 = vunpack.c.l.b16 %v1479
    %v1782 = vunpack.c.h.b16 %v1479
    %v1783 = vunpack.c.l.b16 %v1480
    %v1784 = vunpack.c.h.b16 %v1480
    %v1785 = vunpack.c.l.b16 %v1481
    %v1786 = vunpack.c.h.b16 %v1481
    %v1787 = vunpack.c.l.b16 %v1482
    %v1788 = vunpack.c.h.b16 %v1482
    %v1789 = vunpack.c.l.b16 %v1483
    %v1790 = vunpack.c.h.b16 %v1483
    %v1791 = vunpack.c.l.b16 %v1484
    %v1792 = vunpack.c.h.b16 %v1484
    %v1793 = vunpack.c.l.b16 %v1485
    %v1794 = vunpack.c.h.b16 %v1485
    %v1795 = vunpack.c.l.b16 %v1486
    %v1796 = vunpack.c.h.b16 %v1486
    %v1797 = vunpack.c.l.b16 %v1487
    %v1798 = vunpack.c.h.b16 %v1487
    %v1799 = vunpack.c.l.b16 %v1488
    %v1800 = vunpack.c.h.b16 %v1488
    %v1801 = vunpack.c.l.b16 %v1489
    %v1802 = vunpack.c.h.b16 %v1489
    %v1803 = vunpack.c.l.b16 %v1490
    %v1804 = vunpack.c.h.b16 %v1490
    %v1805 = vunpack.c.l.b16 %v1491
    %v1806 = vunpack.c.h.b16 %v1491
    %v1807 = vunpack.c.l.b16 %v1492
    %v1808 = vunpack.c.h.b16 %v1492
    %v1809 = vunpack.c.l.b16 %v1493
    %v1810 = vunpack.c.h.b16 %v1493
    %v1811 = vunpack.c.l.b16 %v1494
    %v1812 = vunpack.c.h.b16 %v1494
    %v1813 = vunpack.c.l.b16 %v1495
    %v1814 = vunpack.c.h.b16 %v1495
    %v1815 = vunpack.c.l.b16 %v1496
    %v1816 = vunpack.c.h.b16 %v1496
    %v1817 = vunpack.c.l.b16 %v1497
    %v1818 = vunpack.c.h.b16 %v1497
    %v1819 = vunpack.c.l.b16 %v1498
    %v1820 = vunpack.c.h.b16 %v1498
    %v1821 = vunpack.c.l.b16 %v1499
    %v1822 = vunpack.c.h.b16 %v1499
    %v1823 = vunpack.c.l.b16 %v1500
    %v1824 = vunpack.c.h.b16 %v1500
    %v1825 = vunpack.c.l.b16 %v1501
    %v1826 = vunpack.c.h.b16 %v1501
    %v1827 = vunpack.c.l.b16 %v1502
    %v1828 = vunpack.c.h.b16 %v1502
    %v1829 = vunpack.c.l.b16 %v1503
    %v1830 = vunpack.c.h.b16 %v1503
    %v1831 = vunpack.c.l.b16 %v1504
    %v1832 = vunpack.c.h.b16 %v1504
    %v1833 = vunpack.c.l.b16 %v1505
    %v1834 = vunpack.c.h.b16 %v1505
    %v1835 = vunpack.c.l.b16 %v1506
    %v1836 = vunpack.c.h.b16 %v1506
    %v1837 = vunpack.c.l.b16 %v1507
    %v1838 = vunpack.c.h.b16 %v1507
    %v1839 = vunpack.c.l.b16 %v1508
    %v1840 = vunpack.c.h.b16 %v1508
    %v1841 = vunpack.c.l.b16 %v1509
    %v1842 = vunpack.c.h.b16 %v1509
    %v1843 = vunpack.c.l.b16 %v1510
    %v1844 = vunpack.c.h.b16 %v1510
    %v1845 = vunpack.c.l.b16 %v1511
    %v1846 = vunpack.c.h.b16 %v1511
    %v1847 = vunpack.c.l.b16 %v1512
    %v1848 = vunpack.c.h.b16 %v1512
    %v1849 = vunpack.c.l.b16 %v1513
    %v1850 = vunpack.c.h.b16 %v1513
    %v1851 = vunpack.c.l.b16 %v1514
    %v1852 = vunpack.c.h.b16 %v1514
    %v1853 = vunpack.c.l.b16 %v1515
    %v1854 = vunpack.c.h.b16 %v1515
    %v1855 = vunpack.c.l.b16 %v1516
    %v1856 = vunpack.c.h.b16 %v1516
    %v1857 = vunpack.c.l.b16 %v1517
    %v1858 = vunpack.c.h.b16 %v1517
    %v1859 = vunpack.c.l.b16 %v1518
    %v1860 = vunpack.c.h.b16 %v1518
    %v1861 = vunpack.c.l.b16 %v1519
    %v1862 = vunpack.c.h.b16 %v1519
    %v1863 = vunpack.c.l.b16 %v1520
    %v1864 = vunpack.c.h.b16 %v1520
    %v1865 = vunpack.c.l.b16 %v1521
    %v1866 = vunpack.c.h.b16 %v1521
    %v1867 = vunpack.c.l.b16 %v1522
    %v1868 = vunpack.c.h.b16 %v1522
    %v1869 = vunpack.c.l.b16 %v1523
    %v1870 = vunpack.c.h.b16 %v1523
    %v1871 = vunpack.c.l.b16 %v1524
    %v1872 = vunpack.c.h.b16 %v1524
    %v1873 = vunpack.c.l.b16 %v1525
    %v1874 = vunpack.c.h.b16 %v1525
    %v1875 = vunpack.c.l.b16 %v1526
    %v1876 = vunpack.c.h.b16 %v1526
    %v1877 = vunpack.c.l.b16 %v1527
    %v1878 = vunpack.c.h.b16 %v1527
    %v1879 = vunpack.c.l.b16 %v1528
    %v1880 = vunpack.c.h.b16 %v1528
    %v1881 = vunpack.c.l.b16 %v1529
    %v1882 = vunpack.c.h.b16 %v1529
    %v1883 = vunpack.c.l.b16 %v1530
    %v1884 = vunpack.c.h.b16 %v1530
    %v1885 = vunpack.c.l.b16 %v1531
    %v1886 = vunpack.c.h.b16 %v1531
    %v1887 = vunpack.c.l.b16 %v1532
    %v1888 = vunpack.c.h.b16 %v1532
    %v1889 = vunpack.c.l.b16 %v1533
    %v1890 = vunpack.c.h.b16 %v1533
    %v1891 = vunpack.c.l.b16 %v1534
    %v1892 = vunpack.c.h.b16 %v1534
    %v1893 = vunpack.c.l.b16 %v1535
    %v1894 = vunpack.c.h.b16 %v1535
    %v1895 = vunpack.c.l.b16 %v1536
    %v1896 = vunpack.c.h.b16 %v1536
    %v1897 = vunpack.c.l.b16 %v1537
    %v1898 = vunpack.c.h.b16 %v1537
    %v1899 = vunpack.c.l.b16 %v1538
    %v1900 = vunpack.c.h.b16 %v1538
    %v1901 = vunpack.c.l.b16 %v1539
    %v1902 = vunpack.c.h.b16 %v1539
    %v1903 = vunpack.c.l.b16 %v1540
    %v1904 = vunpack.c.h.b16 %v1540
    %v1905 = vunpack.c.l.b16 %v1541
    %v1906 = vunpack.c.h.b16 %v1541
    %v1907 = vunpack.c.l.b16 %v1542
    %v1908 = vunpack.c.h.b16 %v1542
    %v1909 = vunpack.c.l.b16 %v1543
    %v1910 = vunpack.c.h.b16 %v1543
    %v1911 = vunpack.c.l.b16 %v1544
    %v1912 = vunpack.c.h.b16 %v1544
    %v1913 = vunpack.c.l.b16 %v1545
    %v1914 = vunpack.c.h.b16 %v1545
    %v1915 = vunpack.c.l.b16 %v1546
    %v1916 = vunpack.c.h.b16 %v1546
    %v1917 = vunpack.c.l.b16 %v1547
    %v1918 = vunpack.c.h.b16 %v1547
    %v1919 = vunpack.c.l.b16 %v1548
    %v1920 = vunpack.c.h.b16 %v1548
    %v1921 = vunpack.c.l.b16 %v1549
    %v1922 = vunpack.c.h.b16 %v1549
    %v1923 = vunpack.c.l.b16 %v1550
    %v1924 = vunpack.c.h.b16 %v1550
    %v1925 = vunpack.c.l.b16 %v1551
    %v1926 = vunpack.c.h.b16 %v1551
    %v1927 = vunpack.c.l.b16 %v1552
    %v1928 = vunpack.c.h.b16 %v1552
    %v1929 = vunpack.c.l.b16 %v1553
    %v1930 = vunpack.c.h.b16 %v1553
    %v1931 = vunpack.c.l.b16 %v1554
    %v1932 = vunpack.c.h.b16 %v1554
    %v1933 = vunpack.c.l.b16 %v1555
    %v1934 = vunpack.c.h.b16 %v1555
    %v1935 = vunpack.c.l.b16 %v1556
    %v1936 = vunpack.c.h.b16 %v1556
    %v1937 = vunpack.c.l.b16 %v1557
    %v1938 = vunpack.c.h.b16 %v1557
    %v1939 = vunpack.c.l.b16 %v1558
    %v1940 = vunpack.c.h.b16 %v1558
    %v1941 = vunpack.c.l.b16 %v1559
    %v1942 = vunpack.c.h.b16 %v1559
    %v1943 = vunpack.c.l.b16 %v1560
    %v1944 = vunpack.c.h.b16 %v1560
    %v1945 = vunpack.c.l.b16 %v1561
    %v1946 = vunpack.c.h.b16 %v1561
    %v1947 = vunpack.c.l.b16 %v1562
    %v1948 = vunpack.c.h.b16 %v1562
    %v1949 = vunpack.c.l.b16 %v1563
    %v1950 = vunpack.c.h.b16 %v1563
    %v1951 = vunpack.c.l.b16 %v1564
    %v1952 = vunpack.c.h.b16 %v1564
    %v1953 = vunpack.c.l.b16 %v1565
    %v1954 = vunpack.c.h.b16 %v1565
    %v1955 = vunpack.c.l.b16 %v1566
    %v1956 = vunpack.c.h.b16 %v1566
    %v1957 = vunpack.c.l.b16 %v1567
    %v1958 = vunpack.c.h.b16 %v1567
    %v1959 = vunpack.c.l.b16 %v1568
    %v1960 = vunpack.c.h.b16 %v1568
    %v1961 = vunpack.c.l.b16 %v1569
    %v1962 = vunpack.c.h.b16 %v1569
    %v1963 = vunpack.c.l.b16 %v1570
    %v1964 = vunpack.c.h.b16 %v1570
    %v1965 = vunpack.c.l.b16 %v1571
    %v1966 = vunpack.c.h.b16 %v1571
    %v1967 = vunpack.c.l.b16 %v1572
    %v1968 = vunpack.c.h.b16 %v1572
    %v1969 = vunpack.c.l.b16 %v1573
    %v1970 = vunpack.c.h.b16 %v1573
    %v1971 = vunpack.c.l.b16 %v1574
    %v1972 = vunpack.c.h.b16 %v1574
    %v1973 = vunpack.c.l.b16 %v1575
    %v1974 = vunpack.c.h.b16 %v1575
    %v1975 = vunpack.c.l.b16 %v1576
    %v1976 = vunpack.c.h.b16 %v1576
    %v1977 = vunpack.c.l.b16 %v1577
    %v1978 = vunpack.c.h.b16 %v1577
    %v1979 = vunpack.c.l.b16 %v1578
    %v1980 = vunpack.c.h.b16 %v1578
    %v1981 = vunpack.c.l.b16 %v1579
    %v1982 = vunpack.c.h.b16 %v1579
    %v1983 = vunpack.c.l.b16 %v1580
    %v1984 = vunpack.c.h.b16 %v1580
    %v1985 = vunpack.c.l.b16 %v1581
    %v1986 = vunpack.c.h.b16 %v1581
    %v1987 = vunpack.c.l.b16 %v1582
    %v1988 = vunpack.c.h.b16 %v1582
    %v1989 = vpack.c.b16 %v1737, %v1733
    %v1990 = vpack.c.b16 %v1738, %v1734
    %v1991 = vpack.c.b16 %v1739, %v1735
    %v1992 = vpack.c.b16 %v1740, %v1736
    %v1993 = vpack.c.b16 %v1745, %v1741
    %v1994 = vpack.c.b16 %v1746, %v1742
    %v1995 = vpack.c.b16 %v1747, %v1743
    %v1996 = vpack.c.b16 %v1748, %v1744
    %v1997 = vpack.c.b16 %v1753, %v1749
    %v1998 = vpack.c.b16 %v1754, %v1750
    %v1999 = vpack.c.b16 %v1755, %v1751
    %v2000 = vpack.c.b16 %v1756, %v1752
    %v2001 = vpack.c.b16 %v1761, %v1757
    %v2002 = vpack.c.b16 %v1762, %v1758
    %v2003 = vpack.c.b16 %v1763, %v1759
    %v2004 = vpack.c.b16 %v1764, %v1760
    %v2005 = vpack.c.b16 %v1769, %v1765
    %v2006 = vpack.c.b16 %v1770, %v1766
    %v2007 = vpack.c.b16 %v1771, %v1767
    %v2008 = vpack.c.b16 %v1772, %v1768
    %v2009 = vpack.c.b16 %v1777, %v1773
    %v2010 = vpack.c.b16 %v1778, %v1774
    %v2011 = vpack.c.b16 %v1779, %v1775
    %v2012 = vpack.c.b16 %v1780, %v1776
    %v2013 = vpack.c.b16 %v1785, %v1781
    %v2014 = vpack.c.b16 %v1786, %v1782
    %v2015 = vpack.c.b16 %v1787, %v1783
    %v2016 = vpack.c.b16 %v1788, %v1784
    %v2017 = vpack.c.b16 %v1793, %v1789
    %v2018 = vpack.c.b16 %v1794, %v1790
    %v2019 = vpack.c.b16 %v1795, %v1791
    %v2020 = vpack.c.b16 %v1796, %v1792
    %v2021 = vpack.c.b16 %v1801, %v1797
    %v2022 = vpack.c.b16 %v1802, %v1798
    %v2023 = vpack.c.b16 %v1803, %v1799
    %v2024 = vpack.c.b16 %v1804, %v1800
    %v2025 = vpack.c.b16 %v1809, %v1805
    %v2026 = vpack.c.b16 %v1810, %v1806
    %v2027 = vpack.c.b16 %v1811, %v1807
    %v2028 = vpack.c.b16 %v1812, %v1808
    %v2029 = vpack.c.b16 %v1817, %v1813
    %v2030 = vpack.c.b16 %v1818, %v1814
    %v2031 = vpack.c.b16 %v1819, %v1815
    %v2032 = vpack.c.b16 %v1820, %v1816
    %v2033 = vpack.c.b16 %v1825, %v1821
    %v2034 = vpack.c.b16 %v1826, %v1822
    %v2035 = vpack.c.b16 %v1827, %v1823
    %v2036 = vpack.c.b16 %v1828, %v1824
    %v2037 = vpack.c.b16 %v1833, %v1829
    %v2038 = vpack.c.b16 %v1834, %v1830
    %v2039 = vpack.c.b16 %v1835, %v1831
    %v2040 = vpack.c.b16 %v1836, %v1832
    %v2041 = vpack.c.b16 %v1841, %v1837
    %v2042 = vpack.c.b16 %v1842, %v1838
    %v2043 = vpack.c.b16 %v1843, %v1839
    %v2044 = vpack.c.b16 %v1844, %v1840
    %v2045 = vpack.c.b16 %v1849, %v1845
    %v2046 = vpack.c.b16 %v1850, %v1846
    %v2047 = vpack.c.b16 %v1851, %v1847
    %v2048 = vpack.c.b16 %v1852, %v1848
    %v2049 = vpack.c.b16 %v1857, %v1853
    %v2050 = vpack.c.b16 %v1858, %v1854
    %v2051 = vpack.c.b16 %v1859, %v1855
    %v2052 = vpack.c.b16 %v1860, %v1856
    %v2053 = vpack.c.b16 %v1865, %v1861
    %v2054 = vpack.c.b16 %v1866, %v1862
    %v2055 = vpack.c.b16 %v1867, %v1863
    %v2056 = vpack.c.b16 %v1868, %v1864
    %v2057 = vpack.c.b16 %v1873, %v1869
    %v2058 = vpack.c.b16 %v1874, %v1870
    %v2059 = vpack.c.b16 %v1875, %v1871
    %v2060 = vpack.c.b16 %v1876, %v1872
    %v2061 = vpack.c.b16 %v1881, %v1877
    %v2062 = vpack.c.b16 %v1882, %v1878
    %v2063 = vpack.c.b16 %v1883, %v1879
    %v2064 = vpack.c.b16 %v1884, %v1880
    %v2065 = vpack.c.b16 %v1889, %v1885
    %v2066 = vpack.c.b16 %v1890, %v1886
    %v2067 = vpack.c.b16 %v1891, %v1887
    %v2068 = vpack.c.b16 %v1892, %v1888
    %v2069 = vpack.c.b16 %v1897, %v1893
    %v2070 = vpack.c.b16 %v1898, %v1894
    %v2071 = vpack.c.b16 %v1899, %v1895
    %v2072 = vpack.c.b16 %v1900, %v1896
    %v2073 = vpack.c.b16 %v1905, %v1901
    %v2074 = vpack.c.b16 %v1906, %v1902
    %v2075 = vpack.c.b16 %v1907, %v1903
    %v2076 = vpack.c.b16 %v1908, %v1904
    %v2077 = vpack.c.b16 %v1913, %v1909
    %v2078 = vpack.c.b16 %v1914, %v1910
    %v2079 = vpack.c.b16 %v1915, %v1911
    %v2080 = vpack.c.b16 %v1916, %v1912
    %v2081 = vpack.c.b16 %v1921, %v1917
    %v2082 = vpack.c.b16 %v1922, %v1918
    %v2083 = vpack.c.b16 %v1923, %v1919
    %v2084 = vpack.c.b16 %v1924, %v1920
    %v2085 = vpack.c.b16 %v1929, %v1925
    %v2086 = vpack.c.b16 %v1930, %v1926
    %v2087 = vpack.c.b16 %v1931, %v1927
    %v2088 = vpack.c.b16 %v1932, %v1928
    %v2089 = vpack.c.b16 %v1937, %v1933
    %v2090 = vpack.c.b16 %v1938, %v1934
    %v2091 = vpack.c.b16 %v1939, %v1935
    %v2092 = vpack.c.b16 %v1940, %v1936
    %v2093 = vpack.c.b16 %v1945, %v1941
    %v2094 = vpack.c.b16 %v1946, %v1942
    %v2095 = vpack.c.b16 %v1947, %v1943
    %v2096 = vpack.c.b16 %v1948, %v1944
    %v2097 = vpack.c.b16 %v1953, %v1949
    %v2098 = vpack.c.b16 %v1954, %v1950
    %v2099 = vpack.c.b16 %v1955, %v1951
    %v2100 = vpack.c.b16 %v1956, %v1952
    %v2101 = vpack.c.b16 %v1961, %v1957
    %v2102 = vpack.c.b16 %v1962, %v1958
    %v2103 = vpack.c.b16 %v1963, %v1959
    %v2104 = vpack.c.b16 %v1964, %v1960
    %v2105 = vpack.c.b16 %v1969, %v1965
    %v2106 = vpack.c.b16 %v1970, %v1966
    %v2107 = vpack.c.b16 %v1971, %v1967
    %v2108 = vpack.c.b16 %v1972, %v1968
    %v2109 = vpack.c.b16 %v1977, %v1973
    %v2110 = vpack.c.b16 %v1978, %v1974
    %v2111 = vpack.c.b16 %v1979, %v1975
    %v2112 = vpack.c.b16 %v1980, %v1976
    %v2113 = vpack.c.b16 %v1985, %v1981
    %v2114 = vpack.c.b16 %v1986, %v1982
    %v2115 = vpack.c.b16 %v1987, %v1983
    %v2116 = vpack.c.b16 %v1988, %v1984
    %2245 = vmatprep.subr.bf16.mxu0 %v1990
    %2246 = vmatpush1.bf16.msra.mxu0 %v1989
    %2247 = vmatprep.subr.bf16.mxu0 %v1994
    %2248 = vmatpush1.bf16.msra.mxu0 %v1993
    %2249 = vmatprep.subr.bf16.mxu0 %v1998
    %2250 = vmatpush1.bf16.msra.mxu0 %v1997
    %2251 = vmatprep.subr.bf16.mxu0 %v2002
    %2252 = vmatpush1.bf16.msra.mxu0 %v2001
    %2253 = vmatprep.subr.bf16.mxu0 %v2006
    %2254 = vmatpush1.bf16.msra.mxu0 %v2005
    %2255 = vmatprep.subr.bf16.mxu0 %v2010
    %2256 = vmatpush1.bf16.msra.mxu0 %v2009
    %2257 = vmatprep.subr.bf16.mxu0 %v2014
    %2258 = vmatpush1.bf16.msra.mxu0 %v2013
    %2259 = vmatprep.subr.bf16.mxu0 %v2018
    %2260 = vmatpush1.bf16.msra.mxu0 %v2017
    %2261 = vmatprep.subr.bf16.mxu0 %v2022
    %2262 = vmatpush1.bf16.msra.mxu0 %v2021
    %2263 = vmatprep.subr.bf16.mxu0 %v2026
    %2264 = vmatpush1.bf16.msra.mxu0 %v2025
    %2265 = vmatprep.subr.bf16.mxu0 %v2030
    %2266 = vmatpush1.bf16.msra.mxu0 %v2029
    %2267 = vmatprep.subr.bf16.mxu0 %v2034
    %2268 = vmatpush1.bf16.msra.mxu0 %v2033
    %2269 = vmatprep.subr.bf16.mxu0 %v2038
    %2270 = vmatpush1.bf16.msra.mxu0 %v2037
    %2271 = vmatprep.subr.bf16.mxu0 %v2042
    %2272 = vmatpush1.bf16.msra.mxu0 %v2041
    %2273 = vmatprep.subr.bf16.mxu0 %v2046
    %2274 = vmatpush1.bf16.msra.mxu0 %v2045
    %2275 = vmatprep.subr.bf16.mxu0 %v2050
    %2276 = vmatpush1.bf16.msra.mxu0 %v2049
    %2277 = vmatprep.mubr.bf16.mxu0 %v1452
    %2278 = vmatmul.mubr.bf16.gmra.mrb[0].mxu0 %v1451
    %v2279 = vpop.f32.mrb[0].mxu0
    %v2280 = vadd.f32 %v1588, %v2279
    %v2281 = vpop.f32.mrb[0].mxu0
    %v2282 = vadd.f32 %v1592, %v2281
    %v2283 = vpop.f32.mrb[0].mxu0
    %v2284 = vpop.f32.mrb[0].mxu0
    %2285 = vdwg.mxu0
    %2286 = vmatprep.subr.bf16.mxu0 %v2054
    %2287 = vmatpush1.bf16.msra.mxu0 %v2053
    %2288 = vmatprep.subr.bf16.mxu0 %v2058
    %2289 = vmatpush1.bf16.msra.mxu0 %v2057
    %2290 = vmatprep.subr.bf16.mxu0 %v2062
    %2291 = vmatpush1.bf16.msra.mxu0 %v2061
    %2292 = vmatprep.subr.bf16.mxu0 %v2066
    %2293 = vmatpush1.bf16.msra.mxu0 %v2065
    %2294 = vmatprep.subr.bf16.mxu0 %v2070
    %2295 = vmatpush1.bf16.msra.mxu0 %v2069
    %2296 = vmatprep.subr.bf16.mxu0 %v2074
    %2297 = vmatpush1.bf16.msra.mxu0 %v2073
    %2298 = vmatprep.subr.bf16.mxu0 %v2078
    %2299 = vmatpush1.bf16.msra.mxu0 %v2077
    %2300 = vmatprep.subr.bf16.mxu0 %v2082
    %2301 = vmatpush1.bf16.msra.mxu0 %v2081
    %2302 = vmatprep.subr.bf16.mxu0 %v2086
    %2303 = vmatpush1.bf16.msra.mxu0 %v2085
    %2304 = vmatprep.subr.bf16.mxu0 %v2090
    %2305 = vmatpush1.bf16.msra.mxu0 %v2089
    %2306 = vmatprep.subr.bf16.mxu0 %v2094
    %2307 = vmatpush1.bf16.msra.mxu0 %v2093
    %2308 = vmatprep.subr.bf16.mxu0 %v2098
    %2309 = vmatpush1.bf16.msra.mxu0 %v2097
    %2310 = vmatprep.subr.bf16.mxu0 %v2102
    %2311 = vmatpush1.bf16.msra.mxu0 %v2101
    %2312 = vmatprep.subr.bf16.mxu0 %v2106
    %2313 = vmatpush1.bf16.msra.mxu0 %v2105
    %2314 = vmatprep.subr.bf16.mxu0 %v2110
    %2315 = vmatpush1.bf16.msra.mxu0 %v2109
    %2316 = vmatprep.subr.bf16.mxu0 %v2114
    %2317 = vmatpush1.bf16.msra.mxu0 %v2113
    %2318 = vmatprep.mubr.bf16.mxu0 %v1454
    %2319 = vmatmul.mubr.bf16.gmra.mrb[0].mxu0 %v1453
    %v2320 = vpop.f32.mrb[0].mxu0
    %v2321 = vadd.f32 %v2280, %v2320
    %v2322 = vpop.f32.mrb[0].mxu0
    %v2323 = vadd.f32 %v2282, %v2322
    %v2324 = vpop.f32.mrb[0].mxu0
    %v2325 = vpop.f32.mrb[0].mxu0
    %2326 = vdwg.mxu0
    %2327 = vmatprep.subr.bf16.mxu0 %v1992
    %2328 = vmatpush1.bf16.msra.mxu0 %v1991
    %2329 = vmatprep.subr.bf16.mxu0 %v1996
    %2330 = vmatpush1.bf16.msra.mxu0 %v1995
    %2331 = vmatprep.subr.bf16.mxu0 %v2000
    %2332 = vmatpush1.bf16.msra.mxu0 %v1999
    %2333 = vmatprep.subr.bf16.mxu0 %v2004
    %2334 = vmatpush1.bf16.msra.mxu0 %v2003
    %2335 = vmatprep.subr.bf16.mxu0 %v2008
    %2336 = vmatpush1.bf16.msra.mxu0 %v2007
    %2337 = vmatprep.subr.bf16.mxu0 %v2012
    %2338 = vmatpush1.bf16.msra.mxu0 %v2011
    %2339 = vmatprep.subr.bf16.mxu0 %v2016
    %2340 = vmatpush1.bf16.msra.mxu0 %v2015
    %2341 = vmatprep.subr.bf16.mxu0 %v2020
    %2342 = vmatpush1.bf16.msra.mxu0 %v2019
    %2343 = vmatprep.subr.bf16.mxu0 %v2024
    %2344 = vmatpush1.bf16.msra.mxu0 %v2023
    %2345 = vmatprep.subr.bf16.mxu0 %v2028
    %2346 = vmatpush1.bf16.msra.mxu0 %v2027
    %2347 = vmatprep.subr.bf16.mxu0 %v2032
    %2348 = vmatpush1.bf16.msra.mxu0 %v2031
    %2349 = vmatprep.subr.bf16.mxu0 %v2036
    %2350 = vmatpush1.bf16.msra.mxu0 %v2035
    %2351 = vmatprep.subr.bf16.mxu0 %v2040
    %2352 = vmatpush1.bf16.msra.mxu0 %v2039
    %2353 = vmatprep.subr.bf16.mxu0 %v2044
    %2354 = vmatpush1.bf16.msra.mxu0 %v2043
    %2355 = vmatprep.subr.bf16.mxu0 %v2048
    %2356 = vmatpush1.bf16.msra.mxu0 %v2047
    %2357 = vmatprep.subr.bf16.mxu0 %v2052
    %2358 = vmatpush1.bf16.msra.mxu0 %v2051
    %2359 = vmatprep.mubr.bf16.mxu0 %v1452
    %2360 = vmatmul.mubr.bf16.gmra.mrb[0].mxu0 %v1451
    %v2361 = vpop.f32.mrb[0].mxu0
    %v2362 = vadd.f32 %v1596, %v2361
    %v2363 = vpop.f32.mrb[0].mxu0
    %v2364 = vadd.f32 %v1600, %v2363
    %v2365 = vpop.f32.mrb[0].mxu0
    %v2366 = vpop.f32.mrb[0].mxu0
    %2367 = vdwg.mxu0
    %2368 = vmatprep.subr.bf16.mxu0 %v2056
    %2369 = vmatpush1.bf16.msra.mxu0 %v2055
    %2370 = vmatprep.subr.bf16.mxu0 %v2060
    %2371 = vmatpush1.bf16.msra.mxu0 %v2059
    %2372 = vmatprep.subr.bf16.mxu0 %v2064
    %2373 = vmatpush1.bf16.msra.mxu0 %v2063
    %2374 = vmatprep.subr.bf16.mxu0 %v2068
    %2375 = vmatpush1.bf16.msra.mxu0 %v2067
    %2376 = vmatprep.subr.bf16.mxu0 %v2072
    %2377 = vmatpush1.bf16.msra.mxu0 %v2071
    %2378 = vmatprep.subr.bf16.mxu0 %v2076
    %2379 = vmatpush1.bf16.msra.mxu0 %v2075
    %2380 = vmatprep.subr.bf16.mxu0 %v2080
    %2381 = vmatpush1.bf16.msra.mxu0 %v2079
    %2382 = vmatprep.subr.bf16.mxu0 %v2084
    %2383 = vmatpush1.bf16.msra.mxu0 %v2083
    %2384 = vmatprep.subr.bf16.mxu0 %v2088
    %2385 = vmatpush1.bf16.msra.mxu0 %v2087
    %2386 = vmatprep.subr.bf16.mxu0 %v2092
    %2387 = vmatpush1.bf16.msra.mxu0 %v2091
    %2388 = vmatprep.subr.bf16.mxu0 %v2096
    %2389 = vmatpush1.bf16.msra.mxu0 %v2095
    %2390 = vmatprep.subr.bf16.mxu0 %v2100
    %2391 = vmatpush1.bf16.msra.mxu0 %v2099
    %2392 = vmatprep.subr.bf16.mxu0 %v2104
    %2393 = vmatpush1.bf16.msra.mxu0 %v2103
    %2394 = vmatprep.subr.bf16.mxu0 %v2108
    %2395 = vmatpush1.bf16.msra.mxu0 %v2107
    %2396 = vmatprep.subr.bf16.mxu0 %v2112
    %2397 = vmatpush1.bf16.msra.mxu0 %v2111
    %2398 = vmatprep.subr.bf16.mxu0 %v2116
    %2399 = vmatpush1.bf16.msra.mxu0 %v2115
    %2400 = vmatprep.mubr.bf16.mxu0 %v1454
    %2401 = vmatmul.mubr.bf16.gmra.mrb[0].mxu0 %v1453
    %v2402 = vpop.f32.mrb[0].mxu0
    %v2403 = vadd.f32 %v2362, %v2402
    %v2404 = vpop.f32.mrb[0].mxu0
    %v2405 = vadd.f32 %v2364, %v2404
    %v2406 = vpop.f32.mrb[0].mxu0
    %v2407 = vpop.f32.mrb[0].mxu0
    %2408 = vdwg.mxu0
    %v2409 = vxor.u32 %v2321, 2147483648
    %v2410 = vxor.u32 %v2323, 2147483648
    %v2411 = vxor.u32 %v2403, 2147483648
    %v2412 = vxor.u32 %v2405, 2147483648
    %v2413 = vmul.f32 %v2409, 1.442695
    %v2414 = vpow.pop %v2413
    %v2415 = vmul.f32 %v2410, 1.442695
    %v2416 = vpow.pop %v2415
    %v2417 = vmul.f32 %v2411, 1.442695
    %v2418 = vpow.pop %v2417
    %v2419 = vmul.f32 %v2412, 1.442695
    %v2420 = vpow.pop %v2419
    %v2421 = vadd.f32 %v2414, 1.0
    %v2422 = vadd.f32 %v2416, 1.0
    %v2423 = vadd.f32 %v2418, 1.0
    %v2424 = vadd.f32 %v2420, 1.0
    %v2425 = vrcp.pop %v2421
    %v2426 = vmul.f32 1.0, %v2425
    %v2427 = vrcp.pop %v2422
    %v2428 = vmul.f32 1.0, %v2427
    %v2429 = vrcp.pop %v2423
    %v2430 = vmul.f32 1.0, %v2429
    %v2431 = vrcp.pop %v2424
    %v2432 = vmul.f32 1.0, %v2431
    %v2433 = vmul.f32 %v2321, %v2426
    %v2434 = vmul.f32 %v2323, %v2428
    %v2435 = vmul.f32 %v2403, %v2430
    %v2436 = vmul.f32 %v2405, %v2432
    %v2437 = vpack.c.bf16 %v2433, %v2433
    %v2438 = vpack.c.bf16 %v2434, %v2434
    %v2439 = vpack.c.bf16 %v2435, %v2435
    %v2440 = vpack.c.bf16 %v2436, %v2436
    %v2441 = vld [vmem:[#allocation17] sm:$0xff]
    %v2442 = vld [vmem:[#allocation17 + $0x8] sm:$0xff]
    %v2443 = vld [vmem:[#allocation17 + $0x10] sm:$0xff]
    %v2444 = vld [vmem:[#allocation17 + $0x18] sm:$0xf]
    %v2445 = vld [vmem:[#allocation17 + $0x1c] sm:$0xff]
    %v2446 = vld [vmem:[#allocation17 + $0x24] sm:$0xff]
    %v2447 = vld [vmem:[#allocation17 + $0x2c] sm:$0xff]
    %v2448 = vld [vmem:[#allocation17 + $0x34] sm:$0xf]
    %v2449 = vld [vmem:[#allocation17 + $0x38] sm:$0xff]
    %v2450 = vld [vmem:[#allocation17 + $0x40] sm:$0xff]
    %v2451 = vld [vmem:[#allocation17 + $0x48] sm:$0xff]
    %v2452 = vld [vmem:[#allocation17 + $0x50] sm:$0xf]
    %v2453 = vld [vmem:[#allocation17 + $0x54] sm:$0xff]
    %v2454 = vld [vmem:[#allocation17 + $0x5c] sm:$0xff]
    %v2455 = vld [vmem:[#allocation17 + $0x64] sm:$0xff]
    %v2456 = vld [vmem:[#allocation17 + $0x6c] sm:$0xf]
    %v2457 = vld [vmem:[#allocation17 + $0x70] sm:$0xff]
    %v2458 = vld [vmem:[#allocation17 + $0x78] sm:$0xff]
    %v2459 = vld [vmem:[#allocation17 + $0x80] sm:$0xff]
    %v2460 = vld [vmem:[#allocation17 + $0x88] sm:$0xf]
    %v2461 = vld [vmem:[#allocation17 + $0x8c] sm:$0xff]
    %v2462 = vld [vmem:[#allocation17 + $0x94] sm:$0xff]
    %v2463 = vld [vmem:[#allocation17 + $0x9c] sm:$0xff]
    %v2464 = vld [vmem:[#allocation17 + $0xa4] sm:$0xf]
    %v2465 = vld [vmem:[#allocation17 + $0xa8] sm:$0xff]
    %v2466 = vld [vmem:[#allocation17 + $0xb0] sm:$0xff]
    %v2467 = vld [vmem:[#allocation17 + $0xb8] sm:$0xff]
    %v2468 = vld [vmem:[#allocation17 + $0xc0] sm:$0xf]
    %v2469 = vld [vmem:[#allocation17 + $0xc4] sm:$0xff]
    %v2470 = vld [vmem:[#allocation17 + $0xcc] sm:$0xff]
    %v2471 = vld [vmem:[#allocation17 + $0xd4] sm:$0xff]
    %v2472 = vld [vmem:[#allocation17 + $0xdc] sm:$0xf]
    %v2473 = vld [vmem:[#allocation17 + $0xe0] sm:$0xff]
    %v2474 = vld [vmem:[#allocation17 + $0xe8] sm:$0xff]
    %v2475 = vld [vmem:[#allocation17 + $0xf0] sm:$0xff]
    %v2476 = vld [vmem:[#allocation17 + $0xf8] sm:$0xf]
    %v2477 = vld [vmem:[#allocation17 + $0xfc] sm:$0xff]
    %v2478 = vld [vmem:[#allocation17 + $0x104] sm:$0xff]
    %v2479 = vld [vmem:[#allocation17 + $0x10c] sm:$0xff]
    %v2480 = vld [vmem:[#allocation17 + $0x114] sm:$0xf]
    %v2481 = vld [vmem:[#allocation17 + $0x118] sm:$0xff]
    %v2482 = vld [vmem:[#allocation17 + $0x120] sm:$0xff]
    %v2483 = vld [vmem:[#allocation17 + $0x128] sm:$0xff]
    %v2484 = vld [vmem:[#allocation17 + $0x130] sm:$0xf]
    %v2485 = vld [vmem:[#allocation17 + $0x134] sm:$0xff]
    %v2486 = vld [vmem:[#allocation17 + $0x13c] sm:$0xff]
    %v2487 = vld [vmem:[#allocation17 + $0x144] sm:$0xff]
    %v2488 = vld [vmem:[#allocation17 + $0x14c] sm:$0xf]
    %v2489 = vld [vmem:[#allocation17 + $0x150] sm:$0xff]
    %v2490 = vld [vmem:[#allocation17 + $0x158] sm:$0xff]
    %v2491 = vld [vmem:[#allocation17 + $0x160] sm:$0xff]
    %v2492 = vld [vmem:[#allocation17 + $0x168] sm:$0xf]
    %v2493 = vld [vmem:[#allocation17 + $0x16c] sm:$0xff]
    %v2494 = vld [vmem:[#allocation17 + $0x174] sm:$0xff]
    %v2495 = vld [vmem:[#allocation17 + $0x17c] sm:$0xff]
    %v2496 = vld [vmem:[#allocation17 + $0x184] sm:$0xf]
    %v2497 = vld [vmem:[#allocation17 + $0x188] sm:$0xff]
    %v2498 = vld [vmem:[#allocation17 + $0x190] sm:$0xff]
    %v2499 = vld [vmem:[#allocation17 + $0x198] sm:$0xff]
    %v2500 = vld [vmem:[#allocation17 + $0x1a0] sm:$0xf]
    %v2501 = vld [vmem:[#allocation17 + $0x1a4] sm:$0xff]
    %v2502 = vld [vmem:[#allocation17 + $0x1ac] sm:$0xff]
    %v2503 = vld [vmem:[#allocation17 + $0x1b4] sm:$0xff]
    %v2504 = vld [vmem:[#allocation17 + $0x1bc] sm:$0xf]
    %v2505 = vld [vmem:[#allocation17 + $0x1c0] sm:$0xff]
    %v2506 = vld [vmem:[#allocation17 + $0x1c8] sm:$0xff]
    %v2507 = vld [vmem:[#allocation17 + $0x1d0] sm:$0xff]
    %v2508 = vld [vmem:[#allocation17 + $0x1d8] sm:$0xf]
    %v2509 = vld [vmem:[#allocation17 + $0x1dc] sm:$0xff]
    %v2510 = vld [vmem:[#allocation17 + $0x1e4] sm:$0xff]
    %v2511 = vld [vmem:[#allocation17 + $0x1ec] sm:$0xff]
    %v2512 = vld [vmem:[#allocation17 + $0x1f4] sm:$0xf]
    %v2513 = vld [vmem:[#allocation17 + $0x1f8] sm:$0xff]
    %v2514 = vld [vmem:[#allocation17 + $0x200] sm:$0xff]
    %v2515 = vld [vmem:[#allocation17 + $0x208] sm:$0xff]
    %v2516 = vld [vmem:[#allocation17 + $0x210] sm:$0xf]
    %v2517 = vld [vmem:[#allocation17 + $0x214] sm:$0xff]
    %v2518 = vld [vmem:[#allocation17 + $0x21c] sm:$0xff]
    %v2519 = vld [vmem:[#allocation17 + $0x224] sm:$0xff]
    %v2520 = vld [vmem:[#allocation17 + $0x22c] sm:$0xf]
    %v2521 = vld [vmem:[#allocation17 + $0x230] sm:$0xff]
    %v2522 = vld [vmem:[#allocation17 + $0x238] sm:$0xff]
    %v2523 = vld [vmem:[#allocation17 + $0x240] sm:$0xff]
    %v2524 = vld [vmem:[#allocation17 + $0x248] sm:$0xf]
    %v2525 = vld [vmem:[#allocation17 + $0x24c] sm:$0xff]
    %v2526 = vld [vmem:[#allocation17 + $0x254] sm:$0xff]
    %v2527 = vld [vmem:[#allocation17 + $0x25c] sm:$0xff]
    %v2528 = vld [vmem:[#allocation17 + $0x264] sm:$0xf]
    %v2529 = vld [vmem:[#allocation17 + $0x268] sm:$0xff]
    %v2530 = vld [vmem:[#allocation17 + $0x270] sm:$0xff]
    %v2531 = vld [vmem:[#allocation17 + $0x278] sm:$0xff]
    %v2532 = vld [vmem:[#allocation17 + $0x280] sm:$0xf]
    %v2533 = vld [vmem:[#allocation17 + $0x284] sm:$0xff]
    %v2534 = vld [vmem:[#allocation17 + $0x28c] sm:$0xff]
    %v2535 = vld [vmem:[#allocation17 + $0x294] sm:$0xff]
    %v2536 = vld [vmem:[#allocation17 + $0x29c] sm:$0xf]
    %v2537 = vld [vmem:[#allocation17 + $0x2a0] sm:$0xff]
    %v2538 = vld [vmem:[#allocation17 + $0x2a8] sm:$0xff]
    %v2539 = vld [vmem:[#allocation17 + $0x2b0] sm:$0xff]
    %v2540 = vld [vmem:[#allocation17 + $0x2b8] sm:$0xf]
    %v2541 = vld [vmem:[#allocation17 + $0x2bc] sm:$0xff]
    %v2542 = vld [vmem:[#allocation17 + $0x2c4] sm:$0xff]
    %v2543 = vld [vmem:[#allocation17 + $0x2cc] sm:$0xff]
    %v2544 = vld [vmem:[#allocation17 + $0x2d4] sm:$0xf]
    %v2545 = vld [vmem:[#allocation17 + $0x2d8] sm:$0xff]
    %v2546 = vld [vmem:[#allocation17 + $0x2e0] sm:$0xff]
    %v2547 = vld [vmem:[#allocation17 + $0x2e8] sm:$0xff]
    %v2548 = vld [vmem:[#allocation17 + $0x2f0] sm:$0xf]
    %v2549 = vld [vmem:[#allocation17 + $0x2f4] sm:$0xff]
    %v2550 = vld [vmem:[#allocation17 + $0x2fc] sm:$0xff]
    %v2551 = vld [vmem:[#allocation17 + $0x304] sm:$0xff]
    %v2552 = vld [vmem:[#allocation17 + $0x30c] sm:$0xf]
    %v2553 = vld [vmem:[#allocation17 + $0x310] sm:$0xff]
    %v2554 = vld [vmem:[#allocation17 + $0x318] sm:$0xff]
    %v2555 = vld [vmem:[#allocation17 + $0x320] sm:$0xff]
    %v2556 = vld [vmem:[#allocation17 + $0x328] sm:$0xf]
    %v2557 = vld [vmem:[#allocation17 + $0x32c] sm:$0xff]
    %v2558 = vld [vmem:[#allocation17 + $0x334] sm:$0xff]
    %v2559 = vld [vmem:[#allocation17 + $0x33c] sm:$0xff]
    %v2560 = vld [vmem:[#allocation17 + $0x344] sm:$0xf]
    %v2561 = vld [vmem:[#allocation17 + $0x348] sm:$0xff]
    %v2562 = vld [vmem:[#allocation17 + $0x350] sm:$0xff]
    %v2563 = vld [vmem:[#allocation17 + $0x358] sm:$0xff]
    %v2564 = vld [vmem:[#allocation17 + $0x360] sm:$0xf]
    %v2565 = vld [vmem:[#allocation17 + $0x364] sm:$0xff]
    %v2566 = vld [vmem:[#allocation17 + $0x36c] sm:$0xff]
    %v2567 = vld [vmem:[#allocation17 + $0x374] sm:$0xff]
    %v2568 = vld [vmem:[#allocation17 + $0x37c] sm:$0xf]
    %v2569 = vld [vmem:[#allocation17 + $0x380] sm:$0xff]
    %v2570 = vld [vmem:[#allocation17 + $0x388] sm:$0xff]
    %v2571 = vld [vmem:[#allocation17 + $0x390] sm:$0xff]
    %v2572 = vld [vmem:[#allocation17 + $0x398] sm:$0xf]
    %v2573 = vld [vmem:[#allocation17 + $0x39c] sm:$0xff]
    %v2574 = vld [vmem:[#allocation17 + $0x3a4] sm:$0xff]
    %v2575 = vld [vmem:[#allocation17 + $0x3ac] sm:$0xff]
    %v2576 = vld [vmem:[#allocation17 + $0x3b4] sm:$0xf]
    %v2577 = vld [vmem:[#allocation17 + $0x3b8] sm:$0xff]
    %v2578 = vld [vmem:[#allocation17 + $0x3c0] sm:$0xff]
    %v2579 = vld [vmem:[#allocation17 + $0x3c8] sm:$0xff]
    %v2580 = vld [vmem:[#allocation17 + $0x3d0] sm:$0xf]
    %v2581 = vld [vmem:[#allocation17 + $0x3d4] sm:$0xff]
    %v2582 = vld [vmem:[#allocation17 + $0x3dc] sm:$0xff]
    %v2583 = vld [vmem:[#allocation17 + $0x3e4] sm:$0xff]
    %v2584 = vld [vmem:[#allocation17 + $0x3ec] sm:$0xf]
    %v2585 = vld [vmem:[#allocation17 + $0x3f0] sm:$0xff]
    %v2586 = vld [vmem:[#allocation17 + $0x3f8] sm:$0xff]
    %v2587 = vld [vmem:[#allocation17 + $0x400] sm:$0xff]
    %v2588 = vld [vmem:[#allocation17 + $0x408] sm:$0xf]
    %v2589 = vld [vmem:[#allocation17 + $0x40c] sm:$0xff]
    %v2590 = vld [vmem:[#allocation17 + $0x414] sm:$0xff]
    %v2591 = vld [vmem:[#allocation17 + $0x41c] sm:$0xff]
    %v2592 = vld [vmem:[#allocation17 + $0x424] sm:$0xf]
    %v2593 = vld [vmem:[#allocation17 + $0x428] sm:$0xff]
    %v2594 = vld [vmem:[#allocation17 + $0x430] sm:$0xff]
    %v2595 = vld [vmem:[#allocation17 + $0x438] sm:$0xff]
    %v2596 = vld [vmem:[#allocation17 + $0x440] sm:$0xf]
    %v2597 = vld [vmem:[#allocation17 + $0x444] sm:$0xff]
    %v2598 = vld [vmem:[#allocation17 + $0x44c] sm:$0xff]
    %v2599 = vld [vmem:[#allocation17 + $0x454] sm:$0xff]
    %v2600 = vld [vmem:[#allocation17 + $0x45c] sm:$0xf]
    %v2601 = vld [vmem:[#allocation17 + $0x460] sm:$0xff]
    %v2602 = vld [vmem:[#allocation17 + $0x468] sm:$0xff]
    %v2603 = vld [vmem:[#allocation17 + $0x470] sm:$0xff]
    %v2604 = vld [vmem:[#allocation17 + $0x478] sm:$0xf]
    %v2605 = vld [vmem:[#allocation17 + $0x47c] sm:$0xff]
    %v2606 = vld [vmem:[#allocation17 + $0x484] sm:$0xff]
    %v2607 = vld [vmem:[#allocation17 + $0x48c] sm:$0xff]
    %v2608 = vld [vmem:[#allocation17 + $0x494] sm:$0xf]
    %v2609 = vld [vmem:[#allocation17 + $0x498] sm:$0xff]
    %v2610 = vld [vmem:[#allocation17 + $0x4a0] sm:$0xff]
    %v2611 = vld [vmem:[#allocation17 + $0x4a8] sm:$0xff]
    %v2612 = vld [vmem:[#allocation17 + $0x4b0] sm:$0xf]
    %v2613 = vld [vmem:[#allocation17 + $0x4b4] sm:$0xff]
    %v2614 = vld [vmem:[#allocation17 + $0x4bc] sm:$0xff]
    %v2615 = vld [vmem:[#allocation17 + $0x4c4] sm:$0xff]
    %v2616 = vld [vmem:[#allocation17 + $0x4cc] sm:$0xf]
    %v2617 = vld [vmem:[#allocation17 + $0x4d0] sm:$0xff]
    %v2618 = vld [vmem:[#allocation17 + $0x4d8] sm:$0xff]
    %v2619 = vld [vmem:[#allocation17 + $0x4e0] sm:$0xff]
    %v2620 = vld [vmem:[#allocation17 + $0x4e8] sm:$0xf]
    %v2621 = vld [vmem:[#allocation17 + $0x4ec] sm:$0xff]
    %v2622 = vld [vmem:[#allocation17 + $0x4f4] sm:$0xff]
    %v2623 = vld [vmem:[#allocation17 + $0x4fc] sm:$0xff]
    %v2624 = vld [vmem:[#allocation17 + $0x504] sm:$0xf]
    %v2625 = vld [vmem:[#allocation17 + $0x508] sm:$0xff]
    %v2626 = vld [vmem:[#allocation17 + $0x510] sm:$0xff]
    %v2627 = vld [vmem:[#allocation17 + $0x518] sm:$0xff]
    %v2628 = vld [vmem:[#allocation17 + $0x520] sm:$0xf]
    %v2629 = vld [vmem:[#allocation17 + $0x524] sm:$0xff]
    %v2630 = vld [vmem:[#allocation17 + $0x52c] sm:$0xff]
    %v2631 = vld [vmem:[#allocation17 + $0x534] sm:$0xff]
    %v2632 = vld [vmem:[#allocation17 + $0x53c] sm:$0xf]
    %v2633 = vld [vmem:[#allocation17 + $0x540] sm:$0xff]
    %v2634 = vld [vmem:[#allocation17 + $0x548] sm:$0xff]
    %v2635 = vld [vmem:[#allocation17 + $0x550] sm:$0xff]
    %v2636 = vld [vmem:[#allocation17 + $0x558] sm:$0xf]
    %v2637 = vld [vmem:[#allocation17 + $0x55c] sm:$0xff]
    %v2638 = vld [vmem:[#allocation17 + $0x564] sm:$0xff]
    %v2639 = vld [vmem:[#allocation17 + $0x56c] sm:$0xff]
    %v2640 = vld [vmem:[#allocation17 + $0x574] sm:$0xf]
    %v2641 = vld [vmem:[#allocation17 + $0x578] sm:$0xff]
    %v2642 = vld [vmem:[#allocation17 + $0x580] sm:$0xff]
    %v2643 = vld [vmem:[#allocation17 + $0x588] sm:$0xff]
    %v2644 = vld [vmem:[#allocation17 + $0x590] sm:$0xf]
    %v2645 = vld [vmem:[#allocation17 + $0x594] sm:$0xff]
    %v2646 = vld [vmem:[#allocation17 + $0x59c] sm:$0xff]
    %v2647 = vld [vmem:[#allocation17 + $0x5a4] sm:$0xff]
    %v2648 = vld [vmem:[#allocation17 + $0x5ac] sm:$0xf]
    %v2649 = vld [vmem:[#allocation17 + $0x5b0] sm:$0xff]
    %v2650 = vld [vmem:[#allocation17 + $0x5b8] sm:$0xff]
    %v2651 = vld [vmem:[#allocation17 + $0x5c0] sm:$0xff]
    %v2652 = vld [vmem:[#allocation17 + $0x5c8] sm:$0xf]
    %v2653 = vld [vmem:[#allocation17 + $0x5cc] sm:$0xff]
    %v2654 = vld [vmem:[#allocation17 + $0x5d4] sm:$0xff]
    %v2655 = vld [vmem:[#allocation17 + $0x5dc] sm:$0xff]
    %v2656 = vld [vmem:[#allocation17 + $0x5e4] sm:$0xf]
    %v2657 = vld [vmem:[#allocation17 + $0x5e8] sm:$0xff]
    %v2658 = vld [vmem:[#allocation17 + $0x5f0] sm:$0xff]
    %v2659 = vld [vmem:[#allocation17 + $0x5f8] sm:$0xff]
    %v2660 = vld [vmem:[#allocation17 + $0x600] sm:$0xf]
    %v2661 = vld [vmem:[#allocation17 + $0x604] sm:$0xff]
    %v2662 = vld [vmem:[#allocation17 + $0x60c] sm:$0xff]
    %v2663 = vld [vmem:[#allocation17 + $0x614] sm:$0xff]
    %v2664 = vld [vmem:[#allocation17 + $0x61c] sm:$0xf]
    %v2665 = vld [vmem:[#allocation17 + $0x620] sm:$0xff]
    %v2666 = vld [vmem:[#allocation17 + $0x628] sm:$0xff]
    %v2667 = vld [vmem:[#allocation17 + $0x630] sm:$0xff]
    %v2668 = vld [vmem:[#allocation17 + $0x638] sm:$0xf]
    %v2669 = vld [vmem:[#allocation17 + $0x63c] sm:$0xff]
    %v2670 = vld [vmem:[#allocation17 + $0x644] sm:$0xff]
    %v2671 = vld [vmem:[#allocation17 + $0x64c] sm:$0xff]
    %v2672 = vld [vmem:[#allocation17 + $0x654] sm:$0xf]
    %v2673 = vld [vmem:[#allocation17 + $0x658] sm:$0xff]
    %v2674 = vld [vmem:[#allocation17 + $0x660] sm:$0xff]
    %v2675 = vld [vmem:[#allocation17 + $0x668] sm:$0xff]
    %v2676 = vld [vmem:[#allocation17 + $0x670] sm:$0xf]
    %v2677 = vld [vmem:[#allocation17 + $0x674] sm:$0xff]
    %v2678 = vld [vmem:[#allocation17 + $0x67c] sm:$0xff]
    %v2679 = vld [vmem:[#allocation17 + $0x684] sm:$0xff]
    %v2680 = vld [vmem:[#allocation17 + $0x68c] sm:$0xf]
    %v2681 = vld [vmem:[#allocation17 + $0x690] sm:$0xff]
    %v2682 = vld [vmem:[#allocation17 + $0x698] sm:$0xff]
    %v2683 = vld [vmem:[#allocation17 + $0x6a0] sm:$0xff]
    %v2684 = vld [vmem:[#allocation17 + $0x6a8] sm:$0xf]
    %v2685 = vld [vmem:[#allocation17 + $0x6ac] sm:$0xff]
    %v2686 = vld [vmem:[#allocation17 + $0x6b4] sm:$0xff]
    %v2687 = vld [vmem:[#allocation17 + $0x6bc] sm:$0xff]
    %v2688 = vld [vmem:[#allocation17 + $0x6c4] sm:$0xf]
    %v2689 = vld [vmem:[#allocation17 + $0x6c8] sm:$0xff]
    %v2690 = vld [vmem:[#allocation17 + $0x6d0] sm:$0xff]
    %v2691 = vld [vmem:[#allocation17 + $0x6d8] sm:$0xff]
    %v2692 = vld [vmem:[#allocation17 + $0x6e0] sm:$0xf]
    %v2693 = vld [vmem:[#allocation17 + $0x6e4] sm:$0xff]
    %v2694 = vld [vmem:[#allocation17 + $0x6ec] sm:$0xff]
    %v2695 = vld [vmem:[#allocation17 + $0x6f4] sm:$0xff]
    %v2696 = vld [vmem:[#allocation17 + $0x6fc] sm:$0xf]
    %v2697 = vld [vmem:[#allocation19] sm:$0xff]
    %v2699 = vlaneseq
    %v2700 = vshrl.u32 %v2699, 7
    %v2701 = vsub.s32 0, %v2700
    %v2702 = vrot.slane %v2697, %v2701
    %v2703 = vlaneseq
    %v2704 = vshrl.u32 %v2703, 7
    %v2705 = vsub.s32 1, %v2704
    %v2706 = vrot.slane %v2697, %v2705
    %v2707 = vlaneseq
    %v2708 = vshrl.u32 %v2707, 7
    %v2709 = vsub.s32 2, %v2708
    %v2710 = vrot.slane %v2697, %v2709
    %v2711 = vlaneseq
    %v2712 = vshrl.u32 %v2711, 7
    %v2713 = vsub.s32 3, %v2712
    %v2714 = vrot.slane %v2697, %v2713
    %v2715 = vlaneseq
    %v2716 = vshrl.u32 %v2715, 7
    %v2717 = vsub.s32 4, %v2716
    %v2718 = vrot.slane %v2697, %v2717
    %v2719 = vlaneseq
    %v2720 = vshrl.u32 %v2719, 7
    %v2721 = vsub.s32 5, %v2720
    %v2722 = vrot.slane %v2697, %v2721
    %v2723 = vlaneseq
    %v2724 = vshrl.u32 %v2723, 7
    %v2725 = vsub.s32 6, %v2724
    %v2726 = vrot.slane %v2697, %v2725
    %v2990 = vunpack.c.l.b16 %v2441
    %v2991 = vunpack.c.h.b16 %v2441
    %v2992 = vunpack.c.l.b16 %v2442
    %v2993 = vunpack.c.h.b16 %v2442
    %v2994 = vunpack.c.l.b16 %v2443
    %v2995 = vunpack.c.h.b16 %v2443
    %v2996 = vunpack.c.l.b16 %v2444
    %v2997 = vunpack.c.l.b16 %v2445
    %v2998 = vunpack.c.h.b16 %v2445
    %v2999 = vunpack.c.l.b16 %v2446
    %v3000 = vunpack.c.h.b16 %v2446
    %v3001 = vunpack.c.l.b16 %v2447
    %v3002 = vunpack.c.h.b16 %v2447
    %v3003 = vunpack.c.l.b16 %v2448
    %v3004 = vunpack.c.l.b16 %v2449
    %v3005 = vunpack.c.h.b16 %v2449
    %v3006 = vunpack.c.l.b16 %v2450
    %v3007 = vunpack.c.h.b16 %v2450
    %v3008 = vunpack.c.l.b16 %v2451
    %v3009 = vunpack.c.h.b16 %v2451
    %v3010 = vunpack.c.l.b16 %v2452
    %v3011 = vunpack.c.l.b16 %v2453
    %v3012 = vunpack.c.h.b16 %v2453
    %v3013 = vunpack.c.l.b16 %v2454
    %v3014 = vunpack.c.h.b16 %v2454
    %v3015 = vunpack.c.l.b16 %v2455
    %v3016 = vunpack.c.h.b16 %v2455
    %v3017 = vunpack.c.l.b16 %v2456
    %v3018 = vunpack.c.l.b16 %v2457
    %v3019 = vunpack.c.h.b16 %v2457
    %v3020 = vunpack.c.l.b16 %v2458
    %v3021 = vunpack.c.h.b16 %v2458
    %v3022 = vunpack.c.l.b16 %v2459
    %v3023 = vunpack.c.h.b16 %v2459
    %v3024 = vunpack.c.l.b16 %v2460
    %v3025 = vunpack.c.l.b16 %v2461
    %v3026 = vunpack.c.h.b16 %v2461
    %v3027 = vunpack.c.l.b16 %v2462
    %v3028 = vunpack.c.h.b16 %v2462
    %v3029 = vunpack.c.l.b16 %v2463
    %v3030 = vunpack.c.h.b16 %v2463
    %v3031 = vunpack.c.l.b16 %v2464
    %v3032 = vunpack.c.l.b16 %v2465
    %v3033 = vunpack.c.h.b16 %v2465
    %v3034 = vunpack.c.l.b16 %v2466
    %v3035 = vunpack.c.h.b16 %v2466
    %v3036 = vunpack.c.l.b16 %v2467
    %v3037 = vunpack.c.h.b16 %v2467
    %v3038 = vunpack.c.l.b16 %v2468
    %v3039 = vunpack.c.l.b16 %v2469
    %v3040 = vunpack.c.h.b16 %v2469
    %v3041 = vunpack.c.l.b16 %v2470
    %v3042 = vunpack.c.h.b16 %v2470
    %v3043 = vunpack.c.l.b16 %v2471
    %v3044 = vunpack.c.h.b16 %v2471
    %v3045 = vunpack.c.l.b16 %v2472
    %v3046 = vunpack.c.l.b16 %v2473
    %v3047 = vunpack.c.h.b16 %v2473
    %v3048 = vunpack.c.l.b16 %v2474
    %v3049 = vunpack.c.h.b16 %v2474
    %v3050 = vunpack.c.l.b16 %v2475
    %v3051 = vunpack.c.h.b16 %v2475
    %v3052 = vunpack.c.l.b16 %v2476
    %v3053 = vunpack.c.l.b16 %v2477
    %v3054 = vunpack.c.h.b16 %v2477
    %v3055 = vunpack.c.l.b16 %v2478
    %v3056 = vunpack.c.h.b16 %v2478
    %v3057 = vunpack.c.l.b16 %v2479
    %v3058 = vunpack.c.h.b16 %v2479
    %v3059 = vunpack.c.l.b16 %v2480
    %v3060 = vunpack.c.l.b16 %v2481
    %v3061 = vunpack.c.h.b16 %v2481
    %v3062 = vunpack.c.l.b16 %v2482
    %v3063 = vunpack.c.h.b16 %v2482
    %v3064 = vunpack.c.l.b16 %v2483
    %v3065 = vunpack.c.h.b16 %v2483
    %v3066 = vunpack.c.l.b16 %v2484
    %v3067 = vunpack.c.l.b16 %v2485
    %v3068 = vunpack.c.h.b16 %v2485
    %v3069 = vunpack.c.l.b16 %v2486
    %v3070 = vunpack.c.h.b16 %v2486
    %v3071 = vunpack.c.l.b16 %v2487
    %v3072 = vunpack.c.h.b16 %v2487
    %v3073 = vunpack.c.l.b16 %v2488
    %v3074 = vunpack.c.l.b16 %v2489
    %v3075 = vunpack.c.h.b16 %v2489
    %v3076 = vunpack.c.l.b16 %v2490
    %v3077 = vunpack.c.h.b16 %v2490
    %v3078 = vunpack.c.l.b16 %v2491
    %v3079 = vunpack.c.h.b16 %v2491
    %v3080 = vunpack.c.l.b16 %v2492
    %v3081 = vunpack.c.l.b16 %v2493
    %v3082 = vunpack.c.h.b16 %v2493
    %v3083 = vunpack.c.l.b16 %v2494
    %v3084 = vunpack.c.h.b16 %v2494
    %v3085 = vunpack.c.l.b16 %v2495
    %v3086 = vunpack.c.h.b16 %v2495
    %v3087 = vunpack.c.l.b16 %v2496
    %v3088 = vunpack.c.l.b16 %v2497
    %v3089 = vunpack.c.h.b16 %v2497
    %v3090 = vunpack.c.l.b16 %v2498
    %v3091 = vunpack.c.h.b16 %v2498
    %v3092 = vunpack.c.l.b16 %v2499
    %v3093 = vunpack.c.h.b16 %v2499
    %v3094 = vunpack.c.l.b16 %v2500
    %v3095 = vunpack.c.l.b16 %v2501
    %v3096 = vunpack.c.h.b16 %v2501
    %v3097 = vunpack.c.l.b16 %v2502
    %v3098 = vunpack.c.h.b16 %v2502
    %v3099 = vunpack.c.l.b16 %v2503
    %v3100 = vunpack.c.h.b16 %v2503
    %v3101 = vunpack.c.l.b16 %v2504
    %v3102 = vunpack.c.l.b16 %v2505
    %v3103 = vunpack.c.h.b16 %v2505
    %v3104 = vunpack.c.l.b16 %v2506
    %v3105 = vunpack.c.h.b16 %v2506
    %v3106 = vunpack.c.l.b16 %v2507
    %v3107 = vunpack.c.h.b16 %v2507
    %v3108 = vunpack.c.l.b16 %v2508
    %v3109 = vunpack.c.l.b16 %v2509
    %v3110 = vunpack.c.h.b16 %v2509
    %v3111 = vunpack.c.l.b16 %v2510
    %v3112 = vunpack.c.h.b16 %v2510
    %v3113 = vunpack.c.l.b16 %v2511
    %v3114 = vunpack.c.h.b16 %v2511
    %v3115 = vunpack.c.l.b16 %v2512
    %v3116 = vunpack.c.l.b16 %v2513
    %v3117 = vunpack.c.h.b16 %v2513
    %v3118 = vunpack.c.l.b16 %v2514
    %v3119 = vunpack.c.h.b16 %v2514
    %v3120 = vunpack.c.l.b16 %v2515
    %v3121 = vunpack.c.h.b16 %v2515
    %v3122 = vunpack.c.l.b16 %v2516
    %v3123 = vunpack.c.l.b16 %v2517
    %v3124 = vunpack.c.h.b16 %v2517
    %v3125 = vunpack.c.l.b16 %v2518
    %v3126 = vunpack.c.h.b16 %v2518
    %v3127 = vunpack.c.l.b16 %v2519
    %v3128 = vunpack.c.h.b16 %v2519
    %v3129 = vunpack.c.l.b16 %v2520
    %v3130 = vunpack.c.l.b16 %v2521
    %v3131 = vunpack.c.h.b16 %v2521
    %v3132 = vunpack.c.l.b16 %v2522
    %v3133 = vunpack.c.h.b16 %v2522
    %v3134 = vunpack.c.l.b16 %v2523
    %v3135 = vunpack.c.h.b16 %v2523
    %v3136 = vunpack.c.l.b16 %v2524
    %v3137 = vunpack.c.l.b16 %v2525
    %v3138 = vunpack.c.h.b16 %v2525
    %v3139 = vunpack.c.l.b16 %v2526
    %v3140 = vunpack.c.h.b16 %v2526
    %v3141 = vunpack.c.l.b16 %v2527
    %v3142 = vunpack.c.h.b16 %v2527
    %v3143 = vunpack.c.l.b16 %v2528
    %v3144 = vunpack.c.l.b16 %v2529
    %v3145 = vunpack.c.h.b16 %v2529
    %v3146 = vunpack.c.l.b16 %v2530
    %v3147 = vunpack.c.h.b16 %v2530
    %v3148 = vunpack.c.l.b16 %v2531
    %v3149 = vunpack.c.h.b16 %v2531
    %v3150 = vunpack.c.l.b16 %v2532
    %v3151 = vunpack.c.l.b16 %v2533
    %v3152 = vunpack.c.h.b16 %v2533
    %v3153 = vunpack.c.l.b16 %v2534
    %v3154 = vunpack.c.h.b16 %v2534
    %v3155 = vunpack.c.l.b16 %v2535
    %v3156 = vunpack.c.h.b16 %v2535
    %v3157 = vunpack.c.l.b16 %v2536
    %v3158 = vunpack.c.l.b16 %v2537
    %v3159 = vunpack.c.h.b16 %v2537
    %v3160 = vunpack.c.l.b16 %v2538
    %v3161 = vunpack.c.h.b16 %v2538
    %v3162 = vunpack.c.l.b16 %v2539
    %v3163 = vunpack.c.h.b16 %v2539
    %v3164 = vunpack.c.l.b16 %v2540
    %v3165 = vunpack.c.l.b16 %v2541
    %v3166 = vunpack.c.h.b16 %v2541
    %v3167 = vunpack.c.l.b16 %v2542
    %v3168 = vunpack.c.h.b16 %v2542
    %v3169 = vunpack.c.l.b16 %v2543
    %v3170 = vunpack.c.h.b16 %v2543
    %v3171 = vunpack.c.l.b16 %v2544
    %v3172 = vunpack.c.l.b16 %v2545
    %v3173 = vunpack.c.h.b16 %v2545
    %v3174 = vunpack.c.l.b16 %v2546
    %v3175 = vunpack.c.h.b16 %v2546
    %v3176 = vunpack.c.l.b16 %v2547
    %v3177 = vunpack.c.h.b16 %v2547
    %v3178 = vunpack.c.l.b16 %v2548
    %v3179 = vunpack.c.l.b16 %v2549
    %v3180 = vunpack.c.h.b16 %v2549
    %v3181 = vunpack.c.l.b16 %v2550
    %v3182 = vunpack.c.h.b16 %v2550
    %v3183 = vunpack.c.l.b16 %v2551
    %v3184 = vunpack.c.h.b16 %v2551
    %v3185 = vunpack.c.l.b16 %v2552
    %v3186 = vunpack.c.l.b16 %v2553
    %v3187 = vunpack.c.h.b16 %v2553
    %v3188 = vunpack.c.l.b16 %v2554
    %v3189 = vunpack.c.h.b16 %v2554
    %v3190 = vunpack.c.l.b16 %v2555
    %v3191 = vunpack.c.h.b16 %v2555
    %v3192 = vunpack.c.l.b16 %v2556
    %v3193 = vunpack.c.l.b16 %v2557
    %v3194 = vunpack.c.h.b16 %v2557
    %v3195 = vunpack.c.l.b16 %v2558
    %v3196 = vunpack.c.h.b16 %v2558
    %v3197 = vunpack.c.l.b16 %v2559
    %v3198 = vunpack.c.h.b16 %v2559
    %v3199 = vunpack.c.l.b16 %v2560
    %v3200 = vunpack.c.l.b16 %v2561
    %v3201 = vunpack.c.h.b16 %v2561
    %v3202 = vunpack.c.l.b16 %v2562
    %v3203 = vunpack.c.h.b16 %v2562
    %v3204 = vunpack.c.l.b16 %v2563
    %v3205 = vunpack.c.h.b16 %v2563
    %v3206 = vunpack.c.l.b16 %v2564
    %v3207 = vunpack.c.l.b16 %v2565
    %v3208 = vunpack.c.h.b16 %v2565
    %v3209 = vunpack.c.l.b16 %v2566
    %v3210 = vunpack.c.h.b16 %v2566
    %v3211 = vunpack.c.l.b16 %v2567
    %v3212 = vunpack.c.h.b16 %v2567
    %v3213 = vunpack.c.l.b16 %v2568
    %v3214 = vunpack.c.l.b16 %v2569
    %v3215 = vunpack.c.h.b16 %v2569
    %v3216 = vunpack.c.l.b16 %v2570
    %v3217 = vunpack.c.h.b16 %v2570
    %v3218 = vunpack.c.l.b16 %v2571
    %v3219 = vunpack.c.h.b16 %v2571
    %v3220 = vunpack.c.l.b16 %v2572
    %v3221 = vunpack.c.l.b16 %v2573
    %v3222 = vunpack.c.h.b16 %v2573
    %v3223 = vunpack.c.l.b16 %v2574
    %v3224 = vunpack.c.h.b16 %v2574
    %v3225 = vunpack.c.l.b16 %v2575
    %v3226 = vunpack.c.h.b16 %v2575
    %v3227 = vunpack.c.l.b16 %v2576
    %v3228 = vunpack.c.l.b16 %v2577
    %v3229 = vunpack.c.h.b16 %v2577
    %v3230 = vunpack.c.l.b16 %v2578
    %v3231 = vunpack.c.h.b16 %v2578
    %v3232 = vunpack.c.l.b16 %v2579
    %v3233 = vunpack.c.h.b16 %v2579
    %v3234 = vunpack.c.l.b16 %v2580
    %v3235 = vunpack.c.l.b16 %v2581
    %v3236 = vunpack.c.h.b16 %v2581
    %v3237 = vunpack.c.l.b16 %v2582
    %v3238 = vunpack.c.h.b16 %v2582
    %v3239 = vunpack.c.l.b16 %v2583
    %v3240 = vunpack.c.h.b16 %v2583
    %v3241 = vunpack.c.l.b16 %v2584
    %v3242 = vunpack.c.l.b16 %v2585
    %v3243 = vunpack.c.h.b16 %v2585
    %v3244 = vunpack.c.l.b16 %v2586
    %v3245 = vunpack.c.h.b16 %v2586
    %v3246 = vunpack.c.l.b16 %v2587
    %v3247 = vunpack.c.h.b16 %v2587
    %v3248 = vunpack.c.l.b16 %v2588
    %v3249 = vunpack.c.l.b16 %v2589
    %v3250 = vunpack.c.h.b16 %v2589
    %v3251 = vunpack.c.l.b16 %v2590
    %v3252 = vunpack.c.h.b16 %v2590
    %v3253 = vunpack.c.l.b16 %v2591
    %v3254 = vunpack.c.h.b16 %v2591
    %v3255 = vunpack.c.l.b16 %v2592
    %v3256 = vunpack.c.l.b16 %v2593
    %v3257 = vunpack.c.h.b16 %v2593
    %v3258 = vunpack.c.l.b16 %v2594
    %v3259 = vunpack.c.h.b16 %v2594
    %v3260 = vunpack.c.l.b16 %v2595
    %v3261 = vunpack.c.h.b16 %v2595
    %v3262 = vunpack.c.l.b16 %v2596
    %v3263 = vunpack.c.l.b16 %v2597
    %v3264 = vunpack.c.h.b16 %v2597
    %v3265 = vunpack.c.l.b16 %v2598
    %v3266 = vunpack.c.h.b16 %v2598
    %v3267 = vunpack.c.l.b16 %v2599
    %v3268 = vunpack.c.h.b16 %v2599
    %v3269 = vunpack.c.l.b16 %v2600
    %v3270 = vunpack.c.l.b16 %v2601
    %v3271 = vunpack.c.h.b16 %v2601
    %v3272 = vunpack.c.l.b16 %v2602
    %v3273 = vunpack.c.h.b16 %v2602
    %v3274 = vunpack.c.l.b16 %v2603
    %v3275 = vunpack.c.h.b16 %v2603
    %v3276 = vunpack.c.l.b16 %v2604
    %v3277 = vunpack.c.l.b16 %v2605
    %v3278 = vunpack.c.h.b16 %v2605
    %v3279 = vunpack.c.l.b16 %v2606
    %v3280 = vunpack.c.h.b16 %v2606
    %v3281 = vunpack.c.l.b16 %v2607
    %v3282 = vunpack.c.h.b16 %v2607
    %v3283 = vunpack.c.l.b16 %v2608
    %v3284 = vunpack.c.l.b16 %v2609
    %v3285 = vunpack.c.h.b16 %v2609
    %v3286 = vunpack.c.l.b16 %v2610
    %v3287 = vunpack.c.h.b16 %v2610
    %v3288 = vunpack.c.l.b16 %v2611
    %v3289 = vunpack.c.h.b16 %v2611
    %v3290 = vunpack.c.l.b16 %v2612
    %v3291 = vunpack.c.l.b16 %v2613
    %v3292 = vunpack.c.h.b16 %v2613
    %v3293 = vunpack.c.l.b16 %v2614
    %v3294 = vunpack.c.h.b16 %v2614
    %v3295 = vunpack.c.l.b16 %v2615
    %v3296 = vunpack.c.h.b16 %v2615
    %v3297 = vunpack.c.l.b16 %v2616
    %v3298 = vunpack.c.l.b16 %v2617
    %v3299 = vunpack.c.h.b16 %v2617
    %v3300 = vunpack.c.l.b16 %v2618
    %v3301 = vunpack.c.h.b16 %v2618
    %v3302 = vunpack.c.l.b16 %v2619
    %v3303 = vunpack.c.h.b16 %v2619
    %v3304 = vunpack.c.l.b16 %v2620
    %v3305 = vunpack.c.l.b16 %v2621
    %v3306 = vunpack.c.h.b16 %v2621
    %v3307 = vunpack.c.l.b16 %v2622
    %v3308 = vunpack.c.h.b16 %v2622
    %v3309 = vunpack.c.l.b16 %v2623
    %v3310 = vunpack.c.h.b16 %v2623
    %v3311 = vunpack.c.l.b16 %v2624
    %v3312 = vunpack.c.l.b16 %v2625
    %v3313 = vunpack.c.h.b16 %v2625
    %v3314 = vunpack.c.l.b16 %v2626
    %v3315 = vunpack.c.h.b16 %v2626
    %v3316 = vunpack.c.l.b16 %v2627
    %v3317 = vunpack.c.h.b16 %v2627
    %v3318 = vunpack.c.l.b16 %v2628
    %v3319 = vunpack.c.l.b16 %v2629
    %v3320 = vunpack.c.h.b16 %v2629
    %v3321 = vunpack.c.l.b16 %v2630
    %v3322 = vunpack.c.h.b16 %v2630
    %v3323 = vunpack.c.l.b16 %v2631
    %v3324 = vunpack.c.h.b16 %v2631
    %v3325 = vunpack.c.l.b16 %v2632
    %v3326 = vunpack.c.l.b16 %v2633
    %v3327 = vunpack.c.h.b16 %v2633
    %v3328 = vunpack.c.l.b16 %v2634
    %v3329 = vunpack.c.h.b16 %v2634
    %v3330 = vunpack.c.l.b16 %v2635
    %v3331 = vunpack.c.h.b16 %v2635
    %v3332 = vunpack.c.l.b16 %v2636
    %v3333 = vunpack.c.l.b16 %v2637
    %v3334 = vunpack.c.h.b16 %v2637
    %v3335 = vunpack.c.l.b16 %v2638
    %v3336 = vunpack.c.h.b16 %v2638
    %v3337 = vunpack.c.l.b16 %v2639
    %v3338 = vunpack.c.h.b16 %v2639
    %v3339 = vunpack.c.l.b16 %v2640
    %v3340 = vunpack.c.l.b16 %v2641
    %v3341 = vunpack.c.h.b16 %v2641
    %v3342 = vunpack.c.l.b16 %v2642
    %v3343 = vunpack.c.h.b16 %v2642
    %v3344 = vunpack.c.l.b16 %v2643
    %v3345 = vunpack.c.h.b16 %v2643
    %v3346 = vunpack.c.l.b16 %v2644
    %v3347 = vunpack.c.l.b16 %v2645
    %v3348 = vunpack.c.h.b16 %v2645
    %v3349 = vunpack.c.l.b16 %v2646
    %v3350 = vunpack.c.h.b16 %v2646
    %v3351 = vunpack.c.l.b16 %v2647
    %v3352 = vunpack.c.h.b16 %v2647
    %v3353 = vunpack.c.l.b16 %v2648
    %v3354 = vunpack.c.l.b16 %v2649
    %v3355 = vunpack.c.h.b16 %v2649
    %v3356 = vunpack.c.l.b16 %v2650
    %v3357 = vunpack.c.h.b16 %v2650
    %v3358 = vunpack.c.l.b16 %v2651
    %v3359 = vunpack.c.h.b16 %v2651
    %v3360 = vunpack.c.l.b16 %v2652
    %v3361 = vunpack.c.l.b16 %v2653
    %v3362 = vunpack.c.h.b16 %v2653
    %v3363 = vunpack.c.l.b16 %v2654
    %v3364 = vunpack.c.h.b16 %v2654
    %v3365 = vunpack.c.l.b16 %v2655
    %v3366 = vunpack.c.h.b16 %v2655
    %v3367 = vunpack.c.l.b16 %v2656
    %v3368 = vunpack.c.l.b16 %v2657
    %v3369 = vunpack.c.h.b16 %v2657
    %v3370 = vunpack.c.l.b16 %v2658
    %v3371 = vunpack.c.h.b16 %v2658
    %v3372 = vunpack.c.l.b16 %v2659
    %v3373 = vunpack.c.h.b16 %v2659
    %v3374 = vunpack.c.l.b16 %v2660
    %v3375 = vunpack.c.l.b16 %v2661
    %v3376 = vunpack.c.h.b16 %v2661
    %v3377 = vunpack.c.l.b16 %v2662
    %v3378 = vunpack.c.h.b16 %v2662
    %v3379 = vunpack.c.l.b16 %v2663
    %v3380 = vunpack.c.h.b16 %v2663
    %v3381 = vunpack.c.l.b16 %v2664
    %v3382 = vunpack.c.l.b16 %v2665
    %v3383 = vunpack.c.h.b16 %v2665
    %v3384 = vunpack.c.l.b16 %v2666
    %v3385 = vunpack.c.h.b16 %v2666
    %v3386 = vunpack.c.l.b16 %v2667
    %v3387 = vunpack.c.h.b16 %v2667
    %v3388 = vunpack.c.l.b16 %v2668
    %v3389 = vunpack.c.l.b16 %v2669
    %v3390 = vunpack.c.h.b16 %v2669
    %v3391 = vunpack.c.l.b16 %v2670
    %v3392 = vunpack.c.h.b16 %v2670
    %v3393 = vunpack.c.l.b16 %v2671
    %v3394 = vunpack.c.h.b16 %v2671
    %v3395 = vunpack.c.l.b16 %v2672
    %v3396 = vunpack.c.l.b16 %v2673
    %v3397 = vunpack.c.h.b16 %v2673
    %v3398 = vunpack.c.l.b16 %v2674
    %v3399 = vunpack.c.h.b16 %v2674
    %v3400 = vunpack.c.l.b16 %v2675
    %v3401 = vunpack.c.h.b16 %v2675
    %v3402 = vunpack.c.l.b16 %v2676
    %v3403 = vunpack.c.l.b16 %v2677
    %v3404 = vunpack.c.h.b16 %v2677
    %v3405 = vunpack.c.l.b16 %v2678
    %v3406 = vunpack.c.h.b16 %v2678
    %v3407 = vunpack.c.l.b16 %v2679
    %v3408 = vunpack.c.h.b16 %v2679
    %v3409 = vunpack.c.l.b16 %v2680
    %v3410 = vunpack.c.l.b16 %v2681
    %v3411 = vunpack.c.h.b16 %v2681
    %v3412 = vunpack.c.l.b16 %v2682
    %v3413 = vunpack.c.h.b16 %v2682
    %v3414 = vunpack.c.l.b16 %v2683
    %v3415 = vunpack.c.h.b16 %v2683
    %v3416 = vunpack.c.l.b16 %v2684
    %v3417 = vunpack.c.l.b16 %v2685
    %v3418 = vunpack.c.h.b16 %v2685
    %v3419 = vunpack.c.l.b16 %v2686
    %v3420 = vunpack.c.h.b16 %v2686
    %v3421 = vunpack.c.l.b16 %v2687
    %v3422 = vunpack.c.h.b16 %v2687
    %v3423 = vunpack.c.l.b16 %v2688
    %v3424 = vunpack.c.l.b16 %v2689
    %v3425 = vunpack.c.h.b16 %v2689
    %v3426 = vunpack.c.l.b16 %v2690
    %v3427 = vunpack.c.h.b16 %v2690
    %v3428 = vunpack.c.l.b16 %v2691
    %v3429 = vunpack.c.h.b16 %v2691
    %v3430 = vunpack.c.l.b16 %v2692
    %v3431 = vunpack.c.l.b16 %v2693
    %v3432 = vunpack.c.h.b16 %v2693
    %v3433 = vunpack.c.l.b16 %v2694
    %v3434 = vunpack.c.h.b16 %v2694
    %v3435 = vunpack.c.l.b16 %v2695
    %v3436 = vunpack.c.h.b16 %v2695
    %v3437 = vunpack.c.l.b16 %v2696
    %v3438 = vpack.c.b16 %v2997, %v2990
    %v3439 = vpack.c.b16 %v2998, %v2991
    %v3440 = vpack.c.b16 %v2999, %v2992
    %v3441 = vpack.c.b16 %v3000, %v2993
    %v3442 = vpack.c.b16 %v3001, %v2994
    %v3443 = vpack.c.b16 %v3002, %v2995
    %v3444 = vpack.c.b16 %v3003, %v2996
    %v3445 = vpack.c.b16 %v3011, %v3004
    %v3446 = vpack.c.b16 %v3012, %v3005
    %v3447 = vpack.c.b16 %v3013, %v3006
    %v3448 = vpack.c.b16 %v3014, %v3007
    %v3449 = vpack.c.b16 %v3015, %v3008
    %v3450 = vpack.c.b16 %v3016, %v3009
    %v3451 = vpack.c.b16 %v3017, %v3010
    %v3452 = vpack.c.b16 %v3025, %v3018
    %v3453 = vpack.c.b16 %v3026, %v3019
    %v3454 = vpack.c.b16 %v3027, %v3020
    %v3455 = vpack.c.b16 %v3028, %v3021
    %v3456 = vpack.c.b16 %v3029, %v3022
    %v3457 = vpack.c.b16 %v3030, %v3023
    %v3458 = vpack.c.b16 %v3031, %v3024
    %v3459 = vpack.c.b16 %v3039, %v3032
    %v3460 = vpack.c.b16 %v3040, %v3033
    %v3461 = vpack.c.b16 %v3041, %v3034
    %v3462 = vpack.c.b16 %v3042, %v3035
    %v3463 = vpack.c.b16 %v3043, %v3036
    %v3464 = vpack.c.b16 %v3044, %v3037
    %v3465 = vpack.c.b16 %v3045, %v3038
    %v3466 = vpack.c.b16 %v3053, %v3046
    %v3467 = vpack.c.b16 %v3054, %v3047
    %v3468 = vpack.c.b16 %v3055, %v3048
    %v3469 = vpack.c.b16 %v3056, %v3049
    %v3470 = vpack.c.b16 %v3057, %v3050
    %v3471 = vpack.c.b16 %v3058, %v3051
    %v3472 = vpack.c.b16 %v3059, %v3052
    %v3473 = vpack.c.b16 %v3067, %v3060
    %v3474 = vpack.c.b16 %v3068, %v3061
    %v3475 = vpack.c.b16 %v3069, %v3062
    %v3476 = vpack.c.b16 %v3070, %v3063
    %v3477 = vpack.c.b16 %v3071, %v3064
    %v3478 = vpack.c.b16 %v3072, %v3065
    %v3479 = vpack.c.b16 %v3073, %v3066
    %v3480 = vpack.c.b16 %v3081, %v3074
    %v3481 = vpack.c.b16 %v3082, %v3075
    %v3482 = vpack.c.b16 %v3083, %v3076
    %v3483 = vpack.c.b16 %v3084, %v3077
    %v3484 = vpack.c.b16 %v3085, %v3078
    %v3485 = vpack.c.b16 %v3086, %v3079
    %v3486 = vpack.c.b16 %v3087, %v3080
    %v3487 = vpack.c.b16 %v3095, %v3088
    %v3488 = vpack.c.b16 %v3096, %v3089
    %v3489 = vpack.c.b16 %v3097, %v3090
    %v3490 = vpack.c.b16 %v3098, %v3091
    %v3491 = vpack.c.b16 %v3099, %v3092
    %v3492 = vpack.c.b16 %v3100, %v3093
    %v3493 = vpack.c.b16 %v3101, %v3094
    %v3494 = vpack.c.b16 %v3109, %v3102
    %v3495 = vpack.c.b16 %v3110, %v3103
    %v3496 = vpack.c.b16 %v3111, %v3104
    %v3497 = vpack.c.b16 %v3112, %v3105
    %v3498 = vpack.c.b16 %v3113, %v3106
    %v3499 = vpack.c.b16 %v3114, %v3107
    %v3500 = vpack.c.b16 %v3115, %v3108
    %v3501 = vpack.c.b16 %v3123, %v3116
    %v3502 = vpack.c.b16 %v3124, %v3117
    %v3503 = vpack.c.b16 %v3125, %v3118
    %v3504 = vpack.c.b16 %v3126, %v3119
    %v3505 = vpack.c.b16 %v3127, %v3120
    %v3506 = vpack.c.b16 %v3128, %v3121
    %v3507 = vpack.c.b16 %v3129, %v3122
    %v3508 = vpack.c.b16 %v3137, %v3130
    %v3509 = vpack.c.b16 %v3138, %v3131
    %v3510 = vpack.c.b16 %v3139, %v3132
    %v3511 = vpack.c.b16 %v3140, %v3133
    %v3512 = vpack.c.b16 %v3141, %v3134
    %v3513 = vpack.c.b16 %v3142, %v3135
    %v3514 = vpack.c.b16 %v3143, %v3136
    %v3515 = vpack.c.b16 %v3151, %v3144
    %v3516 = vpack.c.b16 %v3152, %v3145
    %v3517 = vpack.c.b16 %v3153, %v3146
    %v3518 = vpack.c.b16 %v3154, %v3147
    %v3519 = vpack.c.b16 %v3155, %v3148
    %v3520 = vpack.c.b16 %v3156, %v3149
    %v3521 = vpack.c.b16 %v3157, %v3150
    %v3522 = vpack.c.b16 %v3165, %v3158
    %v3523 = vpack.c.b16 %v3166, %v3159
    %v3524 = vpack.c.b16 %v3167, %v3160
    %v3525 = vpack.c.b16 %v3168, %v3161
    %v3526 = vpack.c.b16 %v3169, %v3162
    %v3527 = vpack.c.b16 %v3170, %v3163
    %v3528 = vpack.c.b16 %v3171, %v3164
    %v3529 = vpack.c.b16 %v3179, %v3172
    %v3530 = vpack.c.b16 %v3180, %v3173
    %v3531 = vpack.c.b16 %v3181, %v3174
    %v3532 = vpack.c.b16 %v3182, %v3175
    %v3533 = vpack.c.b16 %v3183, %v3176
    %v3534 = vpack.c.b16 %v3184, %v3177
    %v3535 = vpack.c.b16 %v3185, %v3178
    %v3536 = vpack.c.b16 %v3193, %v3186
    %v3537 = vpack.c.b16 %v3194, %v3187
    %v3538 = vpack.c.b16 %v3195, %v3188
    %v3539 = vpack.c.b16 %v3196, %v3189
    %v3540 = vpack.c.b16 %v3197, %v3190
    %v3541 = vpack.c.b16 %v3198, %v3191
    %v3542 = vpack.c.b16 %v3199, %v3192
    %v3543 = vpack.c.b16 %v3207, %v3200
    %v3544 = vpack.c.b16 %v3208, %v3201
    %v3545 = vpack.c.b16 %v3209, %v3202
    %v3546 = vpack.c.b16 %v3210, %v3203
    %v3547 = vpack.c.b16 %v3211, %v3204
    %v3548 = vpack.c.b16 %v3212, %v3205
    %v3549 = vpack.c.b16 %v3213, %v3206
    %v3550 = vpack.c.b16 %v3221, %v3214
    %v3551 = vpack.c.b16 %v3222, %v3215
    %v3552 = vpack.c.b16 %v3223, %v3216
    %v3553 = vpack.c.b16 %v3224, %v3217
    %v3554 = vpack.c.b16 %v3225, %v3218
    %v3555 = vpack.c.b16 %v3226, %v3219
    %v3556 = vpack.c.b16 %v3227, %v3220
    %v3557 = vpack.c.b16 %v3235, %v3228
    %v3558 = vpack.c.b16 %v3236, %v3229
    %v3559 = vpack.c.b16 %v3237, %v3230
    %v3560 = vpack.c.b16 %v3238, %v3231
    %v3561 = vpack.c.b16 %v3239, %v3232
    %v3562 = vpack.c.b16 %v3240, %v3233
    %v3563 = vpack.c.b16 %v3241, %v3234
    %v3564 = vpack.c.b16 %v3249, %v3242
    %v3565 = vpack.c.b16 %v3250, %v3243
    %v3566 = vpack.c.b16 %v3251, %v3244
    %v3567 = vpack.c.b16 %v3252, %v3245
    %v3568 = vpack.c.b16 %v3253, %v3246
    %v3569 = vpack.c.b16 %v3254, %v3247
    %v3570 = vpack.c.b16 %v3255, %v3248
    %v3571 = vpack.c.b16 %v3263, %v3256
    %v3572 = vpack.c.b16 %v3264, %v3257
    %v3573 = vpack.c.b16 %v3265, %v3258
    %v3574 = vpack.c.b16 %v3266, %v3259
    %v3575 = vpack.c.b16 %v3267, %v3260
    %v3576 = vpack.c.b16 %v3268, %v3261
    %v3577 = vpack.c.b16 %v3269, %v3262
    %v3578 = vpack.c.b16 %v3277, %v3270
    %v3579 = vpack.c.b16 %v3278, %v3271
    %v3580 = vpack.c.b16 %v3279, %v3272
    %v3581 = vpack.c.b16 %v3280, %v3273
    %v3582 = vpack.c.b16 %v3281, %v3274
    %v3583 = vpack.c.b16 %v3282, %v3275
    %v3584 = vpack.c.b16 %v3283, %v3276
    %v3585 = vpack.c.b16 %v3291, %v3284
    %v3586 = vpack.c.b16 %v3292, %v3285
    %v3587 = vpack.c.b16 %v3293, %v3286
    %v3588 = vpack.c.b16 %v3294, %v3287
    %v3589 = vpack.c.b16 %v3295, %v3288
    %v3590 = vpack.c.b16 %v3296, %v3289
    %v3591 = vpack.c.b16 %v3297, %v3290
    %v3592 = vpack.c.b16 %v3305, %v3298
    %v3593 = vpack.c.b16 %v3306, %v3299
    %v3594 = vpack.c.b16 %v3307, %v3300
    %v3595 = vpack.c.b16 %v3308, %v3301
    %v3596 = vpack.c.b16 %v3309, %v3302
    %v3597 = vpack.c.b16 %v3310, %v3303
    %v3598 = vpack.c.b16 %v3311, %v3304
    %v3599 = vpack.c.b16 %v3319, %v3312
    %v3600 = vpack.c.b16 %v3320, %v3313
    %v3601 = vpack.c.b16 %v3321, %v3314
    %v3602 = vpack.c.b16 %v3322, %v3315
    %v3603 = vpack.c.b16 %v3323, %v3316
    %v3604 = vpack.c.b16 %v3324, %v3317
    %v3605 = vpack.c.b16 %v3325, %v3318
    %v3606 = vpack.c.b16 %v3333, %v3326
    %v3607 = vpack.c.b16 %v3334, %v3327
    %v3608 = vpack.c.b16 %v3335, %v3328
    %v3609 = vpack.c.b16 %v3336, %v3329
    %v3610 = vpack.c.b16 %v3337, %v3330
    %v3611 = vpack.c.b16 %v3338, %v3331
    %v3612 = vpack.c.b16 %v3339, %v3332
    %v3613 = vpack.c.b16 %v3347, %v3340
    %v3614 = vpack.c.b16 %v3348, %v3341
    %v3615 = vpack.c.b16 %v3349, %v3342
    %v3616 = vpack.c.b16 %v3350, %v3343
    %v3617 = vpack.c.b16 %v3351, %v3344
    %v3618 = vpack.c.b16 %v3352, %v3345
    %v3619 = vpack.c.b16 %v3353, %v3346
    %v3620 = vpack.c.b16 %v3361, %v3354
    %v3621 = vpack.c.b16 %v3362, %v3355
    %v3622 = vpack.c.b16 %v3363, %v3356
    %v3623 = vpack.c.b16 %v3364, %v3357
    %v3624 = vpack.c.b16 %v3365, %v3358
    %v3625 = vpack.c.b16 %v3366, %v3359
    %v3626 = vpack.c.b16 %v3367, %v3360
    %v3627 = vpack.c.b16 %v3375, %v3368
    %v3628 = vpack.c.b16 %v3376, %v3369
    %v3629 = vpack.c.b16 %v3377, %v3370
    %v3630 = vpack.c.b16 %v3378, %v3371
    %v3631 = vpack.c.b16 %v3379, %v3372
    %v3632 = vpack.c.b16 %v3380, %v3373
    %v3633 = vpack.c.b16 %v3381, %v3374
    %v3634 = vpack.c.b16 %v3389, %v3382
    %v3635 = vpack.c.b16 %v3390, %v3383
    %v3636 = vpack.c.b16 %v3391, %v3384
    %v3637 = vpack.c.b16 %v3392, %v3385
    %v3638 = vpack.c.b16 %v3393, %v3386
    %v3639 = vpack.c.b16 %v3394, %v3387
    %v3640 = vpack.c.b16 %v3395, %v3388
    %v3641 = vpack.c.b16 %v3403, %v3396
    %v3642 = vpack.c.b16 %v3404, %v3397
    %v3643 = vpack.c.b16 %v3405, %v3398
    %v3644 = vpack.c.b16 %v3406, %v3399
    %v3645 = vpack.c.b16 %v3407, %v3400
    %v3646 = vpack.c.b16 %v3408, %v3401
    %v3647 = vpack.c.b16 %v3409, %v3402
    %v3648 = vpack.c.b16 %v3417, %v3410
    %v3649 = vpack.c.b16 %v3418, %v3411
    %v3650 = vpack.c.b16 %v3419, %v3412
    %v3651 = vpack.c.b16 %v3420, %v3413
    %v3652 = vpack.c.b16 %v3421, %v3414
    %v3653 = vpack.c.b16 %v3422, %v3415
    %v3654 = vpack.c.b16 %v3423, %v3416
    %v3655 = vpack.c.b16 %v3431, %v3424
    %v3656 = vpack.c.b16 %v3432, %v3425
    %v3657 = vpack.c.b16 %v3433, %v3426
    %v3658 = vpack.c.b16 %v3434, %v3427
    %v3659 = vpack.c.b16 %v3435, %v3428
    %v3660 = vpack.c.b16 %v3436, %v3429
    %v3661 = vpack.c.b16 %v3437, %v3430
    %3886 = vmatprep.subr.bf16.mxu0 %v3439
    %3887 = vmatpush1.bf16.msra.mxu0 %v3438
    %3888 = vmatprep.subr.bf16.mxu0 %v3446
    %3889 = vmatpush1.bf16.msra.mxu0 %v3445
    %3890 = vmatprep.subr.bf16.mxu0 %v3453
    %3891 = vmatpush1.bf16.msra.mxu0 %v3452
    %3892 = vmatprep.subr.bf16.mxu0 %v3460
    %3893 = vmatpush1.bf16.msra.mxu0 %v3459
    %3894 = vmatprep.subr.bf16.mxu0 %v3467
    %3895 = vmatpush1.bf16.msra.mxu0 %v3466
    %3896 = vmatprep.subr.bf16.mxu0 %v3474
    %3897 = vmatpush1.bf16.msra.mxu0 %v3473
    %3898 = vmatprep.subr.bf16.mxu0 %v3481
    %3899 = vmatpush1.bf16.msra.mxu0 %v3480
    %3900 = vmatprep.subr.bf16.mxu0 %v3488
    %3901 = vmatpush1.bf16.msra.mxu0 %v3487
    %3902 = vmatprep.subr.bf16.mxu0 %v3495
    %3903 = vmatpush1.bf16.msra.mxu0 %v3494
    %3904 = vmatprep.subr.bf16.mxu0 %v3502
    %3905 = vmatpush1.bf16.msra.mxu0 %v3501
    %3906 = vmatprep.subr.bf16.mxu0 %v3509
    %3907 = vmatpush1.bf16.msra.mxu0 %v3508
    %3908 = vmatprep.subr.bf16.mxu0 %v3516
    %3909 = vmatpush1.bf16.msra.mxu0 %v3515
    %3910 = vmatprep.subr.bf16.mxu0 %v3523
    %3911 = vmatpush1.bf16.msra.mxu0 %v3522
    %3912 = vmatprep.subr.bf16.mxu0 %v3530
    %3913 = vmatpush1.bf16.msra.mxu0 %v3529
    %3914 = vmatprep.subr.bf16.mxu0 %v3537
    %3915 = vmatpush1.bf16.msra.mxu0 %v3536
    %3916 = vmatprep.subr.bf16.mxu0 %v3544
    %3917 = vmatpush1.bf16.msra.mxu0 %v3543
    %3918 = vmatprep.mubr.bf16.mxu0 %v2438
    %3919 = vmatmul.mubr.bf16.gmra.mrb[0].mxu0 %v2437
    %v3920 = vpop.f32.mrb[0].mxu0
    %v3921 = vadd.f32 %v2702, %v3920
    %v3922 = vpop.f32.mrb[0].mxu0
    %v3923 = vadd.f32 %v2706, %v3922
    %v3924 = vpop.f32.mrb[0].mxu0
    %v3925 = vpop.f32.mrb[0].mxu0
    %3926 = vdwg.mxu0
    %3927 = vmatprep.subr.bf16.mxu0 %v3551
    %3928 = vmatpush1.bf16.msra.mxu0 %v3550
    %3929 = vmatprep.subr.bf16.mxu0 %v3558
    %3930 = vmatpush1.bf16.msra.mxu0 %v3557
    %3931 = vmatprep.subr.bf16.mxu0 %v3565
    %3932 = vmatpush1.bf16.msra.mxu0 %v3564
    %3933 = vmatprep.subr.bf16.mxu0 %v3572
    %3934 = vmatpush1.bf16.msra.mxu0 %v3571
    %3935 = vmatprep.subr.bf16.mxu0 %v3579
    %3936 = vmatpush1.bf16.msra.mxu0 %v3578
    %3937 = vmatprep.subr.bf16.mxu0 %v3586
    %3938 = vmatpush1.bf16.msra.mxu0 %v3585
    %3939 = vmatprep.subr.bf16.mxu0 %v3593
    %3940 = vmatpush1.bf16.msra.mxu0 %v3592
    %3941 = vmatprep.subr.bf16.mxu0 %v3600
    %3942 = vmatpush1.bf16.msra.mxu0 %v3599
    %3943 = vmatprep.subr.bf16.mxu0 %v3607
    %3944 = vmatpush1.bf16.msra.mxu0 %v3606
    %3945 = vmatprep.subr.bf16.mxu0 %v3614
    %3946 = vmatpush1.bf16.msra.mxu0 %v3613
    %3947 = vmatprep.subr.bf16.mxu0 %v3621
    %3948 = vmatpush1.bf16.msra.mxu0 %v3620
    %3949 = vmatprep.subr.bf16.mxu0 %v3628
    %3950 = vmatpush1.bf16.msra.mxu0 %v3627
    %3951 = vmatprep.subr.bf16.mxu0 %v3635
    %3952 = vmatpush1.bf16.msra.mxu0 %v3634
    %3953 = vmatprep.subr.bf16.mxu0 %v3642
    %3954 = vmatpush1.bf16.msra.mxu0 %v3641
    %3955 = vmatprep.subr.bf16.mxu0 %v3649
    %3956 = vmatpush1.bf16.msra.mxu0 %v3648
    %3957 = vmatprep.subr.bf16.mxu0 %v3656
    %3958 = vmatpush1.bf16.msra.mxu0 %v3655
    %3959 = vmatprep.mubr.bf16.mxu0 %v2440
    %3960 = vmatmul.mubr.bf16.gmra.mrb[0].mxu0 %v2439
    %v3961 = vpop.f32.mrb[0].mxu0
    %v3962 = vadd.f32 %v3921, %v3961
    %v3963 = vpop.f32.mrb[0].mxu0
    %v3964 = vadd.f32 %v3923, %v3963
    %v3965 = vpop.f32.mrb[0].mxu0
    %v3966 = vpop.f32.mrb[0].mxu0
    %3967 = vdwg.mxu0
    %3968 = vmatprep.subr.bf16.mxu0 %v3441
    %3969 = vmatpush1.bf16.msra.mxu0 %v3440
    %3970 = vmatprep.subr.bf16.mxu0 %v3448
    %3971 = vmatpush1.bf16.msra.mxu0 %v3447
    %3972 = vmatprep.subr.bf16.mxu0 %v3455
    %3973 = vmatpush1.bf16.msra.mxu0 %v3454
    %3974 = vmatprep.subr.bf16.mxu0 %v3462
    %3975 = vmatpush1.bf16.msra.mxu0 %v3461
    %3976 = vmatprep.subr.bf16.mxu0 %v3469
    %3977 = vmatpush1.bf16.msra.mxu0 %v3468
    %3978 = vmatprep.subr.bf16.mxu0 %v3476
    %3979 = vmatpush1.bf16.msra.mxu0 %v3475
    %3980 = vmatprep.subr.bf16.mxu0 %v3483
    %3981 = vmatpush1.bf16.msra.mxu0 %v3482
    %3982 = vmatprep.subr.bf16.mxu0 %v3490
    %3983 = vmatpush1.bf16.msra.mxu0 %v3489
    %3984 = vmatprep.subr.bf16.mxu0 %v3497
    %3985 = vmatpush1.bf16.msra.mxu0 %v3496
    %3986 = vmatprep.subr.bf16.mxu0 %v3504
    %3987 = vmatpush1.bf16.msra.mxu0 %v3503
    %3988 = vmatprep.subr.bf16.mxu0 %v3511
    %3989 = vmatpush1.bf16.msra.mxu0 %v3510
    %3990 = vmatprep.subr.bf16.mxu0 %v3518
    %3991 = vmatpush1.bf16.msra.mxu0 %v3517
    %3992 = vmatprep.subr.bf16.mxu0 %v3525
    %3993 = vmatpush1.bf16.msra.mxu0 %v3524
    %3994 = vmatprep.subr.bf16.mxu0 %v3532
    %3995 = vmatpush1.bf16.msra.mxu0 %v3531
    %3996 = vmatprep.subr.bf16.mxu0 %v3539
    %3997 = vmatpush1.bf16.msra.mxu0 %v3538
    %3998 = vmatprep.subr.bf16.mxu0 %v3546
    %3999 = vmatpush1.bf16.msra.mxu0 %v3545
    %4000 = vmatprep.mubr.bf16.mxu0 %v2438
    %4001 = vmatmul.mubr.bf16.gmra.mrb[0].mxu0 %v2437
    %v4002 = vpop.f32.mrb[0].mxu0
    %v4003 = vadd.f32 %v2710, %v4002
    %v4004 = vpop.f32.mrb[0].mxu0
    %v4005 = vadd.f32 %v2714, %v4004
    %v4006 = vpop.f32.mrb[0].mxu0
    %v4007 = vpop.f32.mrb[0].mxu0
    %4008 = vdwg.mxu0
    %4009 = vmatprep.subr.bf16.mxu0 %v3553
    %4010 = vmatpush1.bf16.msra.mxu0 %v3552
    %4011 = vmatprep.subr.bf16.mxu0 %v3560
    %4012 = vmatpush1.bf16.msra.mxu0 %v3559
    %4013 = vmatprep.subr.bf16.mxu0 %v3567
    %4014 = vmatpush1.bf16.msra.mxu0 %v3566
    %4015 = vmatprep.subr.bf16.mxu0 %v3574
    %4016 = vmatpush1.bf16.msra.mxu0 %v3573
    %4017 = vmatprep.subr.bf16.mxu0 %v3581
    %4018 = vmatpush1.bf16.msra.mxu0 %v3580
    %4019 = vmatprep.subr.bf16.mxu0 %v3588
    %4020 = vmatpush1.bf16.msra.mxu0 %v3587
    %4021 = vmatprep.subr.bf16.mxu0 %v3595
    %4022 = vmatpush1.bf16.msra.mxu0 %v3594
    %4023 = vmatprep.subr.bf16.mxu0 %v3602
    %4024 = vmatpush1.bf16.msra.mxu0 %v3601
    %4025 = vmatprep.subr.bf16.mxu0 %v3609
    %4026 = vmatpush1.bf16.msra.mxu0 %v3608
    %4027 = vmatprep.subr.bf16.mxu0 %v3616
    %4028 = vmatpush1.bf16.msra.mxu0 %v3615
    %4029 = vmatprep.subr.bf16.mxu0 %v3623
    %4030 = vmatpush1.bf16.msra.mxu0 %v3622
    %4031 = vmatprep.subr.bf16.mxu0 %v3630
    %4032 = vmatpush1.bf16.msra.mxu0 %v3629
    %4033 = vmatprep.subr.bf16.mxu0 %v3637
    %4034 = vmatpush1.bf16.msra.mxu0 %v3636
    %4035 = vmatprep.subr.bf16.mxu0 %v3644
    %4036 = vmatpush1.bf16.msra.mxu0 %v3643
    %4037 = vmatprep.subr.bf16.mxu0 %v3651
    %4038 = vmatpush1.bf16.msra.mxu0 %v3650
    %4039 = vmatprep.subr.bf16.mxu0 %v3658
    %4040 = vmatpush1.bf16.msra.mxu0 %v3657
    %4041 = vmatprep.mubr.bf16.mxu0 %v2440
    %4042 = vmatmul.mubr.bf16.gmra.mrb[0].mxu0 %v2439
    %v4043 = vpop.f32.mrb[0].mxu0
    %v4044 = vadd.f32 %v4003, %v4043
    %v4045 = vpop.f32.mrb[0].mxu0
    %v4046 = vadd.f32 %v4005, %v4045
    %v4047 = vpop.f32.mrb[0].mxu0
    %v4048 = vpop.f32.mrb[0].mxu0
    %4049 = vdwg.mxu0
    %4050 = vmatprep.subr.bf16.mxu0 %v3443
    %4051 = vmatpush1.bf16.msra.mxu0 %v3442
    %4052 = vmatprep.subr.bf16.mxu0 %v3450
    %4053 = vmatpush1.bf16.msra.mxu0 %v3449
    %4054 = vmatprep.subr.bf16.mxu0 %v3457
    %4055 = vmatpush1.bf16.msra.mxu0 %v3456
    %4056 = vmatprep.subr.bf16.mxu0 %v3464
    %4057 = vmatpush1.bf16.msra.mxu0 %v3463
    %4058 = vmatprep.subr.bf16.mxu0 %v3471
    %4059 = vmatpush1.bf16.msra.mxu0 %v3470
    %4060 = vmatprep.subr.bf16.mxu0 %v3478
    %4061 = vmatpush1.bf16.msra.mxu0 %v3477
    %4062 = vmatprep.subr.bf16.mxu0 %v3485
    %4063 = vmatpush1.bf16.msra.mxu0 %v3484
    %4064 = vmatprep.subr.bf16.mxu0 %v3492
    %4065 = vmatpush1.bf16.msra.mxu0 %v3491
    %4066 = vmatprep.subr.bf16.mxu0 %v3499
    %4067 = vmatpush1.bf16.msra.mxu0 %v3498
    %4068 = vmatprep.subr.bf16.mxu0 %v3506
    %4069 = vmatpush1.bf16.msra.mxu0 %v3505
    %4070 = vmatprep.subr.bf16.mxu0 %v3513
    %4071 = vmatpush1.bf16.msra.mxu0 %v3512
    %4072 = vmatprep.subr.bf16.mxu0 %v3520
    %4073 = vmatpush1.bf16.msra.mxu0 %v3519
    %4074 = vmatprep.subr.bf16.mxu0 %v3527
    %4075 = vmatpush1.bf16.msra.mxu0 %v3526
    %4076 = vmatprep.subr.bf16.mxu0 %v3534
    %4077 = vmatpush1.bf16.msra.mxu0 %v3533
    %4078 = vmatprep.subr.bf16.mxu0 %v3541
    %4079 = vmatpush1.bf16.msra.mxu0 %v3540
    %4080 = vmatprep.subr.bf16.mxu0 %v3548
    %4081 = vmatpush1.bf16.msra.mxu0 %v3547
    %4082 = vmatprep.mubr.bf16.mxu0 %v2438
    %4083 = vmatmul.mubr.bf16.gmra.mrb[0].mxu0 %v2437
    %v4084 = vpop.f32.mrb[0].mxu0
    %v4085 = vadd.f32 %v2718, %v4084
    %v4086 = vpop.f32.mrb[0].mxu0
    %v4087 = vadd.f32 %v2722, %v4086
    %v4088 = vpop.f32.mrb[0].mxu0
    %v4089 = vpop.f32.mrb[0].mxu0
    %4090 = vdwg.mxu0
    %4091 = vmatprep.subr.bf16.mxu0 %v3555
    %4092 = vmatpush1.bf16.msra.mxu0 %v3554
    %4093 = vmatprep.subr.bf16.mxu0 %v3562
    %4094 = vmatpush1.bf16.msra.mxu0 %v3561
    %4095 = vmatprep.subr.bf16.mxu0 %v3569
    %4096 = vmatpush1.bf16.msra.mxu0 %v3568
    %4097 = vmatprep.subr.bf16.mxu0 %v3576
    %4098 = vmatpush1.bf16.msra.mxu0 %v3575
    %4099 = vmatprep.subr.bf16.mxu0 %v3583
    %4100 = vmatpush1.bf16.msra.mxu0 %v3582
    %4101 = vmatprep.subr.bf16.mxu0 %v3590
    %4102 = vmatpush1.bf16.msra.mxu0 %v3589
    %4103 = vmatprep.subr.bf16.mxu0 %v3597
    %4104 = vmatpush1.bf16.msra.mxu0 %v3596
    %4105 = vmatprep.subr.bf16.mxu0 %v3604
    %4106 = vmatpush1.bf16.msra.mxu0 %v3603
    %4107 = vmatprep.subr.bf16.mxu0 %v3611
    %4108 = vmatpush1.bf16.msra.mxu0 %v3610
    %4109 = vmatprep.subr.bf16.mxu0 %v3618
    %4110 = vmatpush1.bf16.msra.mxu0 %v3617
    %4111 = vmatprep.subr.bf16.mxu0 %v3625
    %4112 = vmatpush1.bf16.msra.mxu0 %v3624
    %4113 = vmatprep.subr.bf16.mxu0 %v3632
    %4114 = vmatpush1.bf16.msra.mxu0 %v3631
    %4115 = vmatprep.subr.bf16.mxu0 %v3639
    %4116 = vmatpush1.bf16.msra.mxu0 %v3638
    %4117 = vmatprep.subr.bf16.mxu0 %v3646
    %4118 = vmatpush1.bf16.msra.mxu0 %v3645
    %4119 = vmatprep.subr.bf16.mxu0 %v3653
    %4120 = vmatpush1.bf16.msra.mxu0 %v3652
    %4121 = vmatprep.subr.bf16.mxu0 %v3660
    %4122 = vmatpush1.bf16.msra.mxu0 %v3659
    %4123 = vmatprep.mubr.bf16.mxu0 %v2440
    %4124 = vmatmul.mubr.bf16.gmra.mrb[0].mxu0 %v2439
    %v4125 = vpop.f32.mrb[0].mxu0
    %v4126 = vadd.f32 %v4085, %v4125
    %v4127 = vpop.f32.mrb[0].mxu0
    %v4128 = vadd.f32 %v4087, %v4127
    %v4129 = vpop.f32.mrb[0].mxu0
    %v4130 = vpop.f32.mrb[0].mxu0
    %4131 = vdwg.mxu0
    %4132 = vmatprep.subr.bf16.mxu0 0
    %4133 = vmatpush1.bf16.msra.mxu0 %v3444
    %4134 = vmatprep.subr.bf16.mxu0 0
    %4135 = vmatpush1.bf16.msra.mxu0 %v3451
    %4136 = vmatprep.subr.bf16.mxu0 0
    %4137 = vmatpush1.bf16.msra.mxu0 %v3458
    %4138 = vmatprep.subr.bf16.mxu0 0
    %4139 = vmatpush1.bf16.msra.mxu0 %v3465
    %4140 = vmatprep.subr.bf16.mxu0 0
    %4141 = vmatpush1.bf16.msra.mxu0 %v3472
    %4142 = vmatprep.subr.bf16.mxu0 0
    %4143 = vmatpush1.bf16.msra.mxu0 %v3479
    %4144 = vmatprep.subr.bf16.mxu0 0
    %4145 = vmatpush1.bf16.msra.mxu0 %v3486
    %4146 = vmatprep.subr.bf16.mxu0 0
    %4147 = vmatpush1.bf16.msra.mxu0 %v3493
    %4148 = vmatprep.subr.bf16.mxu0 0
    %4149 = vmatpush1.bf16.msra.mxu0 %v3500
    %4150 = vmatprep.subr.bf16.mxu0 0
    %4151 = vmatpush1.bf16.msra.mxu0 %v3507
    %4152 = vmatprep.subr.bf16.mxu0 0
    %4153 = vmatpush1.bf16.msra.mxu0 %v3514
    %4154 = vmatprep.subr.bf16.mxu0 0
    %4155 = vmatpush1.bf16.msra.mxu0 %v3521
    %4156 = vmatprep.subr.bf16.mxu0 0
    %4157 = vmatpush1.bf16.msra.mxu0 %v3528
    %4158 = vmatprep.subr.bf16.mxu0 0
    %4159 = vmatpush1.bf16.msra.mxu0 %v3535
    %4160 = vmatprep.subr.bf16.mxu0 0
    %4161 = vmatpush1.bf16.msra.mxu0 %v3542
    %4162 = vmatprep.subr.bf16.mxu0 0
    %4163 = vmatpush1.bf16.msra.mxu0 %v3549
    %4164 = vmatprep.mubr.bf16.mxu0 %v2438
    %4165 = vmatmul.mubr.bf16.gmra.mrb[0].mxu0 %v2437
    %v4166 = vpop.f32.mrb[0].mxu0
    %v4167 = vadd.f32 %v2726, %v4166
    %v4168 = vpop.f32.mrb[0].mxu0
    %v4169 = vpop.f32.mrb[0].mxu0
    %v4170 = vpop.f32.mrb[0].mxu0
    %4171 = vdwg.mxu0
    %4172 = vmatprep.subr.bf16.mxu0 0
    %4173 = vmatpush1.bf16.msra.mxu0 %v3556
    %4174 = vmatprep.subr.bf16.mxu0 0
    %4175 = vmatpush1.bf16.msra.mxu0 %v3563
    %4176 = vmatprep.subr.bf16.mxu0 0
    %4177 = vmatpush1.bf16.msra.mxu0 %v3570
    %4178 = vmatprep.subr.bf16.mxu0 0
    %4179 = vmatpush1.bf16.msra.mxu0 %v3577
    %4180 = vmatprep.subr.bf16.mxu0 0
    %4181 = vmatpush1.bf16.msra.mxu0 %v3584
    %4182 = vmatprep.subr.bf16.mxu0 0
    %4183 = vmatpush1.bf16.msra.mxu0 %v3591
    %4184 = vmatprep.subr.bf16.mxu0 0
    %4185 = vmatpush1.bf16.msra.mxu0 %v3598
    %4186 = vmatprep.subr.bf16.mxu0 0
    %4187 = vmatpush1.bf16.msra.mxu0 %v3605
    %4188 = vmatprep.subr.bf16.mxu0 0
    %4189 = vmatpush1.bf16.msra.mxu0 %v3612
    %4190 = vmatprep.subr.bf16.mxu0 0
    %4191 = vmatpush1.bf16.msra.mxu0 %v3619
    %4192 = vmatprep.subr.bf16.mxu0 0
    %4193 = vmatpush1.bf16.msra.mxu0 %v3626
    %4194 = vmatprep.subr.bf16.mxu0 0
    %4195 = vmatpush1.bf16.msra.mxu0 %v3633
    %4196 = vmatprep.subr.bf16.mxu0 0
    %4197 = vmatpush1.bf16.msra.mxu0 %v3640
    %4198 = vmatprep.subr.bf16.mxu0 0
    %4199 = vmatpush1.bf16.msra.mxu0 %v3647
    %4200 = vmatprep.subr.bf16.mxu0 0
    %4201 = vmatpush1.bf16.msra.mxu0 %v3654
    %4202 = vmatprep.subr.bf16.mxu0 0
    %4203 = vmatpush1.bf16.msra.mxu0 %v3661
    %4204 = vmatprep.mubr.bf16.mxu0 %v2440
    %4205 = vmatmul.mubr.bf16.gmra.mrb[0].mxu0 %v2439
    %v4206 = vpop.f32.mrb[0].mxu0
    %v4207 = vadd.f32 %v4167, %v4206
    %v4208 = vpop.f32.mrb[0].mxu0
    %v4209 = vpop.f32.mrb[0].mxu0
    %v4210 = vpop.f32.mrb[0].mxu0
    %4211 = vdwg.mxu0
    %4212 = vst [vmem:[#allocation20] sm:$0xff] %v3962
    %4213 = vst [vmem:[#allocation20 + $0x8] sm:$0xff] %v3964
    %4214 = vst [vmem:[#allocation20 + $0x10] sm:$0xff] %v4044
    %4215 = vst [vmem:[#allocation20 + $0x18] sm:$0xff] %v4046
    %4216 = vst [vmem:[#allocation20 + $0x20] sm:$0xff] %v4126
    %4217 = vst [vmem:[#allocation20 + $0x28] sm:$0xff] %v4128
    %4218 = vst [vmem:[#allocation20 + $0x30] sm:$0xff] %v4207
    // Predicated region
    $region90: #{decoder_a_forward.1} parent=1 // pred_check
      _
    $region91: #{decoder_a_forward.1} parent=1 // pred_check_branch
      %4220 = sbr.rel (0) target = $region93
    $region92: #{decoder_a_forward.1} parent=1 // pred_region
      %s4222 = ssub.s32 896, 896
      %4223 = vsyncadd [#allocation4], %s4222
      %s4225 = sshll.u32 [#allocation20], 4
      %s4226 = int_to_ptr.vmem [resolvable:$true] %s4225
      %4228 = dma.vmem_to_hbm [thread:$0]  %s4226, 896, %s11, [#allocation4]
    $region93: #{decoder_a_forward.1} parent=1 // pred_fallthru
      _
    // Predicated region
    $region94: #{decoder_a_forward.1} parent=1 // pred_check
      _
    $region95: #{decoder_a_forward.1} parent=1 // pred_check_branch
      %4230 = sbr.rel (0) target = $region97
    $region96: #{decoder_a_forward.1} parent=1 // pred_region
      %4231 = dma.done [#allocation4], 896
    $region97: #{decoder_a_forward.1} parent=1 // pred_fallthru
      _
    %4232 = vsyncpa [#allocation3], 1
    %4233 = vsyncpa [#allocation6], 1
    %4234 = vsyncpa [#allocation9], 1
    %4235 = vsyncpa [#allocation12], 1
    %4236 = vsyncpa [#allocation15], 1
    %4237 = vsyncpa [#allocation18], 1
    %4238 = vsyncpa [#allocation4], 1

</llo_original>
